<compile_context>
chip_gen: v5e
topology: v5e:2x2
jax: 0.10.0
libtpu: 0.0.40
codegen_flags: <defaults>
</compile_context>

<pallas_src>
import functools

import jax
import jax.numpy as jnp
from jax.experimental import pallas as pl
from jax.experimental.pallas import tpu as pltpu

MAX_LENGTH = 8
NEG = -1e30           # mask value for padded vocab lanes
VMEM = pltpu.MemorySpace.VMEM


def _ceil128(n):
    return ((n + 127) // 128) * 128


# ------------------------- in-kernel building blocks -------------------------

def _lstm_cell(x, h, c, w, b, Hp):
    """One LSTM step with a single fused matmul.

    x, h, c: (1, Hp);  w: (2*Hp, 4*Hp) = stacked [Wih; Whh];  b: (1, 4*Hp).
    PyTorch gate order: input, forget, cell(g), output.  Each gate block is a
    full 128-lane chunk (Hp is a multiple of 128) so slicing is lane-aligned.
    """
    xh = jnp.concatenate([x, h], axis=1)                       # (1, 2*Hp)
    gates = jnp.dot(xh, w, preferred_element_type=jnp.float32) + b
    i = jax.nn.sigmoid(gates[:, 0 * Hp:1 * Hp])
    f = jax.nn.sigmoid(gates[:, 1 * Hp:2 * Hp])
    g = jnp.tanh(gates[:, 2 * Hp:3 * Hp])
    o = jax.nn.sigmoid(gates[:, 3 * Hp:4 * Hp])
    c_new = f * c + i * g
    h_new = o * jnp.tanh(c_new)
    return h_new, c_new


def _encode_and_latent(enc_x, h0, cond_tg, eps,
                       enc_w, enc_b, mean_w, mean_b, logvar_w, logvar_b,
                       l2h_wz, l2h_wc, l2h_b, l2c_wz, l2c_wc, l2c_b,
                       T_in, Hp):
    """Encoder recurrence + VAE heads, entirely in VMEM/vregs."""
    h = h0[...]
    c = jnp.zeros_like(h)
    ew, eb = enc_w[...], enc_b[...]
    for t in range(T_in):                                      # tiny, unrolled
        h, c = _lstm_cell(enc_x[pl.ds(t, 1), :], h, c, ew, eb, Hp)

    m = jnp.dot(h, mean_w[...], preferred_element_type=jnp.float32) + mean_b[...]
    lgv = (jnp.dot(h, logvar_w[...], preferred_element_type=jnp.float32)
           + logvar_b[...])
    z = eps[...] * jnp.exp(lgv * 0.5) + m                       # sample_z()*std+m

    ct = cond_tg[...]
    # latent2hidden / latent2cell on cat([z, cond]) done as a split matmul
    # (avoids an in-kernel lane concat of differently-sized pieces).
    h_dec = (jnp.dot(z, l2h_wz[...], preferred_element_type=jnp.float32)
             + jnp.dot(ct, l2h_wc[...], preferred_element_type=jnp.float32)
             + l2h_b[...])
    c_dec = (jnp.dot(z, l2c_wz[...], preferred_element_type=jnp.float32)
             + jnp.dot(ct, l2c_wc[...], preferred_element_type=jnp.float32)
             + l2c_b[...])
    return h_dec, c_dec, m, lgv


# ------------------------------ fused kernels --------------------------------

def _seq2seq_tf_kernel(T_in, T_dec, Hp, V, Vp,
                       enc_x, dec_x, h0, cond_tg, eps,
                       enc_w, enc_b, mean_w, mean_b, logvar_w, logvar_b,
                       l2h_wz, l2h_wc, l2h_b, l2c_wz, l2c_wc, l2c_b,
                       dec_w, dec_b, out_w, out_b,
                       logp_ref, m_ref, lgv_ref):
    h, c, m, lgv = _encode_and_latent(
        enc_x, h0, cond_tg, eps, enc_w, enc_b, mean_w, mean_b,
        logvar_w, logvar_b, l2h_wz, l2h_wc, l2h_b, l2c_wz, l2c_wc, l2c_b,
        T_in, Hp)
    m_ref[...] = m
    lgv_ref[...] = lgv

    dw, db = dec_w[...], dec_b[...]
    ow, ob = out_w[...], out_b[...]
    lane = jax.lax.broadcasted_iota(jnp.int32, (1, Vp), 1)
    vneg = jnp.where(lane < V, 0.0, NEG).astype(jnp.float32)   # mask padded vocab

    for t in range(T_dec):
        x = jnp.maximum(dec_x[pl.ds(t, 1), :], 0.0)            # Embedding -> ReLU
        h, c = _lstm_cell(x, h, c, dw, db, Hp)
        logits = jnp.dot(h, ow, preferred_element_type=jnp.float32) + ob + vneg
        mx = jnp.max(logits, axis=-1, keepdims=True)
        lse = jnp.log(jnp.sum(jnp.exp(logits - mx), axis=-1, keepdims=True))
        logp_ref[pl.ds(t, 1), :] = logits - mx - lse


def _seq2seq_greedy_kernel(T_in, Hp, V, Vp,
                           enc_x, dec_emb, h0, cond_tg, eps,
                           enc_w, enc_b, mean_w, mean_b, logvar_w, logvar_b,
                           l2h_wz, l2h_wc, l2h_b, l2c_wz, l2c_wc, l2c_b,
                           dec_w, dec_b, out_w, out_b,
                           logp_ref, m_ref, lgv_ref):
    h, c, m, lgv = _encode_and_latent(
        enc_x, h0, cond_tg, eps, enc_w, enc_b, mean_w, mean_b,
        logvar_w, logvar_b, l2h_wz, l2h_wc, l2h_b, l2c_wz, l2c_wc, l2c_b,
        T_in, Hp)
    m_ref[...] = m
    lgv_ref[...] = lgv

    dw, db = dec_w[...], dec_b[...]
    ow, ob = out_w[...], out_b[...]
    de = dec_emb[...]
    lane = jax.lax.broadcasted_iota(jnp.int32, (1, Vp), 1)
    vneg = jnp.where(lane < V, 0.0, NEG).astype(jnp.float32)

    tok = jnp.zeros((1, 1), jnp.int32)                          # SOS = 0
    for t in range(MAX_LENGTH):
        onehot = (lane == tok).astype(jnp.float32)              # (1, Vp)
        x = jnp.dot(onehot, de, preferred_element_type=jnp.float32)  # embedding
        x = jnp.maximum(x, 0.0)                                 # ReLU
        h, c = _lstm_cell(x, h, c, dw, db, Hp)
        logits = jnp.dot(h, ow, preferred_element_type=jnp.float32) + ob + vneg
        mx = jnp.max(logits, axis=-1, keepdims=True)
        lse = jnp.log(jnp.sum(jnp.exp(logits - mx), axis=-1, keepdims=True))
        logp_ref[pl.ds(t, 1), :] = logits - mx - lse
        # argmax feedback (first max index, matching torch.topk tie-break)
        tok = jnp.min(jnp.where(logits == mx, lane, Vp),
                      axis=-1, keepdims=True).astype(jnp.int32)
        # TODO(synk): PyTorch breaks early when argmax token == EOS(1); a
        # data-dependent loop length needs host sync, so all MAX_LENGTH rows
        # are emitted here.


# ------------------------------ parameters -----------------------------------

def _pad2(a, rows, cols):
    out = jnp.zeros((rows, cols), jnp.float32)
    return out.at[:a.shape[0], :a.shape[1]].set(a.astype(jnp.float32))


def _pad_gate_cols(w, H, Hp):
    """(in, 4H) -> (in, 4Hp): each PyTorch gate block placed at g*Hp."""
    out = jnp.zeros((w.shape[0], 4 * Hp), jnp.float32)
    for g in range(4):
        out = out.at[:, g * Hp:g * Hp + H].set(w[:, g * H:(g + 1) * H])
    return out


def _stack_lstm(wih, whh, H, Hp):
    """Stack [Wih; Whh] into one (2*Hp, 4*Hp) padded matrix (done once)."""
    w = jnp.zeros((2 * Hp, 4 * Hp), jnp.float32)
    w = w.at[:H, :].set(_pad_gate_cols(wih, H, Hp))
    w = w.at[Hp:Hp + H, :].set(_pad_gate_cols(whh, H, Hp))
    return w


def build_model(key, hidden_size, num_of_word, cond_size, num_of_cond,
                latent_size):
    H, V, C, L = hidden_size, num_of_word, cond_size, latent_size
    Hp, Vp, Cp, Lp = _ceil128(H), _ceil128(V), _ceil128(C), _ceil128(L)
    ks = jax.random.split(key, 19)

    def nrm(k, shape, scale=0.1):
        return (scale * jax.random.normal(k, shape)).astype(jnp.float32)

    # Unpadded parameters (PyTorch-equivalent, stored (in, out)).
    raw = dict(
        cond_emb=nrm(ks[0], (num_of_cond, C)),
        enc_emb=nrm(ks[1], (V, H)),
        enc_wih=nrm(ks[2], (H, 4 * H)),
        enc_whh=nrm(ks[3], (H, 4 * H)),
        enc_b=nrm(ks[4], (1, 4 * H)),            # b_ih + b_hh combined
        mean_w=nrm(ks[5], (H, L)), mean_b=nrm(ks[6], (1, L)),
        logvar_w=nrm(ks[7], (H, L)), logvar_b=nrm(ks[8], (1, L)),
        l2h_w=nrm(ks[9], (L + C, H)), l2h_b=nrm(ks[10], (1, H)),
        l2c_w=nrm(ks[11], (L + C, H)), l2c_b=nrm(ks[12], (1, H)),
        dec_emb=nrm(ks[13], (V, H)),
        dec_wih=nrm(ks[14], (H, 4 * H)),
        dec_whh=nrm(ks[15], (H, 4 * H)),
        dec_b=nrm(ks[16], (1, 4 * H)),
        dec_out_w=nrm(ks[17], (H, V)), dec_out_b=nrm(ks[18], (1, V)),
    )

    # Lane-aligned (padded to 128) + fused layouts used by the kernels.
    p = dict(
        cond_emb=raw['cond_emb'],
        enc_emb=_pad2(raw['enc_emb'], V, Hp),              # gathered outside
        dec_emb=_pad2(raw['dec_emb'], Vp, Hp),             # full table for greedy
        enc_w=_stack_lstm(raw['enc_wih'], raw['enc_whh'], H, Hp),
        enc_b=_pad_gate_cols(raw['enc_b'], H, Hp),
        dec_w=_stack_lstm(raw['dec_wih'], raw['dec_whh'], H, Hp),
        dec_b=_pad_gate_cols(raw['dec_b'], H, Hp),
        mean_w=_pad2(raw['mean_w'], Hp, Lp), mean_b=_pad2(raw['mean_b'], 1, Lp),
        logvar_w=_pad2(raw['logvar_w'], Hp, Lp),
        logvar_b=_pad2(raw['logvar_b'], 1, Lp),
        l2h_wz=_pad2(raw['l2h_w'][:L], Lp, Hp),
        l2h_wc=_pad2(raw['l2h_w'][L:], Cp, Hp),
        l2h_b=_pad2(raw['l2h_b'], 1, Hp),
        l2c_wz=_pad2(raw['l2c_w'][:L], Lp, Hp),
        l2c_wc=_pad2(raw['l2c_w'][L:], Cp, Hp),
        l2c_b=_pad2(raw['l2c_b'], 1, Hp),
        dec_out_w=_pad2(raw['dec_out_w'], Hp, Vp),
        dec_out_b=_pad2(raw['dec_out_b'], 1, Vp),
    )
    return dict(p=p, H=H, V=V, C=C, L=L, Hp=Hp, Vp=Vp, Cp=Cp, Lp=Lp)


# -------------------------------- forward ------------------------------------

def seq2seq_forward(model, input_tokens, input_c, target_tokens, target_c,
                    use_teacher_forcing, rng_key):
    H, V, C, L = model['H'], model['V'], model['C'], model['L']
    Hp, Vp, Cp, Lp = model['Hp'], model['Vp'], model['Cp'], model['Lp']
    p = model['p']
    T_in = int(input_tokens.shape[0])

    # condition embeddings / initial hidden (initHidden: cond at the END)
    cond_in = p['cond_emb'][input_c]                               # (C,)
    cond_tg = p['cond_emb'][target_c]                              # (C,)
    h0 = jnp.zeros((1, Hp), jnp.float32).at[0, H - C:H].set(cond_in)
    cond_tg_p = jnp.zeros((1, Cp), jnp.float32).at[0, :C].set(cond_tg)

    # sample_z() noise, zero-padded beyond L so padded latent lanes stay 0
    eps = jnp.zeros((1, Lp), jnp.float32).at[0, :L].set(
        jax.random.normal(rng_key, (L,), jnp.float32))

    enc_x = jnp.take(p['enc_emb'], input_tokens.astype(jnp.int32), axis=0)

    weights = (p['enc_w'], p['enc_b'], p['mean_w'], p['mean_b'],
               p['logvar_w'], p['logvar_b'],
               p['l2h_wz'], p['l2h_wc'], p['l2h_b'],
               p['l2c_wz'], p['l2c_wc'], p['l2c_b'],
               p['dec_w'], p['dec_b'], p['dec_out_w'], p['dec_out_b'])
    n_in = 5 + len(weights)

    if use_teacher_forcing:
        T_dec = min(MAX_LENGTH, int(target_tokens.shape[0]))
        dec_in = jnp.concatenate(
            [jnp.zeros((1,), jnp.int32),
             target_tokens[:T_dec - 1].astype(jnp.int32)])
        dec_x = jnp.take(p['dec_emb'], dec_in, axis=0)             # (T_dec, Hp)
        kernel = functools.partial(_seq2seq_tf_kernel, T_in, T_dec, Hp, V, Vp)
        logp, m, lgv = pl.pallas_call(
            kernel,
            out_shape=(jax.ShapeDtypeStruct((T_dec, Vp), jnp.float32),
                       jax.ShapeDtypeStruct((1, Lp), jnp.float32),
                       jax.ShapeDtypeStruct((1, Lp), jnp.float32)),
            in_specs=[pl.BlockSpec(memory_space=VMEM)] * n_in,
            out_specs=(pl.BlockSpec(memory_space=VMEM),) * 3,
        )(enc_x, dec_x, h0, cond_tg_p, eps, *weights)
    else:
        kernel = functools.partial(_seq2seq_greedy_kernel, T_in, Hp, V, Vp)
        logp, m, lgv = pl.pallas_call(
            kernel,
            out_shape=(jax.ShapeDtypeStruct((MAX_LENGTH, Vp), jnp.float32),
                       jax.ShapeDtypeStruct((1, Lp), jnp.float32),
                       jax.ShapeDtypeStruct((1, Lp), jnp.float32)),
            in_specs=[pl.BlockSpec(memory_space=VMEM)] * n_in,
            out_specs=(pl.BlockSpec(memory_space=VMEM),) * 3,
        )(enc_x, p['dec_emb'], h0, cond_tg_p, eps, *weights)

    # strip padding: outputs (T, 1, V) like torch.stack(ret); m, lgv: (1, 1, L)
    outputs = logp[:, :V].reshape(-1, 1, V)
    return outputs, m[:, :L].reshape(1, 1, L), lgv[:, :L].reshape(1, 1, L)


# ---------------------------------- main --------------------------------------

if __name__ == "__main__":
    hidden_size, num_of_word, cond_size, num_of_cond, latent_size = 32, 28, 8, 4, 16

    key = jax.random.PRNGKey(0)
    pkey, zkey, ikey, tkey = jax.random.split(key, 4)

    model = build_model(pkey, hidden_size, num_of_word, cond_size,
                        num_of_cond, latent_size)

    input_tokens = jax.random.randint(ikey, (6,), 2, num_of_word).astype(jnp.int32)
    target_tokens = jax.random.randint(tkey, (5,), 2, num_of_word).astype(jnp.int32)
    input_c, target_c = 1, 2

    # teacher-forcing path
    outputs_tf, m, lgv = seq2seq_forward(model, input_tokens, input_c,
                                         target_tokens, target_c,
                                         use_teacher_forcing=True, rng_key=zkey)
    jax.block_until_ready((outputs_tf, m, lgv))

    # greedy (no teacher forcing) path
    outputs_gr, _, _ = seq2seq_forward(model, input_tokens, input_c,
                                       target_tokens, target_c,
                                       use_teacher_forcing=False, rng_key=zkey)
    jax.block_until_ready(outputs_gr)

    assert outputs_tf.shape == (min(MAX_LENGTH, target_tokens.shape[0]), 1, num_of_word)
    assert outputs_gr.shape == (MAX_LENGTH, 1, num_of_word)
    assert m.shape == (1, 1, latent_size) and lgv.shape == (1, 1, latent_size)
    assert bool(jnp.all(jnp.isfinite(outputs_tf)))
    assert bool(jnp.all(jnp.isfinite(outputs_gr)))
    # log-softmax sanity: each row sums to ~1 in prob space
    assert bool(jnp.allclose(jnp.sum(jnp.exp(outputs_tf), axis=-1), 1.0, atol=1e-3))
    assert bool(jnp.allclose(jnp.sum(jnp.exp(outputs_gr), axis=-1), 1.0, atol=1e-3))

    print("KERNEL_OK")
</pallas_src>

<mosaic_0001>
module attributes {stable_mosaic.version = 11 : i64} {
  func.func @_seq2seq_tf_kernel(%arg0: memref<6x128xf32, #tpu.memory_space<vmem>>, %arg1: memref<5x128xf32, #tpu.memory_space<vmem>>, %arg2: memref<1x128xf32, #tpu.memory_space<vmem>>, %arg3: memref<1x128xf32, #tpu.memory_space<vmem>>, %arg4: memref<1x128xf32, #tpu.memory_space<vmem>>, %arg5: memref<256x512xf32, #tpu.memory_space<vmem>>, %arg6: memref<1x512xf32, #tpu.memory_space<vmem>>, %arg7: memref<128x128xf32, #tpu.memory_space<vmem>>, %arg8: memref<1x128xf32, #tpu.memory_space<vmem>>, %arg9: memref<128x128xf32, #tpu.memory_space<vmem>>, %arg10: memref<1x128xf32, #tpu.memory_space<vmem>>, %arg11: memref<128x128xf32, #tpu.memory_space<vmem>>, %arg12: memref<128x128xf32, #tpu.memory_space<vmem>>, %arg13: memref<1x128xf32, #tpu.memory_space<vmem>>, %arg14: memref<128x128xf32, #tpu.memory_space<vmem>>, %arg15: memref<128x128xf32, #tpu.memory_space<vmem>>, %arg16: memref<1x128xf32, #tpu.memory_space<vmem>>, %arg17: memref<256x512xf32, #tpu.memory_space<vmem>>, %arg18: memref<1x512xf32, #tpu.memory_space<vmem>>, %arg19: memref<128x128xf32, #tpu.memory_space<vmem>>, %arg20: memref<1x128xf32, #tpu.memory_space<vmem>>, %arg21: memref<5x128xf32, #tpu.memory_space<vmem>>, %arg22: memref<1x128xf32, #tpu.memory_space<vmem>>, %arg23: memref<1x128xf32, #tpu.memory_space<vmem>>) attributes {dimension_semantics = [], scalar_prefetch = 0 : i64, scratch_operands = 0 : i64, tpu.core_type = #tpu.core_type<tc>} {
    %c0 = arith.constant 0 : index
    %c0_0 = arith.constant 0 : index
    %0 = vector.load %arg2[%c0, %c0_0] : memref<1x128xf32, #tpu.memory_space<vmem>>, vector<1x128xf32>
    %cst = arith.constant 0.000000e+00 : f32
    %1 = vector.broadcast %cst : f32 to vector<1x128xf32>
    %c0_1 = arith.constant 0 : index
    %c0_2 = arith.constant 0 : index
    %2 = vector.load %arg5[%c0_1, %c0_2] : memref<256x512xf32, #tpu.memory_space<vmem>>, vector<256x512xf32>
    %c0_3 = arith.constant 0 : index
    %c0_4 = arith.constant 0 : index
    %3 = vector.load %arg6[%c0_3, %c0_4] : memref<1x512xf32, #tpu.memory_space<vmem>>, vector<1x512xf32>
    %c0_5 = arith.constant 0 : index
    %c0_6 = arith.constant 0 : index
    %4 = vector.load %arg0[%c0_5, %c0_6] : memref<6x128xf32, #tpu.memory_space<vmem>>, vector<1x128xf32>
    %5 = tpu.concatenate %4, %0 in 1 : vector<1x128xf32>, vector<1x128xf32> -> vector<1x256xf32>
    %cst_7 = arith.constant dense<0.000000e+00> : vector<1x512xf32>
    %6 = tpu.matmul %5, %2, %cst_7 {dimension_numbers = #tpu.dot_dimension_numbers<[1], [0], [0], [1], [0, 0, 1, 1], [], []>} : vector<1x256xf32>, vector<256x512xf32>, vector<1x512xf32> -> vector<1x512xf32>
    %7 = arith.addf %6, %3 : vector<1x512xf32>
    %8 = vector.extract_strided_slice %7 {offsets = [0, 0], sizes = [1, 128], strides = [1, 1]} : vector<1x512xf32> to vector<1x128xf32>
    %9 = arith.negf %8 : vector<1x128xf32>
    %10 = math.exp %9 : vector<1x128xf32>
    %cst_8 = arith.constant 1.000000e+00 : f32
    %11 = vector.broadcast %cst_8 : f32 to vector<1x128xf32>
    %12 = arith.addf %11, %10 : vector<1x128xf32>
    %13 = arith.divf %11, %12 : vector<1x128xf32>
    %14 = vector.extract_strided_slice %7 {offsets = [0, 128], sizes = [1, 128], strides = [1, 1]} : vector<1x512xf32> to vector<1x128xf32>
    %15 = arith.negf %14 : vector<1x128xf32>
    %16 = math.exp %15 : vector<1x128xf32>
    %cst_9 = arith.constant 1.000000e+00 : f32
    %17 = vector.broadcast %cst_9 : f32 to vector<1x128xf32>
    %18 = arith.addf %17, %16 : vector<1x128xf32>
    %19 = arith.divf %17, %18 : vector<1x128xf32>
    %20 = vector.extract_strided_slice %7 {offsets = [0, 256], sizes = [1, 128], strides = [1, 1]} : vector<1x512xf32> to vector<1x128xf32>
    %21 = math.tanh %20 : vector<1x128xf32>
    %22 = vector.extract_strided_slice %7 {offsets = [0, 384], sizes = [1, 128], strides = [1, 1]} : vector<1x512xf32> to vector<1x128xf32>
    %23 = arith.negf %22 : vector<1x128xf32>
    %24 = math.exp %23 : vector<1x128xf32>
    %cst_10 = arith.constant 1.000000e+00 : f32
    %25 = vector.broadcast %cst_10 : f32 to vector<1x128xf32>
    %26 = arith.addf %25, %24 : vector<1x128xf32>
    %27 = arith.divf %25, %26 : vector<1x128xf32>
    %28 = arith.mulf %19, %1 : vector<1x128xf32>
    %29 = arith.mulf %13, %21 : vector<1x128xf32>
    %30 = arith.addf %28, %29 : vector<1x128xf32>
    %31 = math.tanh %30 : vector<1x128xf32>
    %32 = arith.mulf %27, %31 : vector<1x128xf32>
    %c1 = arith.constant 1 : index
    %c0_11 = arith.constant 0 : index
    %33 = vector.load %arg0[%c1, %c0_11] : memref<6x128xf32, #tpu.memory_space<vmem>>, vector<1x128xf32>
    %34 = tpu.concatenate %33, %32 in 1 : vector<1x128xf32>, vector<1x128xf32> -> vector<1x256xf32>
    %cst_12 = arith.constant dense<0.000000e+00> : vector<1x512xf32>
    %35 = tpu.matmul %34, %2, %cst_12 {dimension_numbers = #tpu.dot_dimension_numbers<[1], [0], [0], [1], [0, 0, 1, 1], [], []>} : vector<1x256xf32>, vector<256x512xf32>, vector<1x512xf32> -> vector<1x512xf32>
    %36 = arith.addf %35, %3 : vector<1x512xf32>
    %37 = vector.extract_strided_slice %36 {offsets = [0, 0], sizes = [1, 128], strides = [1, 1]} : vector<1x512xf32> to vector<1x128xf32>
    %38 = arith.negf %37 : vector<1x128xf32>
    %39 = math.exp %38 : vector<1x128xf32>
    %cst_13 = arith.constant 1.000000e+00 : f32
    %40 = vector.broadcast %cst_13 : f32 to vector<1x128xf32>
    %41 = arith.addf %40, %39 : vector<1x128xf32>
    %42 = arith.divf %40, %41 : vector<1x128xf32>
    %43 = vector.extract_strided_slice %36 {offsets = [0, 128], sizes = [1, 128], strides = [1, 1]} : vector<1x512xf32> to vector<1x128xf32>
    %44 = arith.negf %43 : vector<1x128xf32>
    %45 = math.exp %44 : vector<1x128xf32>
    %cst_14 = arith.constant 1.000000e+00 : f32
    %46 = vector.broadcast %cst_14 : f32 to vector<1x128xf32>
    %47 = arith.addf %46, %45 : vector<1x128xf32>
    %48 = arith.divf %46, %47 : vector<1x128xf32>
    %49 = vector.extract_strided_slice %36 {offsets = [0, 256], sizes = [1, 128], strides = [1, 1]} : vector<1x512xf32> to vector<1x128xf32>
    %50 = math.tanh %49 : vector<1x128xf32>
    %51 = vector.extract_strided_slice %36 {offsets = [0, 384], sizes = [1, 128], strides = [1, 1]} : vector<1x512xf32> to vector<1x128xf32>
    %52 = arith.negf %51 : vector<1x128xf32>
    %53 = math.exp %52 : vector<1x128xf32>
    %cst_15 = arith.constant 1.000000e+00 : f32
    %54 = vector.broadcast %cst_15 : f32 to vector<1x128xf32>
    %55 = arith.addf %54, %53 : vector<1x128xf32>
    %56 = arith.divf %54, %55 : vector<1x128xf32>
    %57 = arith.mulf %48, %30 : vector<1x128xf32>
    %58 = arith.mulf %42, %50 : vector<1x128xf32>
    %59 = arith.addf %57, %58 : vector<1x128xf32>
    %60 = math.tanh %59 : vector<1x128xf32>
    %61 = arith.mulf %56, %60 : vector<1x128xf32>
    %c2 = arith.constant 2 : index
    %c0_16 = arith.constant 0 : index
    %62 = vector.load %arg0[%c2, %c0_16] : memref<6x128xf32, #tpu.memory_space<vmem>>, vector<1x128xf32>
    %63 = tpu.concatenate %62, %61 in 1 : vector<1x128xf32>, vector<1x128xf32> -> vector<1x256xf32>
    %cst_17 = arith.constant dense<0.000000e+00> : vector<1x512xf32>
    %64 = tpu.matmul %63, %2, %cst_17 {dimension_numbers = #tpu.dot_dimension_numbers<[1], [0], [0], [1], [0, 0, 1, 1], [], []>} : vector<1x256xf32>, vector<256x512xf32>, vector<1x512xf32> -> vector<1x512xf32>
    %65 = arith.addf %64, %3 : vector<1x512xf32>
    %66 = vector.extract_strided_slice %65 {offsets = [0, 0], sizes = [1, 128], strides = [1, 1]} : vector<1x512xf32> to vector<1x128xf32>
    %67 = arith.negf %66 : vector<1x128xf32>
    %68 = math.exp %67 : vector<1x128xf32>
    %cst_18 = arith.constant 1.000000e+00 : f32
    %69 = vector.broadcast %cst_18 : f32 to vector<1x128xf32>
    %70 = arith.addf %69, %68 : vector<1x128xf32>
    %71 = arith.divf %69, %70 : vector<1x128xf32>
    %72 = vector.extract_strided_slice %65 {offsets = [0, 128], sizes = [1, 128], strides = [1, 1]} : vector<1x512xf32> to vector<1x128xf32>
    %73 = arith.negf %72 : vector<1x128xf32>
    %74 = math.exp %73 : vector<1x128xf32>
    %cst_19 = arith.constant 1.000000e+00 : f32
    %75 = vector.broadcast %cst_19 : f32 to vector<1x128xf32>
    %76 = arith.addf %75, %74 : vector<1x128xf32>
    %77 = arith.divf %75, %76 : vector<1x128xf32>
    %78 = vector.extract_strided_slice %65 {offsets = [0, 256], sizes = [1, 128], strides = [1, 1]} : vector<1x512xf32> to vector<1x128xf32>
    %79 = math.tanh %78 : vector<1x128xf32>
    %80 = vector.extract_strided_slice %65 {offsets = [0, 384], sizes = [1, 128], strides = [1, 1]} : vector<1x512xf32> to vector<1x128xf32>
    %81 = arith.negf %80 : vector<1x128xf32>
    %82 = math.exp %81 : vector<1x128xf32>
    %cst_20 = arith.constant 1.000000e+00 : f32
    %83 = vector.broadcast %cst_20 : f32 to vector<1x128xf32>
    %84 = arith.addf %83, %82 : vector<1x128xf32>
    %85 = arith.divf %83, %84 : vector<1x128xf32>
    %86 = arith.mulf %77, %59 : vector<1x128xf32>
    %87 = arith.mulf %71, %79 : vector<1x128xf32>
    %88 = arith.addf %86, %87 : vector<1x128xf32>
    %89 = math.tanh %88 : vector<1x128xf32>
    %90 = arith.mulf %85, %89 : vector<1x128xf32>
    %c3 = arith.constant 3 : index
    %c0_21 = arith.constant 0 : index
    %91 = vector.load %arg0[%c3, %c0_21] : memref<6x128xf32, #tpu.memory_space<vmem>>, vector<1x128xf32>
    %92 = tpu.concatenate %91, %90 in 1 : vector<1x128xf32>, vector<1x128xf32> -> vector<1x256xf32>
    %cst_22 = arith.constant dense<0.000000e+00> : vector<1x512xf32>
    %93 = tpu.matmul %92, %2, %cst_22 {dimension_numbers = #tpu.dot_dimension_numbers<[1], [0], [0], [1], [0, 0, 1, 1], [], []>} : vector<1x256xf32>, vector<256x512xf32>, vector<1x512xf32> -> vector<1x512xf32>
    %94 = arith.addf %93, %3 : vector<1x512xf32>
    %95 = vector.extract_strided_slice %94 {offsets = [0, 0], sizes = [1, 128], strides = [1, 1]} : vector<1x512xf32> to vector<1x128xf32>
    %96 = arith.negf %95 : vector<1x128xf32>
    %97 = math.exp %96 : vector<1x128xf32>
    %cst_23 = arith.constant 1.000000e+00 : f32
    %98 = vector.broadcast %cst_23 : f32 to vector<1x128xf32>
    %99 = arith.addf %98, %97 : vector<1x128xf32>
    %100 = arith.divf %98, %99 : vector<1x128xf32>
    %101 = vector.extract_strided_slice %94 {offsets = [0, 128], sizes = [1, 128], strides = [1, 1]} : vector<1x512xf32> to vector<1x128xf32>
    %102 = arith.negf %101 : vector<1x128xf32>
    %103 = math.exp %102 : vector<1x128xf32>
    %cst_24 = arith.constant 1.000000e+00 : f32
    %104 = vector.broadcast %cst_24 : f32 to vector<1x128xf32>
    %105 = arith.addf %104, %103 : vector<1x128xf32>
    %106 = arith.divf %104, %105 : vector<1x128xf32>
    %107 = vector.extract_strided_slice %94 {offsets = [0, 256], sizes = [1, 128], strides = [1, 1]} : vector<1x512xf32> to vector<1x128xf32>
    %108 = math.tanh %107 : vector<1x128xf32>
    %109 = vector.extract_strided_slice %94 {offsets = [0, 384], sizes = [1, 128], strides = [1, 1]} : vector<1x512xf32> to vector<1x128xf32>
    %110 = arith.negf %109 : vector<1x128xf32>
    %111 = math.exp %110 : vector<1x128xf32>
    %cst_25 = arith.constant 1.000000e+00 : f32
    %112 = vector.broadcast %cst_25 : f32 to vector<1x128xf32>
    %113 = arith.addf %112, %111 : vector<1x128xf32>
    %114 = arith.divf %112, %113 : vector<1x128xf32>
    %115 = arith.mulf %106, %88 : vector<1x128xf32>
    %116 = arith.mulf %100, %108 : vector<1x128xf32>
    %117 = arith.addf %115, %116 : vector<1x128xf32>
    %118 = math.tanh %117 : vector<1x128xf32>
    %119 = arith.mulf %114, %118 : vector<1x128xf32>
    %c4 = arith.constant 4 : index
    %c0_26 = arith.constant 0 : index
    %120 = vector.load %arg0[%c4, %c0_26] : memref<6x128xf32, #tpu.memory_space<vmem>>, vector<1x128xf32>
    %121 = tpu.concatenate %120, %119 in 1 : vector<1x128xf32>, vector<1x128xf32> -> vector<1x256xf32>
    %cst_27 = arith.constant dense<0.000000e+00> : vector<1x512xf32>
    %122 = tpu.matmul %121, %2, %cst_27 {dimension_numbers = #tpu.dot_dimension_numbers<[1], [0], [0], [1], [0, 0, 1, 1], [], []>} : vector<1x256xf32>, vector<256x512xf32>, vector<1x512xf32> -> vector<1x512xf32>
    %123 = arith.addf %122, %3 : vector<1x512xf32>
    %124 = vector.extract_strided_slice %123 {offsets = [0, 0], sizes = [1, 128], strides = [1, 1]} : vector<1x512xf32> to vector<1x128xf32>
    %125 = arith.negf %124 : vector<1x128xf32>
    %126 = math.exp %125 : vector<1x128xf32>
    %cst_28 = arith.constant 1.000000e+00 : f32
    %127 = vector.broadcast %cst_28 : f32 to vector<1x128xf32>
    %128 = arith.addf %127, %126 : vector<1x128xf32>
    %129 = arith.divf %127, %128 : vector<1x128xf32>
    %130 = vector.extract_strided_slice %123 {offsets = [0, 128], sizes = [1, 128], strides = [1, 1]} : vector<1x512xf32> to vector<1x128xf32>
    %131 = arith.negf %130 : vector<1x128xf32>
    %132 = math.exp %131 : vector<1x128xf32>
    %cst_29 = arith.constant 1.000000e+00 : f32
    %133 = vector.broadcast %cst_29 : f32 to vector<1x128xf32>
    %134 = arith.addf %133, %132 : vector<1x128xf32>
    %135 = arith.divf %133, %134 : vector<1x128xf32>
    %136 = vector.extract_strided_slice %123 {offsets = [0, 256], sizes = [1, 128], strides = [1, 1]} : vector<1x512xf32> to vector<1x128xf32>
    %137 = math.tanh %136 : vector<1x128xf32>
    %138 = vector.extract_strided_slice %123 {offsets = [0, 384], sizes = [1, 128], strides = [1, 1]} : vector<1x512xf32> to vector<1x128xf32>
    %139 = arith.negf %138 : vector<1x128xf32>
    %140 = math.exp %139 : vector<1x128xf32>
    %cst_30 = arith.constant 1.000000e+00 : f32
    %141 = vector.broadcast %cst_30 : f32 to vector<1x128xf32>
    %142 = arith.addf %141, %140 : vector<1x128xf32>
    %143 = arith.divf %141, %142 : vector<1x128xf32>
    %144 = arith.mulf %135, %117 : vector<1x128xf32>
    %145 = arith.mulf %129, %137 : vector<1x128xf32>
    %146 = arith.addf %144, %145 : vector<1x128xf32>
    %147 = math.tanh %146 : vector<1x128xf32>
    %148 = arith.mulf %143, %147 : vector<1x128xf32>
    %c5 = arith.constant 5 : index
    %c0_31 = arith.constant 0 : index
    %149 = vector.load %arg0[%c5, %c0_31] : memref<6x128xf32, #tpu.memory_space<vmem>>, vector<1x128xf32>
    %150 = tpu.concatenate %149, %148 in 1 : vector<1x128xf32>, vector<1x128xf32> -> vector<1x256xf32>
    %cst_32 = arith.constant dense<0.000000e+00> : vector<1x512xf32>
    %151 = tpu.matmul %150, %2, %cst_32 {dimension_numbers = #tpu.dot_dimension_numbers<[1], [0], [0], [1], [0, 0, 1, 1], [], []>} : vector<1x256xf32>, vector<256x512xf32>, vector<1x512xf32> -> vector<1x512xf32>
    %152 = arith.addf %151, %3 : vector<1x512xf32>
    %153 = vector.extract_strided_slice %152 {offsets = [0, 0], sizes = [1, 128], strides = [1, 1]} : vector<1x512xf32> to vector<1x128xf32>
    %154 = arith.negf %153 : vector<1x128xf32>
    %155 = math.exp %154 : vector<1x128xf32>
    %cst_33 = arith.constant 1.000000e+00 : f32
    %156 = vector.broadcast %cst_33 : f32 to vector<1x128xf32>
    %157 = arith.addf %156, %155 : vector<1x128xf32>
    %158 = arith.divf %156, %157 : vector<1x128xf32>
    %159 = vector.extract_strided_slice %152 {offsets = [0, 128], sizes = [1, 128], strides = [1, 1]} : vector<1x512xf32> to vector<1x128xf32>
    %160 = arith.negf %159 : vector<1x128xf32>
    %161 = math.exp %160 : vector<1x128xf32>
    %cst_34 = arith.constant 1.000000e+00 : f32
    %162 = vector.broadcast %cst_34 : f32 to vector<1x128xf32>
    %163 = arith.addf %162, %161 : vector<1x128xf32>
    %164 = arith.divf %162, %163 : vector<1x128xf32>
    %165 = vector.extract_strided_slice %152 {offsets = [0, 256], sizes = [1, 128], strides = [1, 1]} : vector<1x512xf32> to vector<1x128xf32>
    %166 = math.tanh %165 : vector<1x128xf32>
    %167 = vector.extract_strided_slice %152 {offsets = [0, 384], sizes = [1, 128], strides = [1, 1]} : vector<1x512xf32> to vector<1x128xf32>
    %168 = arith.negf %167 : vector<1x128xf32>
    %169 = math.exp %168 : vector<1x128xf32>
    %cst_35 = arith.constant 1.000000e+00 : f32
    %170 = vector.broadcast %cst_35 : f32 to vector<1x128xf32>
    %171 = arith.addf %170, %169 : vector<1x128xf32>
    %172 = arith.divf %170, %171 : vector<1x128xf32>
    %173 = arith.mulf %164, %146 : vector<1x128xf32>
    %174 = arith.mulf %158, %166 : vector<1x128xf32>
    %175 = arith.addf %173, %174 : vector<1x128xf32>
    %176 = math.tanh %175 : vector<1x128xf32>
    %177 = arith.mulf %172, %176 : vector<1x128xf32>
    %c0_36 = arith.constant 0 : index
    %c0_37 = arith.constant 0 : index
    %178 = vector.load %arg7[%c0_36, %c0_37] : memref<128x128xf32, #tpu.memory_space<vmem>>, vector<128x128xf32>
    %cst_38 = arith.constant dense<0.000000e+00> : vector<1x128xf32>
    %179 = tpu.matmul %177, %178, %cst_38 {dimension_numbers = #tpu.dot_dimension_numbers<[1], [0], [0], [1], [0, 0, 1, 1], [], []>} : vector<1x128xf32>, vector<128x128xf32>, vector<1x128xf32> -> vector<1x128xf32>
    %c0_39 = arith.constant 0 : index
    %c0_40 = arith.constant 0 : index
    %180 = vector.load %arg8[%c0_39, %c0_40] : memref<1x128xf32, #tpu.memory_space<vmem>>, vector<1x128xf32>
    %181 = arith.addf %179, %180 : vector<1x128xf32>
    %c0_41 = arith.constant 0 : index
    %c0_42 = arith.constant 0 : index
    %182 = vector.load %arg9[%c0_41, %c0_42] : memref<128x128xf32, #tpu.memory_space<vmem>>, vector<128x128xf32>
    %cst_43 = arith.constant dense<0.000000e+00> : vector<1x128xf32>
    %183 = tpu.matmul %177, %182, %cst_43 {dimension_numbers = #tpu.dot_dimension_numbers<[1], [0], [0], [1], [0, 0, 1, 1], [], []>} : vector<1x128xf32>, vector<128x128xf32>, vector<1x128xf32> -> vector<1x128xf32>
    %c0_44 = arith.constant 0 : index
    %c0_45 = arith.constant 0 : index
    %184 = vector.load %arg10[%c0_44, %c0_45] : memref<1x128xf32, #tpu.memory_space<vmem>>, vector<1x128xf32>
    %185 = arith.addf %183, %184 : vector<1x128xf32>
    %c0_46 = arith.constant 0 : index
    %c0_47 = arith.constant 0 : index
    %186 = vector.load %arg4[%c0_46, %c0_47] : memref<1x128xf32, #tpu.memory_space<vmem>>, vector<1x128xf32>
    %cst_48 = arith.constant 5.000000e-01 : f32
    %187 = vector.broadcast %cst_48 : f32 to vector<1x128xf32>
    %188 = arith.mulf %185, %187 : vector<1x128xf32>
    %189 = math.exp %188 : vector<1x128xf32>
    %190 = arith.mulf %186, %189 : vector<1x128xf32>
    %191 = arith.addf %190, %181 : vector<1x128xf32>
    %c0_49 = arith.constant 0 : index
    %c0_50 = arith.constant 0 : index
    %192 = vector.load %arg3[%c0_49, %c0_50] : memref<1x128xf32, #tpu.memory_space<vmem>>, vector<1x128xf32>
    %c0_51 = arith.constant 0 : index
    %c0_52 = arith.constant 0 : index
    %193 = vector.load %arg11[%c0_51, %c0_52] : memref<128x128xf32, #tpu.memory_space<vmem>>, vector<128x128xf32>
    %cst_53 = arith.constant dense<0.000000e+00> : vector<1x128xf32>
    %194 = tpu.matmul %191, %193, %cst_53 {dimension_numbers = #tpu.dot_dimension_numbers<[1], [0], [0], [1], [0, 0, 1, 1], [], []>} : vector<1x128xf32>, vector<128x128xf32>, vector<1x128xf32> -> vector<1x128xf32>
    %c0_54 = arith.constant 0 : index
    %c0_55 = arith.constant 0 : index
    %195 = vector.load %arg12[%c0_54, %c0_55] : memref<128x128xf32, #tpu.memory_space<vmem>>, vector<128x128xf32>
    %cst_56 = arith.constant dense<0.000000e+00> : vector<1x128xf32>
    %196 = tpu.matmul %192, %195, %cst_56 {dimension_numbers = #tpu.dot_dimension_numbers<[1], [0], [0], [1], [0, 0, 1, 1], [], []>} : vector<1x128xf32>, vector<128x128xf32>, vector<1x128xf32> -> vector<1x128xf32>
    %197 = arith.addf %194, %196 : vector<1x128xf32>
    %c0_57 = arith.constant 0 : index
    %c0_58 = arith.constant 0 : index
    %198 = vector.load %arg13[%c0_57, %c0_58] : memref<1x128xf32, #tpu.memory_space<vmem>>, vector<1x128xf32>
    %199 = arith.addf %197, %198 : vector<1x128xf32>
    %c0_59 = arith.constant 0 : index
    %c0_60 = arith.constant 0 : index
    %200 = vector.load %arg14[%c0_59, %c0_60] : memref<128x128xf32, #tpu.memory_space<vmem>>, vector<128x128xf32>
    %cst_61 = arith.constant dense<0.000000e+00> : vector<1x128xf32>
    %201 = tpu.matmul %191, %200, %cst_61 {dimension_numbers = #tpu.dot_dimension_numbers<[1], [0], [0], [1], [0, 0, 1, 1], [], []>} : vector<1x128xf32>, vector<128x128xf32>, vector<1x128xf32> -> vector<1x128xf32>
    %c0_62 = arith.constant 0 : index
    %c0_63 = arith.constant 0 : index
    %202 = vector.load %arg15[%c0_62, %c0_63] : memref<128x128xf32, #tpu.memory_space<vmem>>, vector<128x128xf32>
    %cst_64 = arith.constant dense<0.000000e+00> : vector<1x128xf32>
    %203 = tpu.matmul %192, %202, %cst_64 {dimension_numbers = #tpu.dot_dimension_numbers<[1], [0], [0], [1], [0, 0, 1, 1], [], []>} : vector<1x128xf32>, vector<128x128xf32>, vector<1x128xf32> -> vector<1x128xf32>
    %204 = arith.addf %201, %203 : vector<1x128xf32>
    %c0_65 = arith.constant 0 : index
    %c0_66 = arith.constant 0 : index
    %205 = vector.load %arg16[%c0_65, %c0_66] : memref<1x128xf32, #tpu.memory_space<vmem>>, vector<1x128xf32>
    %206 = arith.addf %204, %205 : vector<1x128xf32>
    %c0_67 = arith.constant 0 : index
    %c0_68 = arith.constant 0 : index
    %207 = vector.load %arg22[%c0_67, %c0_68] : memref<1x128xf32, #tpu.memory_space<vmem>>, vector<1x128xf32>
    tpu.vector_store %arg22[%c0_67, %c0_68], %181 {strides = array<i32>} : memref<1x128xf32, #tpu.memory_space<vmem>>, vector<1x128xf32>,
    %c0_69 = arith.constant 0 : index
    %c0_70 = arith.constant 0 : index
    %208 = vector.load %arg23[%c0_69, %c0_70] : memref<1x128xf32, #tpu.memory_space<vmem>>, vector<1x128xf32>
    tpu.vector_store %arg23[%c0_69, %c0_70], %185 {strides = array<i32>} : memref<1x128xf32, #tpu.memory_space<vmem>>, vector<1x128xf32>,
    %c0_71 = arith.constant 0 : index
    %c0_72 = arith.constant 0 : index
    %209 = vector.load %arg17[%c0_71, %c0_72] : memref<256x512xf32, #tpu.memory_space<vmem>>, vector<256x512xf32>
    %c0_73 = arith.constant 0 : index
    %c0_74 = arith.constant 0 : index
    %210 = vector.load %arg18[%c0_73, %c0_74] : memref<1x512xf32, #tpu.memory_space<vmem>>, vector<1x512xf32>
    %c0_75 = arith.constant 0 : index
    %c0_76 = arith.constant 0 : index
    %211 = vector.load %arg19[%c0_75, %c0_76] : memref<128x128xf32, #tpu.memory_space<vmem>>, vector<128x128xf32>
    %c0_77 = arith.constant 0 : index
    %c0_78 = arith.constant 0 : index
    %212 = vector.load %arg20[%c0_77, %c0_78] : memref<1x128xf32, #tpu.memory_space<vmem>>, vector<1x128xf32>
    %213 = tpu.iota {dimensions = array<i32: 1>} : vector<1x128xi32>
    %c28_i32 = arith.constant 28 : i32
    %214 = vector.broadcast %c28_i32 : i32 to vector<1x128xi32>
    %215 = arith.cmpi slt, %213, %214 : vector<1x128xi32>
    %cst_79 = arith.constant 0.000000e+00 : f32
    %cst_80 = arith.constant -1.000000e+30 : f32
    %216 = vector.broadcast %cst_79 : f32 to vector<1x128xf32>
    %217 = vector.broadcast %cst_80 : f32 to vector<1x128xf32>
    %218 = arith.select %215, %216, %217 : vector<1x128xi1>, vector<1x128xf32>
    %c0_81 = arith.constant 0 : index
    %c0_82 = arith.constant 0 : index
    %219 = vector.load %arg1[%c0_81, %c0_82] : memref<5x128xf32, #tpu.memory_space<vmem>>, vector<1x128xf32>
    %cst_83 = arith.constant 0.000000e+00 : f32
    %220 = vector.broadcast %cst_83 : f32 to vector<1x128xf32>
    %221 = arith.maximumf %219, %220 : vector<1x128xf32>
    %222 = tpu.concatenate %221, %199 in 1 : vector<1x128xf32>, vector<1x128xf32> -> vector<1x256xf32>
    %cst_84 = arith.constant dense<0.000000e+00> : vector<1x512xf32>
    %223 = tpu.matmul %222, %209, %cst_84 {dimension_numbers = #tpu.dot_dimension_numbers<[1], [0], [0], [1], [0, 0, 1, 1], [], []>} : vector<1x256xf32>, vector<256x512xf32>, vector<1x512xf32> -> vector<1x512xf32>
    %224 = arith.addf %223, %210 : vector<1x512xf32>
    %225 = vector.extract_strided_slice %224 {offsets = [0, 0], sizes = [1, 128], strides = [1, 1]} : vector<1x512xf32> to vector<1x128xf32>
    %226 = arith.negf %225 : vector<1x128xf32>
    %227 = math.exp %226 : vector<1x128xf32>
    %cst_85 = arith.constant 1.000000e+00 : f32
    %228 = vector.broadcast %cst_85 : f32 to vector<1x128xf32>
    %229 = arith.addf %228, %227 : vector<1x128xf32>
    %230 = arith.divf %228, %229 : vector<1x128xf32>
    %231 = vector.extract_strided_slice %224 {offsets = [0, 128], sizes = [1, 128], strides = [1, 1]} : vector<1x512xf32> to vector<1x128xf32>
    %232 = arith.negf %231 : vector<1x128xf32>
    %233 = math.exp %232 : vector<1x128xf32>
    %cst_86 = arith.constant 1.000000e+00 : f32
    %234 = vector.broadcast %cst_86 : f32 to vector<1x128xf32>
    %235 = arith.addf %234, %233 : vector<1x128xf32>
    %236 = arith.divf %234, %235 : vector<1x128xf32>
    %237 = vector.extract_strided_slice %224 {offsets = [0, 256], sizes = [1, 128], strides = [1, 1]} : vector<1x512xf32> to vector<1x128xf32>
    %238 = math.tanh %237 : vector<1x128xf32>
    %239 = vector.extract_strided_slice %224 {offsets = [0, 384], sizes = [1, 128], strides = [1, 1]} : vector<1x512xf32> to vector<1x128xf32>
    %240 = arith.negf %239 : vector<1x128xf32>
    %241 = math.exp %240 : vector<1x128xf32>
    %cst_87 = arith.constant 1.000000e+00 : f32
    %242 = vector.broadcast %cst_87 : f32 to vector<1x128xf32>
    %243 = arith.addf %242, %241 : vector<1x128xf32>
    %244 = arith.divf %242, %243 : vector<1x128xf32>
    %245 = arith.mulf %236, %206 : vector<1x128xf32>
    %246 = arith.mulf %230, %238 : vector<1x128xf32>
    %247 = arith.addf %245, %246 : vector<1x128xf32>
    %248 = math.tanh %247 : vector<1x128xf32>
    %249 = arith.mulf %244, %248 : vector<1x128xf32>
    %cst_88 = arith.constant dense<0.000000e+00> : vector<1x128xf32>
    %250 = tpu.matmul %249, %211, %cst_88 {dimension_numbers = #tpu.dot_dimension_numbers<[1], [0], [0], [1], [0, 0, 1, 1], [], []>} : vector<1x128xf32>, vector<128x128xf32>, vector<1x128xf32> -> vector<1x128xf32>
    %251 = arith.addf %250, %212 : vector<1x128xf32>
    %252 = arith.addf %251, %218 : vector<1x128xf32>
    %cst_89 = arith.constant dense<0xFF800000> : vector<1xf32>
    %253 = vector.multi_reduction <maximumf>, %252, %cst_89 [1] : vector<1x128xf32> to vector<1xf32>
    %254 = vector.shape_cast %253 : vector<1xf32> to vector<1x1xf32>
    %255 = vector.broadcast %254 : vector<1x1xf32> to vector<1x128xf32>
    %256 = arith.subf %252, %255 : vector<1x128xf32>
    %257 = math.exp %256 : vector<1x128xf32>
    %cst_90 = arith.constant dense<0.000000e+00> : vector<1xf32>
    %258 = vector.multi_reduction <add>, %257, %cst_90 [1] : vector<1x128xf32> to vector<1xf32>
    %259 = vector.shape_cast %258 : vector<1xf32> to vector<1x1xf32>
    %260 = math.log %259 : vector<1x1xf32>
    %261 = vector.broadcast %254 : vector<1x1xf32> to vector<1x128xf32>
    %262 = arith.subf %252, %261 : vector<1x128xf32>
    %263 = vector.broadcast %260 : vector<1x1xf32> to vector<1x128xf32>
    %264 = arith.subf %262, %263 : vector<1x128xf32>
    %c0_91 = arith.constant 0 : index
    %c0_92 = arith.constant 0 : index
    %265 = vector.load %arg21[%c0_91, %c0_92] : memref<5x128xf32, #tpu.memory_space<vmem>>, vector<1x128xf32>
    tpu.vector_store %arg21[%c0_91, %c0_92], %264 {strides = array<i32>} : memref<5x128xf32, #tpu.memory_space<vmem>>, vector<1x128xf32>,
    %c1_93 = arith.constant 1 : index
    %c0_94 = arith.constant 0 : index
    %266 = vector.load %arg1[%c1_93, %c0_94] : memref<5x128xf32, #tpu.memory_space<vmem>>, vector<1x128xf32>
    %cst_95 = arith.constant 0.000000e+00 : f32
    %267 = vector.broadcast %cst_95 : f32 to vector<1x128xf32>
    %268 = arith.maximumf %266, %267 : vector<1x128xf32>
    %269 = tpu.concatenate %268, %249 in 1 : vector<1x128xf32>, vector<1x128xf32> -> vector<1x256xf32>
    %cst_96 = arith.constant dense<0.000000e+00> : vector<1x512xf32>
    %270 = tpu.matmul %269, %209, %cst_96 {dimension_numbers = #tpu.dot_dimension_numbers<[1], [0], [0], [1], [0, 0, 1, 1], [], []>} : vector<1x256xf32>, vector<256x512xf32>, vector<1x512xf32> -> vector<1x512xf32>
    %271 = arith.addf %270, %210 : vector<1x512xf32>
    %272 = vector.extract_strided_slice %271 {offsets = [0, 0], sizes = [1, 128], strides = [1, 1]} : vector<1x512xf32> to vector<1x128xf32>
    %273 = arith.negf %272 : vector<1x128xf32>
    %274 = math.exp %273 : vector<1x128xf32>
    %cst_97 = arith.constant 1.000000e+00 : f32
    %275 = vector.broadcast %cst_97 : f32 to vector<1x128xf32>
    %276 = arith.addf %275, %274 : vector<1x128xf32>
    %277 = arith.divf %275, %276 : vector<1x128xf32>
    %278 = vector.extract_strided_slice %271 {offsets = [0, 128], sizes = [1, 128], strides = [1, 1]} : vector<1x512xf32> to vector<1x128xf32>
    %279 = arith.negf %278 : vector<1x128xf32>
    %280 = math.exp %279 : vector<1x128xf32>
    %cst_98 = arith.constant 1.000000e+00 : f32
    %281 = vector.broadcast %cst_98 : f32 to vector<1x128xf32>
    %282 = arith.addf %281, %280 : vector<1x128xf32>
    %283 = arith.divf %281, %282 : vector<1x128xf32>
    %284 = vector.extract_strided_slice %271 {offsets = [0, 256], sizes = [1, 128], strides = [1, 1]} : vector<1x512xf32> to vector<1x128xf32>
    %285 = math.tanh %284 : vector<1x128xf32>
    %286 = vector.extract_strided_slice %271 {offsets = [0, 384], sizes = [1, 128], strides = [1, 1]} : vector<1x512xf32> to vector<1x128xf32>
    %287 = arith.negf %286 : vector<1x128xf32>
    %288 = math.exp %287 : vector<1x128xf32>
    %cst_99 = arith.constant 1.000000e+00 : f32
    %289 = vector.broadcast %cst_99 : f32 to vector<1x128xf32>
    %290 = arith.addf %289, %288 : vector<1x128xf32>
    %291 = arith.divf %289, %290 : vector<1x128xf32>
    %292 = arith.mulf %283, %247 : vector<1x128xf32>
    %293 = arith.mulf %277, %285 : vector<1x128xf32>
    %294 = arith.addf %292, %293 : vector<1x128xf32>
    %295 = math.tanh %294 : vector<1x128xf32>
    %296 = arith.mulf %291, %295 : vector<1x128xf32>
    %cst_100 = arith.constant dense<0.000000e+00> : vector<1x128xf32>
    %297 = tpu.matmul %296, %211, %cst_100 {dimension_numbers = #tpu.dot_dimension_numbers<[1], [0], [0], [1], [0, 0, 1, 1], [], []>} : vector<1x128xf32>, vector<128x128xf32>, vector<1x128xf32> -> vector<1x128xf32>
    %298 = arith.addf %297, %212 : vector<1x128xf32>
    %299 = arith.addf %298, %218 : vector<1x128xf32>
    %cst_101 = arith.constant dense<0xFF800000> : vector<1xf32>
    %300 = vector.multi_reduction <maximumf>, %299, %cst_101 [1] : vector<1x128xf32> to vector<1xf32>
    %301 = vector.shape_cast %300 : vector<1xf32> to vector<1x1xf32>
    %302 = vector.broadcast %301 : vector<1x1xf32> to vector<1x128xf32>
    %303 = arith.subf %299, %302 : vector<1x128xf32>
    %304 = math.exp %303 : vector<1x128xf32>
    %cst_102 = arith.constant dense<0.000000e+00> : vector<1xf32>
    %305 = vector.multi_reduction <add>, %304, %cst_102 [1] : vector<1x128xf32> to vector<1xf32>
    %306 = vector.shape_cast %305 : vector<1xf32> to vector<1x1xf32>
    %307 = math.log %306 : vector<1x1xf32>
    %308 = vector.broadcast %301 : vector<1x1xf32> to vector<1x128xf32>
    %309 = arith.subf %299, %308 : vector<1x128xf32>
    %310 = vector.broadcast %307 : vector<1x1xf32> to vector<1x128xf32>
    %311 = arith.subf %309, %310 : vector<1x128xf32>
    %c1_103 = arith.constant 1 : index
    %c0_104 = arith.constant 0 : index
    %312 = vector.load %arg21[%c1_103, %c0_104] : memref<5x128xf32, #tpu.memory_space<vmem>>, vector<1x128xf32>
    tpu.vector_store %arg21[%c1_103, %c0_104], %311 {strides = array<i32>} : memref<5x128xf32, #tpu.memory_space<vmem>>, vector<1x128xf32>,
    %c2_105 = arith.constant 2 : index
    %c0_106 = arith.constant 0 : index
    %313 = vector.load %arg1[%c2_105, %c0_106] : memref<5x128xf32, #tpu.memory_space<vmem>>, vector<1x128xf32>
    %cst_107 = arith.constant 0.000000e+00 : f32
    %314 = vector.broadcast %cst_107 : f32 to vector<1x128xf32>
    %315 = arith.maximumf %313, %314 : vector<1x128xf32>
    %316 = tpu.concatenate %315, %296 in 1 : vector<1x128xf32>, vector<1x128xf32> -> vector<1x256xf32>
    %cst_108 = arith.constant dense<0.000000e+00> : vector<1x512xf32>
    %317 = tpu.matmul %316, %209, %cst_108 {dimension_numbers = #tpu.dot_dimension_numbers<[1], [0], [0], [1], [0, 0, 1, 1], [], []>} : vector<1x256xf32>, vector<256x512xf32>, vector<1x512xf32> -> vector<1x512xf32>
    %318 = arith.addf %317, %210 : vector<1x512xf32>
    %319 = vector.extract_strided_slice %318 {offsets = [0, 0], sizes = [1, 128], strides = [1, 1]} : vector<1x512xf32> to vector<1x128xf32>
    %320 = arith.negf %319 : vector<1x128xf32>
    %321 = math.exp %320 : vector<1x128xf32>
    %cst_109 = arith.constant 1.000000e+00 : f32
    %322 = vector.broadcast %cst_109 : f32 to vector<1x128xf32>
    %323 = arith.addf %322, %321 : vector<1x128xf32>
    %324 = arith.divf %322, %323 : vector<1x128xf32>
    %325 = vector.extract_strided_slice %318 {offsets = [0, 128], sizes = [1, 128], strides = [1, 1]} : vector<1x512xf32> to vector<1x128xf32>
    %326 = arith.negf %325 : vector<1x128xf32>
    %327 = math.exp %326 : vector<1x128xf32>
    %cst_110 = arith.constant 1.000000e+00 : f32
    %328 = vector.broadcast %cst_110 : f32 to vector<1x128xf32>
    %329 = arith.addf %328, %327 : vector<1x128xf32>
    %330 = arith.divf %328, %329 : vector<1x128xf32>
    %331 = vector.extract_strided_slice %318 {offsets = [0, 256], sizes = [1, 128], strides = [1, 1]} : vector<1x512xf32> to vector<1x128xf32>
    %332 = math.tanh %331 : vector<1x128xf32>
    %333 = vector.extract_strided_slice %318 {offsets = [0, 384], sizes = [1, 128], strides = [1, 1]} : vector<1x512xf32> to vector<1x128xf32>
    %334 = arith.negf %333 : vector<1x128xf32>
    %335 = math.exp %334 : vector<1x128xf32>
    %cst_111 = arith.constant 1.000000e+00 : f32
    %336 = vector.broadcast %cst_111 : f32 to vector<1x128xf32>
    %337 = arith.addf %336, %335 : vector<1x128xf32>
    %338 = arith.divf %336, %337 : vector<1x128xf32>
    %339 = arith.mulf %330, %294 : vector<1x128xf32>
    %340 = arith.mulf %324, %332 : vector<1x128xf32>
    %341 = arith.addf %339, %340 : vector<1x128xf32>
    %342 = math.tanh %341 : vector<1x128xf32>
    %343 = arith.mulf %338, %342 : vector<1x128xf32>
    %cst_112 = arith.constant dense<0.000000e+00> : vector<1x128xf32>
    %344 = tpu.matmul %343, %211, %cst_112 {dimension_numbers = #tpu.dot_dimension_numbers<[1], [0], [0], [1], [0, 0, 1, 1], [], []>} : vector<1x128xf32>, vector<128x128xf32>, vector<1x128xf32> -> vector<1x128xf32>
    %345 = arith.addf %344, %212 : vector<1x128xf32>
    %346 = arith.addf %345, %218 : vector<1x128xf32>
    %cst_113 = arith.constant dense<0xFF800000> : vector<1xf32>
    %347 = vector.multi_reduction <maximumf>, %346, %cst_113 [1] : vector<1x128xf32> to vector<1xf32>
    %348 = vector.shape_cast %347 : vector<1xf32> to vector<1x1xf32>
    %349 = vector.broadcast %348 : vector<1x1xf32> to vector<1x128xf32>
    %350 = arith.subf %346, %349 : vector<1x128xf32>
    %351 = math.exp %350 : vector<1x128xf32>
    %cst_114 = arith.constant dense<0.000000e+00> : vector<1xf32>
    %352 = vector.multi_reduction <add>, %351, %cst_114 [1] : vector<1x128xf32> to vector<1xf32>
    %353 = vector.shape_cast %352 : vector<1xf32> to vector<1x1xf32>
    %354 = math.log %353 : vector<1x1xf32>
    %355 = vector.broadcast %348 : vector<1x1xf32> to vector<1x128xf32>
    %356 = arith.subf %346, %355 : vector<1x128xf32>
    %357 = vector.broadcast %354 : vector<1x1xf32> to vector<1x128xf32>
    %358 = arith.subf %356, %357 : vector<1x128xf32>
    %c2_115 = arith.constant 2 : index
    %c0_116 = arith.constant 0 : index
    %359 = vector.load %arg21[%c2_115, %c0_116] : memref<5x128xf32, #tpu.memory_space<vmem>>, vector<1x128xf32>
    tpu.vector_store %arg21[%c2_115, %c0_116], %358 {strides = array<i32>} : memref<5x128xf32, #tpu.memory_space<vmem>>, vector<1x128xf32>,
    %c3_117 = arith.constant 3 : index
    %c0_118 = arith.constant 0 : index
    %360 = vector.load %arg1[%c3_117, %c0_118] : memref<5x128xf32, #tpu.memory_space<vmem>>, vector<1x128xf32>
    %cst_119 = arith.constant 0.000000e+00 : f32
    %361 = vector.broadcast %cst_119 : f32 to vector<1x128xf32>
    %362 = arith.maximumf %360, %361 : vector<1x128xf32>
    %363 = tpu.concatenate %362, %343 in 1 : vector<1x128xf32>, vector<1x128xf32> -> vector<1x256xf32>
    %cst_120 = arith.constant dense<0.000000e+00> : vector<1x512xf32>
    %364 = tpu.matmul %363, %209, %cst_120 {dimension_numbers = #tpu.dot_dimension_numbers<[1], [0], [0], [1], [0, 0, 1, 1], [], []>} : vector<1x256xf32>, vector<256x512xf32>, vector<1x512xf32> -> vector<1x512xf32>
    %365 = arith.addf %364, %210 : vector<1x512xf32>
    %366 = vector.extract_strided_slice %365 {offsets = [0, 0], sizes = [1, 128], strides = [1, 1]} : vector<1x512xf32> to vector<1x128xf32>
    %367 = arith.negf %366 : vector<1x128xf32>
    %368 = math.exp %367 : vector<1x128xf32>
    %cst_121 = arith.constant 1.000000e+00 : f32
    %369 = vector.broadcast %cst_121 : f32 to vector<1x128xf32>
    %370 = arith.addf %369, %368 : vector<1x128xf32>
    %371 = arith.divf %369, %370 : vector<1x128xf32>
    %372 = vector.extract_strided_slice %365 {offsets = [0, 128], sizes = [1, 128], strides = [1, 1]} : vector<1x512xf32> to vector<1x128xf32>
    %373 = arith.negf %372 : vector<1x128xf32>
    %374 = math.exp %373 : vector<1x128xf32>
    %cst_122 = arith.constant 1.000000e+00 : f32
    %375 = vector.broadcast %cst_122 : f32 to vector<1x128xf32>
    %376 = arith.addf %375, %374 : vector<1x128xf32>
    %377 = arith.divf %375, %376 : vector<1x128xf32>
    %378 = vector.extract_strided_slice %365 {offsets = [0, 256], sizes = [1, 128], strides = [1, 1]} : vector<1x512xf32> to vector<1x128xf32>
    %379 = math.tanh %378 : vector<1x128xf32>
    %380 = vector.extract_strided_slice %365 {offsets = [0, 384], sizes = [1, 128], strides = [1, 1]} : vector<1x512xf32> to vector<1x128xf32>
    %381 = arith.negf %380 : vector<1x128xf32>
    %382 = math.exp %381 : vector<1x128xf32>
    %cst_123 = arith.constant 1.000000e+00 : f32
    %383 = vector.broadcast %cst_123 : f32 to vector<1x128xf32>
    %384 = arith.addf %383, %382 : vector<1x128xf32>
    %385 = arith.divf %383, %384 : vector<1x128xf32>
    %386 = arith.mulf %377, %341 : vector<1x128xf32>
    %387 = arith.mulf %371, %379 : vector<1x128xf32>
    %388 = arith.addf %386, %387 : vector<1x128xf32>
    %389 = math.tanh %388 : vector<1x128xf32>
    %390 = arith.mulf %385, %389 : vector<1x128xf32>
    %cst_124 = arith.constant dense<0.000000e+00> : vector<1x128xf32>
    %391 = tpu.matmul %390, %211, %cst_124 {dimension_numbers = #tpu.dot_dimension_numbers<[1], [0], [0], [1], [0, 0, 1, 1], [], []>} : vector<1x128xf32>, vector<128x128xf32>, vector<1x128xf32> -> vector<1x128xf32>
    %392 = arith.addf %391, %212 : vector<1x128xf32>
    %393 = arith.addf %392, %218 : vector<1x128xf32>
    %cst_125 = arith.constant dense<0xFF800000> : vector<1xf32>
    %394 = vector.multi_reduction <maximumf>, %393, %cst_125 [1] : vector<1x128xf32> to vector<1xf32>
    %395 = vector.shape_cast %394 : vector<1xf32> to vector<1x1xf32>
    %396 = vector.broadcast %395 : vector<1x1xf32> to vector<1x128xf32>
    %397 = arith.subf %393, %396 : vector<1x128xf32>
    %398 = math.exp %397 : vector<1x128xf32>
    %cst_126 = arith.constant dense<0.000000e+00> : vector<1xf32>
    %399 = vector.multi_reduction <add>, %398, %cst_126 [1] : vector<1x128xf32> to vector<1xf32>
    %400 = vector.shape_cast %399 : vector<1xf32> to vector<1x1xf32>
    %401 = math.log %400 : vector<1x1xf32>
    %402 = vector.broadcast %395 : vector<1x1xf32> to vector<1x128xf32>
    %403 = arith.subf %393, %402 : vector<1x128xf32>
    %404 = vector.broadcast %401 : vector<1x1xf32> to vector<1x128xf32>
    %405 = arith.subf %403, %404 : vector<1x128xf32>
    %c3_127 = arith.constant 3 : index
    %c0_128 = arith.constant 0 : index
    %406 = vector.load %arg21[%c3_127, %c0_128] : memref<5x128xf32, #tpu.memory_space<vmem>>, vector<1x128xf32>
    tpu.vector_store %arg21[%c3_127, %c0_128], %405 {strides = array<i32>} : memref<5x128xf32, #tpu.memory_space<vmem>>, vector<1x128xf32>,
    %c4_129 = arith.constant 4 : index
    %c0_130 = arith.constant 0 : index
    %407 = vector.load %arg1[%c4_129, %c0_130] : memref<5x128xf32, #tpu.memory_space<vmem>>, vector<1x128xf32>
    %cst_131 = arith.constant 0.000000e+00 : f32
    %408 = vector.broadcast %cst_131 : f32 to vector<1x128xf32>
    %409 = arith.maximumf %407, %408 : vector<1x128xf32>
    %410 = tpu.concatenate %409, %390 in 1 : vector<1x128xf32>, vector<1x128xf32> -> vector<1x256xf32>
    %cst_132 = arith.constant dense<0.000000e+00> : vector<1x512xf32>
    %411 = tpu.matmul %410, %209, %cst_132 {dimension_numbers = #tpu.dot_dimension_numbers<[1], [0], [0], [1], [0, 0, 1, 1], [], []>} : vector<1x256xf32>, vector<256x512xf32>, vector<1x512xf32> -> vector<1x512xf32>
    %412 = arith.addf %411, %210 : vector<1x512xf32>
    %413 = vector.extract_strided_slice %412 {offsets = [0, 0], sizes = [1, 128], strides = [1, 1]} : vector<1x512xf32> to vector<1x128xf32>
    %414 = arith.negf %413 : vector<1x128xf32>
    %415 = math.exp %414 : vector<1x128xf32>
    %cst_133 = arith.constant 1.000000e+00 : f32
    %416 = vector.broadcast %cst_133 : f32 to vector<1x128xf32>
    %417 = arith.addf %416, %415 : vector<1x128xf32>
    %418 = arith.divf %416, %417 : vector<1x128xf32>
    %419 = vector.extract_strided_slice %412 {offsets = [0, 128], sizes = [1, 128], strides = [1, 1]} : vector<1x512xf32> to vector<1x128xf32>
    %420 = arith.negf %419 : vector<1x128xf32>
    %421 = math.exp %420 : vector<1x128xf32>
    %cst_134 = arith.constant 1.000000e+00 : f32
    %422 = vector.broadcast %cst_134 : f32 to vector<1x128xf32>
    %423 = arith.addf %422, %421 : vector<1x128xf32>
    %424 = arith.divf %422, %423 : vector<1x128xf32>
    %425 = vector.extract_strided_slice %412 {offsets = [0, 256], sizes = [1, 128], strides = [1, 1]} : vector<1x512xf32> to vector<1x128xf32>
    %426 = math.tanh %425 : vector<1x128xf32>
    %427 = vector.extract_strided_slice %412 {offsets = [0, 384], sizes = [1, 128], strides = [1, 1]} : vector<1x512xf32> to vector<1x128xf32>
    %428 = arith.negf %427 : vector<1x128xf32>
    %429 = math.exp %428 : vector<1x128xf32>
    %cst_135 = arith.constant 1.000000e+00 : f32
    %430 = vector.broadcast %cst_135 : f32 to vector<1x128xf32>
    %431 = arith.addf %430, %429 : vector<1x128xf32>
    %432 = arith.divf %430, %431 : vector<1x128xf32>
    %433 = arith.mulf %424, %388 : vector<1x128xf32>
    %434 = arith.mulf %418, %426 : vector<1x128xf32>
    %435 = arith.addf %433, %434 : vector<1x128xf32>
    %436 = math.tanh %435 : vector<1x128xf32>
    %437 = arith.mulf %432, %436 : vector<1x128xf32>
    %cst_136 = arith.constant dense<0.000000e+00> : vector<1x128xf32>
    %438 = tpu.matmul %437, %211, %cst_136 {dimension_numbers = #tpu.dot_dimension_numbers<[1], [0], [0], [1], [0, 0, 1, 1], [], []>} : vector<1x128xf32>, vector<128x128xf32>, vector<1x128xf32> -> vector<1x128xf32>
    %439 = arith.addf %438, %212 : vector<1x128xf32>
    %440 = arith.addf %439, %218 : vector<1x128xf32>
    %cst_137 = arith.constant dense<0xFF800000> : vector<1xf32>
    %441 = vector.multi_reduction <maximumf>, %440, %cst_137 [1] : vector<1x128xf32> to vector<1xf32>
    %442 = vector.shape_cast %441 : vector<1xf32> to vector<1x1xf32>
    %443 = vector.broadcast %442 : vector<1x1xf32> to vector<1x128xf32>
    %444 = arith.subf %440, %443 : vector<1x128xf32>
    %445 = math.exp %444 : vector<1x128xf32>
    %cst_138 = arith.constant dense<0.000000e+00> : vector<1xf32>
    %446 = vector.multi_reduction <add>, %445, %cst_138 [1] : vector<1x128xf32> to vector<1xf32>
    %447 = vector.shape_cast %446 : vector<1xf32> to vector<1x1xf32>
    %448 = math.log %447 : vector<1x1xf32>
    %449 = vector.broadcast %442 : vector<1x1xf32> to vector<1x128xf32>
    %450 = arith.subf %440, %449 : vector<1x128xf32>
    %451 = vector.broadcast %448 : vector<1x1xf32> to vector<1x128xf32>
    %452 = arith.subf %450, %451 : vector<1x128xf32>
    %c4_139 = arith.constant 4 : index
    %c0_140 = arith.constant 0 : index
    %453 = vector.load %arg21[%c4_139, %c0_140] : memref<5x128xf32, #tpu.memory_space<vmem>>, vector<1x128xf32>
    tpu.vector_store %arg21[%c4_139, %c0_140], %452 {strides = array<i32>} : memref<5x128xf32, #tpu.memory_space<vmem>>, vector<1x128xf32>,
    return
  }
}

</mosaic_0001>

<llo_original>
// kernel: tpu_custom_call.1
$region0: #{tpu_custom_call.1}
  #allocation0 [shape = 'u32[]', space=smem, size = 0x4, offset = 0x4, fixed_abs, tag = 'smem constant byte address 0x4 - core index']
  #allocation1 [shape = 'u32[72,128]{1,0:T(1,128)}', space=vmem, size = 0x9000, scoped, tag = 'internal scratch']
  %s0 = inlined_call_operand.hbm [shape: f32[6,128], index: 0, kind: input, shape index: {}]
  %s1 = inlined_call_operand.hbm [shape: f32[5,128], index: 1, kind: input, shape index: {}]
  %s2 = inlined_call_operand.hbm [shape: f32[1,128], index: 2, kind: input, shape index: {}]
  %s3 = inlined_call_operand.hbm [shape: f32[1,128], index: 3, kind: input, shape index: {}]
  %s4 = inlined_call_operand.hbm [shape: f32[1,128], index: 4, kind: input, shape index: {}]
  %s5 = inlined_call_operand.hbm [shape: f32[256,512], index: 5, kind: input, shape index: {}]
  %s6 = inlined_call_operand.vmem [shape: f32[1,512], index: 6, kind: input, shape index: {}]
  %s7 = inlined_call_operand.hbm [shape: f32[128,128], index: 7, kind: input, shape index: {}]
  %s8 = inlined_call_operand.hbm [shape: f32[1,128], index: 8, kind: input, shape index: {}]
  %s9 = inlined_call_operand.hbm [shape: f32[128,128], index: 9, kind: input, shape index: {}]
  %s10 = inlined_call_operand.vmem [shape: f32[1,128], index: 10, kind: input, shape index: {}]
  %s11 = inlined_call_operand.hbm [shape: f32[128,128], index: 11, kind: input, shape index: {}]
  %s12 = inlined_call_operand.hbm [shape: f32[128,128], index: 12, kind: input, shape index: {}]
  %s13 = inlined_call_operand.vmem [shape: f32[1,128], index: 13, kind: input, shape index: {}]
  %s14 = inlined_call_operand.hbm [shape: f32[128,128], index: 14, kind: input, shape index: {}]
  %s15 = inlined_call_operand.hbm [shape: f32[128,128], index: 15, kind: input, shape index: {}]
  %s16 = inlined_call_operand.vmem [shape: f32[1,128], index: 16, kind: input, shape index: {}]
  %s17 = inlined_call_operand.hbm [shape: f32[256,512], index: 17, kind: input, shape index: {}]
  %s18 = inlined_call_operand.vmem [shape: f32[1,512], index: 18, kind: input, shape index: {}]
  %s19 = inlined_call_operand.hbm [shape: f32[128,128], index: 19, kind: input, shape index: {}]
  %s20 = inlined_call_operand.vmem [shape: f32[1,128], index: 20, kind: input, shape index: {}]
  %s21 = inlined_call_operand.hbm [shape: f32[5,128], index: 21, kind: output, shape index: {0}]
  %s22 = inlined_call_operand.hbm [shape: f32[1,128], index: 22, kind: output, shape index: {1}]
  %s23 = inlined_call_operand.hbm [shape: f32[1,128], index: 23, kind: output, shape index: {2}]
  %24 = xla_tuple %s21, %s22, %s23
  %s25 = sld [smem:[#allocation0]]
  $region170: #{tpu_custom_call.1} parent=0
    _
  %s27 = ssub.s32 1, %s25
  %s28 = scalar_select 0, %s27, %s25
  $region1: #{tpu_custom_call.1} parent=0
    #allocation2 [shape = 'u8[4096]{0}', space=vmem, size = 0x1000, scoped, tag = 'input window, operand 0, single buffered']
    #allocation3 [shape = 's32[1]{0}', space=sflag, size = 0x4, scoped, tag = 'scoped memory for tpu_custom_call.1']
    #allocation4 [shape = 's32[1]{0}', space=sflag, size = 0x4, scoped, tag = 'scoped memory for tpu_custom_call.1']
    #allocation5 [shape = 'u8[4096]{0}', space=vmem, size = 0x1000, scoped, tag = 'input window, operand 1, single buffered']
    #allocation6 [shape = 's32[1]{0}', space=sflag, size = 0x4, scoped, tag = 'scoped memory for tpu_custom_call.1']
    #allocation7 [shape = 'u8[512]{0}', space=vmem, size = 0x400, scoped, tag = 'input window, operand 2, single buffered']
    #allocation8 [shape = 'u8[512]{0}', space=vmem, size = 0x400, scoped, tag = 'input window, operand 3, single buffered']
    #allocation9 [shape = 's32[1]{0}', space=sflag, size = 0x4, scoped, tag = 'scoped memory for tpu_custom_call.1']
    #allocation10 [shape = 'u8[512]{0}', space=vmem, size = 0x400, scoped, tag = 'input window, operand 4, single buffered']
    #allocation11 [shape = 'u8[524288]{0}', space=vmem, size = 0x80000, scoped, tag = 'input window, operand 5, single buffered']
    #allocation12 [shape = 's32[1]{0}', space=sflag, size = 0x4, scoped, tag = 'scoped memory for tpu_custom_call.1']
    #allocation13 [shape = 'u8[65536]{0}', space=vmem, size = 0x10000, scoped, tag = 'input window, operand 7, single buffered']
    #allocation14 [shape = 'u8[512]{0}', space=vmem, size = 0x400, scoped, tag = 'input window, operand 8, single buffered']
    #allocation15 [shape = 's32[1]{0}', space=sflag, size = 0x4, scoped, tag = 'scoped memory for tpu_custom_call.1']
    #allocation16 [shape = 'u8[65536]{0}', space=vmem, size = 0x10000, scoped, tag = 'input window, operand 9, single buffered']
    #allocation17 [shape = 'u8[65536]{0}', space=vmem, size = 0x10000, scoped, tag = 'input window, operand 11, single buffered']
    #allocation18 [shape = 's32[1]{0}', space=sflag, size = 0x4, scoped, tag = 'scoped memory for tpu_custom_call.1']
    #allocation19 [shape = 'u8[65536]{0}', space=vmem, size = 0x10000, scoped, tag = 'input window, operand 12, single buffered']
    #allocation20 [shape = 'u8[65536]{0}', space=vmem, size = 0x10000, scoped, tag = 'input window, operand 14, single buffered']
    #allocation21 [shape = 's32[1]{0}', space=sflag, size = 0x4, scoped, tag = 'scoped memory for tpu_custom_call.1']
    #allocation22 [shape = 'u8[65536]{0}', space=vmem, size = 0x10000, scoped, tag = 'input window, operand 15, single buffered']
    #allocation23 [shape = 'u8[524288]{0}', space=vmem, size = 0x80000, scoped, tag = 'input window, operand 17, single buffered']
    #allocation24 [shape = 's32[1]{0}', space=sflag, size = 0x4, scoped, tag = 'scoped memory for tpu_custom_call.1']
    #allocation25 [shape = 'u8[65536]{0}', space=vmem, size = 0x10000, scoped, tag = 'input window, operand 19, single buffered']
    #allocation26 [shape = 'u8[4096]{0}', space=vmem, size = 0x1000, scoped, tag = 'output window, operand 0, single buffered']
    #allocation27 [shape = 'u8[512]{0}', space=vmem, size = 0x400, scoped, tag = 'output window, operand 1, single buffered']
    #allocation28 [shape = 's32[1]{0}', space=sflag, size = 0x4, scoped, tag = 'scoped memory for tpu_custom_call.1']
    #allocation29 [shape = 'u8[512]{0}', space=vmem, size = 0x400, scoped, tag = 'output window, operand 2, single buffered']
    %29 = vsyncpa [#allocation3], 0
    %30 = vsyncpa [#allocation6], 0
    %31 = vsyncpa [#allocation9], 0
    %32 = vsyncpa [#allocation12], 0
    %33 = vsyncpa [#allocation15], 0
    %34 = vsyncpa [#allocation18], 0
    %35 = vsyncpa [#allocation21], 0
    %36 = vsyncpa [#allocation24], 0
    %37 = vsyncpa [#allocation4], 0
    %38 = vsyncpa [#allocation28], 0
    // Predicated region
    $region2: #{tpu_custom_call.1} parent=1 // pred_check
      _
    $region3: #{tpu_custom_call.1} parent=1 // pred_check_branch
      %40 = sbr.rel (0) target = $region5
    $region4: #{tpu_custom_call.1} parent=1 // pred_region
      %42 = vsyncadd [#allocation3], 0
      %s44 = sshll.u32 %s0, 4
      %s45 = int_to_ptr.hbm [resolvable:$true] %s44
      %s46 = sshll.u32 [#allocation2], 4
      %s47 = int_to_ptr.vmem [resolvable:$true] %s46
      %49 = dma.hbm_to_vmem [thread:$0]  %s45, 128, %s47, [#allocation3]
    $region5: #{tpu_custom_call.1} parent=1 // pred_fallthru
      _
    // Predicated region
    $region6: #{tpu_custom_call.1} parent=1 // pred_check
      _
    $region7: #{tpu_custom_call.1} parent=1 // pred_check_branch
      %51 = sbr.rel (0) target = $region9
    $region8: #{tpu_custom_call.1} parent=1 // pred_region
      %53 = vsyncadd [#allocation6], 0
      %s55 = sshll.u32 %s1, 4
      %s56 = int_to_ptr.hbm [resolvable:$true] %s55
      %s57 = sshll.u32 [#allocation5], 4
      %s58 = int_to_ptr.vmem [resolvable:$true] %s57
      %60 = dma.hbm_to_vmem [thread:$0]  %s56, 128, %s58, [#allocation6]
    $region9: #{tpu_custom_call.1} parent=1 // pred_fallthru
      _
    // Predicated region
    $region10: #{tpu_custom_call.1} parent=1 // pred_check
      _
    $region11: #{tpu_custom_call.1} parent=1 // pred_check_branch
      %62 = sbr.rel (0) target = $region13
    $region12: #{tpu_custom_call.1} parent=1 // pred_region
      %64 = vsyncadd [#allocation6], 0
      %s66 = sshll.u32 %s2, 4
      %s67 = int_to_ptr.hbm [resolvable:$true] %s66
      %s68 = sshll.u32 [#allocation7], 4
      %s69 = int_to_ptr.vmem [resolvable:$true] %s68
      %71 = dma.hbm_to_vmem [thread:$0]  %s67, 16, %s69, [#allocation6]
    $region13: #{tpu_custom_call.1} parent=1 // pred_fallthru
      _
    // Predicated region
    $region14: #{tpu_custom_call.1} parent=1 // pred_check
      _
    $region15: #{tpu_custom_call.1} parent=1 // pred_check_branch
      %73 = sbr.rel (0) target = $region17
    $region16: #{tpu_custom_call.1} parent=1 // pred_region
      %75 = vsyncadd [#allocation9], 0
      %s77 = sshll.u32 %s3, 4
      %s78 = int_to_ptr.hbm [resolvable:$true] %s77
      %s79 = sshll.u32 [#allocation8], 4
      %s80 = int_to_ptr.vmem [resolvable:$true] %s79
      %82 = dma.hbm_to_vmem [thread:$0]  %s78, 16, %s80, [#allocation9]
    $region17: #{tpu_custom_call.1} parent=1 // pred_fallthru
      _
    // Predicated region
    $region18: #{tpu_custom_call.1} parent=1 // pred_check
      _
    $region19: #{tpu_custom_call.1} parent=1 // pred_check_branch
      %84 = sbr.rel (0) target = $region21
    $region20: #{tpu_custom_call.1} parent=1 // pred_region
      %86 = vsyncadd [#allocation9], 0
      %s88 = sshll.u32 %s4, 4
      %s89 = int_to_ptr.hbm [resolvable:$true] %s88
      %s90 = sshll.u32 [#allocation10], 4
      %s91 = int_to_ptr.vmem [resolvable:$true] %s90
      %93 = dma.hbm_to_vmem [thread:$0]  %s89, 16, %s91, [#allocation9]
    $region21: #{tpu_custom_call.1} parent=1 // pred_fallthru
      _
    // Predicated region
    $region22: #{tpu_custom_call.1} parent=1 // pred_check
      _
    $region23: #{tpu_custom_call.1} parent=1 // pred_check_branch
      %95 = sbr.rel (0) target = $region25
    $region24: #{tpu_custom_call.1} parent=1 // pred_region
      %97 = vsyncadd [#allocation12], 0
      %s98 = sshll.u32 %s5, 4
      %s99 = int_to_ptr.hbm [resolvable:$true] %s98
      %s100 = sshll.u32 [#allocation11], 4
      %s101 = int_to_ptr.vmem [resolvable:$true] %s100
      %106 = dma.hbm_to_vmem [thread:$0]  %s99, 16384, %s101, [#allocation12], 512, 512, 32
    $region25: #{tpu_custom_call.1} parent=1 // pred_fallthru
      _
    // Predicated region
    $region26: #{tpu_custom_call.1} parent=1 // pred_check
      _
    $region27: #{tpu_custom_call.1} parent=1 // pred_check_branch
      %108 = sbr.rel (0) target = $region29
    $region28: #{tpu_custom_call.1} parent=1 // pred_region
      _
    $region29: #{tpu_custom_call.1} parent=1 // pred_fallthru
      _
    // Predicated region
    $region30: #{tpu_custom_call.1} parent=1 // pred_check
      _
    $region31: #{tpu_custom_call.1} parent=1 // pred_check_branch
      %110 = sbr.rel (0) target = $region33
    $region32: #{tpu_custom_call.1} parent=1 // pred_region
      %112 = vsyncadd [#allocation12], 0
      %s113 = sshll.u32 %s7, 4
      %s114 = int_to_ptr.hbm [resolvable:$true] %s113
      %s115 = sshll.u32 [#allocation13], 4
      %s116 = int_to_ptr.vmem [resolvable:$true] %s115
      %121 = dma.hbm_to_vmem [thread:$0]  %s114, 2048, %s116, [#allocation12], 128, 128, 8
    $region33: #{tpu_custom_call.1} parent=1 // pred_fallthru
      _
    // Predicated region
    $region34: #{tpu_custom_call.1} parent=1 // pred_check
      _
    $region35: #{tpu_custom_call.1} parent=1 // pred_check_branch
      %123 = sbr.rel (0) target = $region37
    $region36: #{tpu_custom_call.1} parent=1 // pred_region
      %125 = vsyncadd [#allocation15], 0
      %s127 = sshll.u32 %s8, 4
      %s128 = int_to_ptr.hbm [resolvable:$true] %s127
      %s129 = sshll.u32 [#allocation14], 4
      %s130 = int_to_ptr.vmem [resolvable:$true] %s129
      %132 = dma.hbm_to_vmem [thread:$0]  %s128, 16, %s130, [#allocation15]
    $region37: #{tpu_custom_call.1} parent=1 // pred_fallthru
      _
    // Predicated region
    $region38: #{tpu_custom_call.1} parent=1 // pred_check
      _
    $region39: #{tpu_custom_call.1} parent=1 // pred_check_branch
      %134 = sbr.rel (0) target = $region41
    $region40: #{tpu_custom_call.1} parent=1 // pred_region
      %136 = vsyncadd [#allocation15], 0
      %s137 = sshll.u32 %s9, 4
      %s138 = int_to_ptr.hbm [resolvable:$true] %s137
      %s139 = sshll.u32 [#allocation16], 4
      %s140 = int_to_ptr.vmem [resolvable:$true] %s139
      %145 = dma.hbm_to_vmem [thread:$0]  %s138, 2048, %s140, [#allocation15], 128, 128, 8
    $region41: #{tpu_custom_call.1} parent=1 // pred_fallthru
      _
    // Predicated region
    $region42: #{tpu_custom_call.1} parent=1 // pred_check
      _
    $region43: #{tpu_custom_call.1} parent=1 // pred_check_branch
      %147 = sbr.rel (0) target = $region45
    $region44: #{tpu_custom_call.1} parent=1 // pred_region
      _
    $region45: #{tpu_custom_call.1} parent=1 // pred_fallthru
      _
    // Predicated region
    $region46: #{tpu_custom_call.1} parent=1 // pred_check
      _
    $region47: #{tpu_custom_call.1} parent=1 // pred_check_branch
      %149 = sbr.rel (0) target = $region49
    $region48: #{tpu_custom_call.1} parent=1 // pred_region
      %151 = vsyncadd [#allocation18], 0
      %s152 = sshll.u32 %s11, 4
      %s153 = int_to_ptr.hbm [resolvable:$true] %s152
      %s154 = sshll.u32 [#allocation17], 4
      %s155 = int_to_ptr.vmem [resolvable:$true] %s154
      %160 = dma.hbm_to_vmem [thread:$0]  %s153, 2048, %s155, [#allocation18], 128, 128, 8
    $region49: #{tpu_custom_call.1} parent=1 // pred_fallthru
      _
    // Predicated region
    $region50: #{tpu_custom_call.1} parent=1 // pred_check
      _
    $region51: #{tpu_custom_call.1} parent=1 // pred_check_branch
      %162 = sbr.rel (0) target = $region53
    $region52: #{tpu_custom_call.1} parent=1 // pred_region
      %164 = vsyncadd [#allocation18], 0
      %s165 = sshll.u32 %s12, 4
      %s166 = int_to_ptr.hbm [resolvable:$true] %s165
      %s167 = sshll.u32 [#allocation19], 4
      %s168 = int_to_ptr.vmem [resolvable:$true] %s167
      %173 = dma.hbm_to_vmem [thread:$0]  %s166, 2048, %s168, [#allocation18], 128, 128, 8
    $region53: #{tpu_custom_call.1} parent=1 // pred_fallthru
      _
    // Predicated region
    $region54: #{tpu_custom_call.1} parent=1 // pred_check
      _
    $region55: #{tpu_custom_call.1} parent=1 // pred_check_branch
      %175 = sbr.rel (0) target = $region57
    $region56: #{tpu_custom_call.1} parent=1 // pred_region
      _
    $region57: #{tpu_custom_call.1} parent=1 // pred_fallthru
      _
    // Predicated region
    $region58: #{tpu_custom_call.1} parent=1 // pred_check
      _
    $region59: #{tpu_custom_call.1} parent=1 // pred_check_branch
      %177 = sbr.rel (0) target = $region61
    $region60: #{tpu_custom_call.1} parent=1 // pred_region
      %179 = vsyncadd [#allocation21], 0
      %s180 = sshll.u32 %s14, 4
      %s181 = int_to_ptr.hbm [resolvable:$true] %s180
      %s182 = sshll.u32 [#allocation20], 4
      %s183 = int_to_ptr.vmem [resolvable:$true] %s182
      %188 = dma.hbm_to_vmem [thread:$0]  %s181, 2048, %s183, [#allocation21], 128, 128, 8
    $region61: #{tpu_custom_call.1} parent=1 // pred_fallthru
      _
    // Predicated region
    $region62: #{tpu_custom_call.1} parent=1 // pred_check
      _
    $region63: #{tpu_custom_call.1} parent=1 // pred_check_branch
      %190 = sbr.rel (0) target = $region65
    $region64: #{tpu_custom_call.1} parent=1 // pred_region
      %192 = vsyncadd [#allocation21], 0
      %s193 = sshll.u32 %s15, 4
      %s194 = int_to_ptr.hbm [resolvable:$true] %s193
      %s195 = sshll.u32 [#allocation22], 4
      %s196 = int_to_ptr.vmem [resolvable:$true] %s195
      %201 = dma.hbm_to_vmem [thread:$0]  %s194, 2048, %s196, [#allocation21], 128, 128, 8
    $region65: #{tpu_custom_call.1} parent=1 // pred_fallthru
      _
    // Predicated region
    $region66: #{tpu_custom_call.1} parent=1 // pred_check
      _
    $region67: #{tpu_custom_call.1} parent=1 // pred_check_branch
      %203 = sbr.rel (0) target = $region69
    $region68: #{tpu_custom_call.1} parent=1 // pred_region
      _
    $region69: #{tpu_custom_call.1} parent=1 // pred_fallthru
      _
    // Predicated region
    $region70: #{tpu_custom_call.1} parent=1 // pred_check
      _
    $region71: #{tpu_custom_call.1} parent=1 // pred_check_branch
      %205 = sbr.rel (0) target = $region73
    $region72: #{tpu_custom_call.1} parent=1 // pred_region
      %207 = vsyncadd [#allocation24], 0
      %s208 = sshll.u32 %s17, 4
      %s209 = int_to_ptr.hbm [resolvable:$true] %s208
      %s210 = sshll.u32 [#allocation23], 4
      %s211 = int_to_ptr.vmem [resolvable:$true] %s210
      %216 = dma.hbm_to_vmem [thread:$0]  %s209, 16384, %s211, [#allocation24], 512, 512, 32
    $region73: #{tpu_custom_call.1} parent=1 // pred_fallthru
      _
    // Predicated region
    $region74: #{tpu_custom_call.1} parent=1 // pred_check
      _
    $region75: #{tpu_custom_call.1} parent=1 // pred_check_branch
      %218 = sbr.rel (0) target = $region77
    $region76: #{tpu_custom_call.1} parent=1 // pred_region
      _
    $region77: #{tpu_custom_call.1} parent=1 // pred_fallthru
      _
    // Predicated region
    $region78: #{tpu_custom_call.1} parent=1 // pred_check
      _
    $region79: #{tpu_custom_call.1} parent=1 // pred_check_branch
      %220 = sbr.rel (0) target = $region81
    $region80: #{tpu_custom_call.1} parent=1 // pred_region
      %222 = vsyncadd [#allocation24], 0
      %s223 = sshll.u32 %s19, 4
      %s224 = int_to_ptr.hbm [resolvable:$true] %s223
      %s225 = sshll.u32 [#allocation25], 4
      %s226 = int_to_ptr.vmem [resolvable:$true] %s225
      %231 = dma.hbm_to_vmem [thread:$0]  %s224, 2048, %s226, [#allocation24], 128, 128, 8
    $region81: #{tpu_custom_call.1} parent=1 // pred_fallthru
      _
    // Predicated region
    $region82: #{tpu_custom_call.1} parent=1 // pred_check
      _
    $region83: #{tpu_custom_call.1} parent=1 // pred_check_branch
      %233 = sbr.rel (0) target = $region85
    $region84: #{tpu_custom_call.1} parent=1 // pred_region
      _
    $region85: #{tpu_custom_call.1} parent=1 // pred_fallthru
      _
    // Predicated region
    $region86: #{tpu_custom_call.1} parent=1 // pred_check
      _
    $region87: #{tpu_custom_call.1} parent=1 // pred_check_branch
      %235 = sbr.rel (0) target = $region89
    $region88: #{tpu_custom_call.1} parent=1 // pred_region
      %237 = dma.done [#allocation3], 128
    $region89: #{tpu_custom_call.1} parent=1 // pred_fallthru
      _
    // Predicated region
    $region90: #{tpu_custom_call.1} parent=1 // pred_check
      _
    $region91: #{tpu_custom_call.1} parent=1 // pred_check_branch
      %239 = sbr.rel (0) target = $region93
    $region92: #{tpu_custom_call.1} parent=1 // pred_region
      %241 = dma.done [#allocation6], 128
    $region93: #{tpu_custom_call.1} parent=1 // pred_fallthru
      _
    // Predicated region
    $region94: #{tpu_custom_call.1} parent=1 // pred_check
      _
    $region95: #{tpu_custom_call.1} parent=1 // pred_check_branch
      %243 = sbr.rel (0) target = $region97
    $region96: #{tpu_custom_call.1} parent=1 // pred_region
      %245 = dma.done [#allocation6], 16
    $region97: #{tpu_custom_call.1} parent=1 // pred_fallthru
      _
    // Predicated region
    $region98: #{tpu_custom_call.1} parent=1 // pred_check
      _
    $region99: #{tpu_custom_call.1} parent=1 // pred_check_branch
      %247 = sbr.rel (0) target = $region101
    $region100: #{tpu_custom_call.1} parent=1 // pred_region
      %249 = dma.done [#allocation9], 16
    $region101: #{tpu_custom_call.1} parent=1 // pred_fallthru
      _
    // Predicated region
    $region102: #{tpu_custom_call.1} parent=1 // pred_check
      _
    $region103: #{tpu_custom_call.1} parent=1 // pred_check_branch
      %251 = sbr.rel (0) target = $region105
    $region104: #{tpu_custom_call.1} parent=1 // pred_region
      %253 = dma.done [#allocation9], 16
    $region105: #{tpu_custom_call.1} parent=1 // pred_fallthru
      _
    // Predicated region
    $region106: #{tpu_custom_call.1} parent=1 // pred_check
      _
    $region107: #{tpu_custom_call.1} parent=1 // pred_check_branch
      %255 = sbr.rel (0) target = $region109
    $region108: #{tpu_custom_call.1} parent=1 // pred_region
      %257 = dma.done [#allocation12], 16384
    $region109: #{tpu_custom_call.1} parent=1 // pred_fallthru
      _
    // Predicated region
    $region110: #{tpu_custom_call.1} parent=1 // pred_check
      _
    $region111: #{tpu_custom_call.1} parent=1 // pred_check_branch
      %259 = sbr.rel (0) target = $region113
    $region112: #{tpu_custom_call.1} parent=1 // pred_region
      %261 = dma.done [#allocation12], 2048
    $region113: #{tpu_custom_call.1} parent=1 // pred_fallthru
      _
    // Predicated region
    $region114: #{tpu_custom_call.1} parent=1 // pred_check
      _
    $region115: #{tpu_custom_call.1} parent=1 // pred_check_branch
      %263 = sbr.rel (0) target = $region117
    $region116: #{tpu_custom_call.1} parent=1 // pred_region
      %265 = dma.done [#allocation15], 16
    $region117: #{tpu_custom_call.1} parent=1 // pred_fallthru
      _
    // Predicated region
    $region118: #{tpu_custom_call.1} parent=1 // pred_check
      _
    $region119: #{tpu_custom_call.1} parent=1 // pred_check_branch
      %267 = sbr.rel (0) target = $region121
    $region120: #{tpu_custom_call.1} parent=1 // pred_region
      %269 = dma.done [#allocation15], 2048
    $region121: #{tpu_custom_call.1} parent=1 // pred_fallthru
      _
    // Predicated region
    $region122: #{tpu_custom_call.1} parent=1 // pred_check
      _
    $region123: #{tpu_custom_call.1} parent=1 // pred_check_branch
      %271 = sbr.rel (0) target = $region125
    $region124: #{tpu_custom_call.1} parent=1 // pred_region
      %273 = dma.done [#allocation18], 2048
    $region125: #{tpu_custom_call.1} parent=1 // pred_fallthru
      _
    // Predicated region
    $region126: #{tpu_custom_call.1} parent=1 // pred_check
      _
    $region127: #{tpu_custom_call.1} parent=1 // pred_check_branch
      %275 = sbr.rel (0) target = $region129
    $region128: #{tpu_custom_call.1} parent=1 // pred_region
      %277 = dma.done [#allocation18], 2048
    $region129: #{tpu_custom_call.1} parent=1 // pred_fallthru
      _
    // Predicated region
    $region130: #{tpu_custom_call.1} parent=1 // pred_check
      _
    $region131: #{tpu_custom_call.1} parent=1 // pred_check_branch
      %279 = sbr.rel (0) target = $region133
    $region132: #{tpu_custom_call.1} parent=1 // pred_region
      %281 = dma.done [#allocation21], 2048
    $region133: #{tpu_custom_call.1} parent=1 // pred_fallthru
      _
    // Predicated region
    $region134: #{tpu_custom_call.1} parent=1 // pred_check
      _
    $region135: #{tpu_custom_call.1} parent=1 // pred_check_branch
      %283 = sbr.rel (0) target = $region137
    $region136: #{tpu_custom_call.1} parent=1 // pred_region
      %285 = dma.done [#allocation21], 2048
    $region137: #{tpu_custom_call.1} parent=1 // pred_fallthru
      _
    // Predicated region
    $region138: #{tpu_custom_call.1} parent=1 // pred_check
      _
    $region139: #{tpu_custom_call.1} parent=1 // pred_check_branch
      %287 = sbr.rel (0) target = $region141
    $region140: #{tpu_custom_call.1} parent=1 // pred_region
      %289 = dma.done [#allocation24], 16384
    $region141: #{tpu_custom_call.1} parent=1 // pred_fallthru
      _
    // Predicated region
    $region142: #{tpu_custom_call.1} parent=1 // pred_check
      _
    $region143: #{tpu_custom_call.1} parent=1 // pred_check_branch
      %291 = sbr.rel (0) target = $region145
    $region144: #{tpu_custom_call.1} parent=1 // pred_region
      %293 = dma.done [#allocation24], 2048
    $region145: #{tpu_custom_call.1} parent=1 // pred_fallthru
      _
    %v294 = vld [vmem:[#allocation7] sm:$0x1]
    %v295 = vld [vmem:[#allocation11] sm:$0xff]
    %v296 = vld [vmem:[#allocation11 + $0x8] sm:$0xff]
    %v297 = vld [vmem:[#allocation11 + $0x10] sm:$0xff]
    %v298 = vld [vmem:[#allocation11 + $0x18] sm:$0xff]
    %v299 = vld [vmem:[#allocation11 + $0x20] sm:$0xff]
    %v300 = vld [vmem:[#allocation11 + $0x28] sm:$0xff]
    %v301 = vld [vmem:[#allocation11 + $0x30] sm:$0xff]
    %v302 = vld [vmem:[#allocation11 + $0x38] sm:$0xff]
    %v303 = vld [vmem:[#allocation11 + $0x40] sm:$0xff]
    %v304 = vld [vmem:[#allocation11 + $0x48] sm:$0xff]
    %v305 = vld [vmem:[#allocation11 + $0x50] sm:$0xff]
    %v306 = vld [vmem:[#allocation11 + $0x58] sm:$0xff]
    %v307 = vld [vmem:[#allocation11 + $0x60] sm:$0xff]
    %v308 = vld [vmem:[#allocation11 + $0x68] sm:$0xff]
    %v309 = vld [vmem:[#allocation11 + $0x70] sm:$0xff]
    %v310 = vld [vmem:[#allocation11 + $0x78] sm:$0xff]
    %v311 = vld [vmem:[#allocation11 + $0x80] sm:$0xff]
    %v312 = vld [vmem:[#allocation11 + $0x88] sm:$0xff]
    %v313 = vld [vmem:[#allocation11 + $0x90] sm:$0xff]
    %v314 = vld [vmem:[#allocation11 + $0x98] sm:$0xff]
    %v315 = vld [vmem:[#allocation11 + $0xa0] sm:$0xff]
    %v316 = vld [vmem:[#allocation11 + $0xa8] sm:$0xff]
    %v317 = vld [vmem:[#allocation11 + $0xb0] sm:$0xff]
    %v318 = vld [vmem:[#allocation11 + $0xb8] sm:$0xff]
    %v319 = vld [vmem:[#allocation11 + $0xc0] sm:$0xff]
    %v320 = vld [vmem:[#allocation11 + $0xc8] sm:$0xff]
    %v321 = vld [vmem:[#allocation11 + $0xd0] sm:$0xff]
    %v322 = vld [vmem:[#allocation11 + $0xd8] sm:$0xff]
    %v323 = vld [vmem:[#allocation11 + $0xe0] sm:$0xff]
    %v324 = vld [vmem:[#allocation11 + $0xe8] sm:$0xff]
    %v325 = vld [vmem:[#allocation11 + $0xf0] sm:$0xff]
    %v326 = vld [vmem:[#allocation11 + $0xf8] sm:$0xff]
    %v327 = vld [vmem:[#allocation11 + $0x100] sm:$0xff]
    %v328 = vld [vmem:[#allocation11 + $0x108] sm:$0xff]
    %v329 = vld [vmem:[#allocation11 + $0x110] sm:$0xff]
    %v330 = vld [vmem:[#allocation11 + $0x118] sm:$0xff]
    %v331 = vld [vmem:[#allocation11 + $0x120] sm:$0xff]
    %v332 = vld [vmem:[#allocation11 + $0x128] sm:$0xff]
    %v333 = vld [vmem:[#allocation11 + $0x130] sm:$0xff]
    %v334 = vld [vmem:[#allocation11 + $0x138] sm:$0xff]
    %v335 = vld [vmem:[#allocation11 + $0x140] sm:$0xff]
    %v336 = vld [vmem:[#allocation11 + $0x148] sm:$0xff]
    %v337 = vld [vmem:[#allocation11 + $0x150] sm:$0xff]
    %v338 = vld [vmem:[#allocation11 + $0x158] sm:$0xff]
    %v339 = vld [vmem:[#allocation11 + $0x160] sm:$0xff]
    %v340 = vld [vmem:[#allocation11 + $0x168] sm:$0xff]
    %v341 = vld [vmem:[#allocation11 + $0x170] sm:$0xff]
    %v342 = vld [vmem:[#allocation11 + $0x178] sm:$0xff]
    %v343 = vld [vmem:[#allocation11 + $0x180] sm:$0xff]
    %v344 = vld [vmem:[#allocation11 + $0x188] sm:$0xff]
    %v345 = vld [vmem:[#allocation11 + $0x190] sm:$0xff]
    %v346 = vld [vmem:[#allocation11 + $0x198] sm:$0xff]
    %v347 = vld [vmem:[#allocation11 + $0x1a0] sm:$0xff]
    %v348 = vld [vmem:[#allocation11 + $0x1a8] sm:$0xff]
    %v349 = vld [vmem:[#allocation11 + $0x1b0] sm:$0xff]
    %v350 = vld [vmem:[#allocation11 + $0x1b8] sm:$0xff]
    %v351 = vld [vmem:[#allocation11 + $0x1c0] sm:$0xff]
    %v352 = vld [vmem:[#allocation11 + $0x1c8] sm:$0xff]
    %v353 = vld [vmem:[#allocation11 + $0x1d0] sm:$0xff]
    %v354 = vld [vmem:[#allocation11 + $0x1d8] sm:$0xff]
    %v355 = vld [vmem:[#allocation11 + $0x1e0] sm:$0xff]
    %v356 = vld [vmem:[#allocation11 + $0x1e8] sm:$0xff]
    %v357 = vld [vmem:[#allocation11 + $0x1f0] sm:$0xff]
    %v358 = vld [vmem:[#allocation11 + $0x1f8] sm:$0xff]
    %v359 = vld [vmem:[#allocation11 + $0x200] sm:$0xff]
    %v360 = vld [vmem:[#allocation11 + $0x208] sm:$0xff]
    %v361 = vld [vmem:[#allocation11 + $0x210] sm:$0xff]
    %v362 = vld [vmem:[#allocation11 + $0x218] sm:$0xff]
    %v363 = vld [vmem:[#allocation11 + $0x220] sm:$0xff]
    %v364 = vld [vmem:[#allocation11 + $0x228] sm:$0xff]
    %v365 = vld [vmem:[#allocation11 + $0x230] sm:$0xff]
    %v366 = vld [vmem:[#allocation11 + $0x238] sm:$0xff]
    %v367 = vld [vmem:[#allocation11 + $0x240] sm:$0xff]
    %v368 = vld [vmem:[#allocation11 + $0x248] sm:$0xff]
    %v369 = vld [vmem:[#allocation11 + $0x250] sm:$0xff]
    %v370 = vld [vmem:[#allocation11 + $0x258] sm:$0xff]
    %v371 = vld [vmem:[#allocation11 + $0x260] sm:$0xff]
    %v372 = vld [vmem:[#allocation11 + $0x268] sm:$0xff]
    %v373 = vld [vmem:[#allocation11 + $0x270] sm:$0xff]
    %v374 = vld [vmem:[#allocation11 + $0x278] sm:$0xff]
    %v375 = vld [vmem:[#allocation11 + $0x280] sm:$0xff]
    %v376 = vld [vmem:[#allocation11 + $0x288] sm:$0xff]
    %v377 = vld [vmem:[#allocation11 + $0x290] sm:$0xff]
    %v378 = vld [vmem:[#allocation11 + $0x298] sm:$0xff]
    %v379 = vld [vmem:[#allocation11 + $0x2a0] sm:$0xff]
    %v380 = vld [vmem:[#allocation11 + $0x2a8] sm:$0xff]
    %v381 = vld [vmem:[#allocation11 + $0x2b0] sm:$0xff]
    %v382 = vld [vmem:[#allocation11 + $0x2b8] sm:$0xff]
    %v383 = vld [vmem:[#allocation11 + $0x2c0] sm:$0xff]
    %v384 = vld [vmem:[#allocation11 + $0x2c8] sm:$0xff]
    %v385 = vld [vmem:[#allocation11 + $0x2d0] sm:$0xff]
    %v386 = vld [vmem:[#allocation11 + $0x2d8] sm:$0xff]
    %v387 = vld [vmem:[#allocation11 + $0x2e0] sm:$0xff]
    %v388 = vld [vmem:[#allocation11 + $0x2e8] sm:$0xff]
    %v389 = vld [vmem:[#allocation11 + $0x2f0] sm:$0xff]
    %v390 = vld [vmem:[#allocation11 + $0x2f8] sm:$0xff]
    %v391 = vld [vmem:[#allocation11 + $0x300] sm:$0xff]
    %v392 = vld [vmem:[#allocation11 + $0x308] sm:$0xff]
    %v393 = vld [vmem:[#allocation11 + $0x310] sm:$0xff]
    %v394 = vld [vmem:[#allocation11 + $0x318] sm:$0xff]
    %v395 = vld [vmem:[#allocation11 + $0x320] sm:$0xff]
    %v396 = vld [vmem:[#allocation11 + $0x328] sm:$0xff]
    %v397 = vld [vmem:[#allocation11 + $0x330] sm:$0xff]
    %v398 = vld [vmem:[#allocation11 + $0x338] sm:$0xff]
    %v399 = vld [vmem:[#allocation11 + $0x340] sm:$0xff]
    %v400 = vld [vmem:[#allocation11 + $0x348] sm:$0xff]
    %v401 = vld [vmem:[#allocation11 + $0x350] sm:$0xff]
    %v402 = vld [vmem:[#allocation11 + $0x358] sm:$0xff]
    %v403 = vld [vmem:[#allocation11 + $0x360] sm:$0xff]
    %v404 = vld [vmem:[#allocation11 + $0x368] sm:$0xff]
    %v405 = vld [vmem:[#allocation11 + $0x370] sm:$0xff]
    %v406 = vld [vmem:[#allocation11 + $0x378] sm:$0xff]
    %v407 = vld [vmem:[#allocation11 + $0x380] sm:$0xff]
    %v408 = vld [vmem:[#allocation11 + $0x388] sm:$0xff]
    %v409 = vld [vmem:[#allocation11 + $0x390] sm:$0xff]
    %v410 = vld [vmem:[#allocation11 + $0x398] sm:$0xff]
    %v411 = vld [vmem:[#allocation11 + $0x3a0] sm:$0xff]
    %v412 = vld [vmem:[#allocation11 + $0x3a8] sm:$0xff]
    %v413 = vld [vmem:[#allocation11 + $0x3b0] sm:$0xff]
    %v414 = vld [vmem:[#allocation11 + $0x3b8] sm:$0xff]
    %v415 = vld [vmem:[#allocation11 + $0x3c0] sm:$0xff]
    %v416 = vld [vmem:[#allocation11 + $0x3c8] sm:$0xff]
    %v417 = vld [vmem:[#allocation11 + $0x3d0] sm:$0xff]
    %v418 = vld [vmem:[#allocation11 + $0x3d8] sm:$0xff]
    %v419 = vld [vmem:[#allocation11 + $0x3e0] sm:$0xff]
    %v420 = vld [vmem:[#allocation11 + $0x3e8] sm:$0xff]
    %v421 = vld [vmem:[#allocation11 + $0x3f0] sm:$0xff]
    %v422 = vld [vmem:[#allocation11 + $0x3f8] sm:$0xff]
    %v423 = vld [vmem:[%s6] sm:$0xf]
    %v424 = vld [vmem:[#allocation2] sm:$0x1]
    %v426 = vperm.slane %v423, 0
    %v427 = vperm.slane %v423, 1
    %v428 = vperm.slane %v423, 2
    %v429 = vperm.slane %v423, 3
    %434 = vmatpush.msra.mxu0 %v355
    %435 = vmatpush.msra.mxu0 %v351
    %436 = vmatpush.msra.mxu0 %v347
    %437 = vmatpush.msra.mxu0 %v343
    %438 = vmatpush.msra.mxu0 %v339
    %439 = vmatpush.msra.mxu0 %v335
    %440 = vmatpush.msra.mxu0 %v331
    %441 = vmatpush.msra.mxu0 %v327
    %442 = vmatpush.msra.mxu0 %v323
    %443 = vmatpush.msra.mxu0 %v319
    %444 = vmatpush.msra.mxu0 %v315
    %445 = vmatpush.msra.mxu0 %v311
    %446 = vmatpush.msra.mxu0 %v307
    %447 = vmatpush.msra.mxu0 %v303
    %448 = vmatpush.msra.mxu0 %v299
    %449 = vmatpush.msra.mxu0 %v295
    %450 = vmatmul.f32.gmra.mxu0 %v424
    %v451 = vpop.f32.mrf.mxu0
    %v452 = vadd.f32 %v426, %v451
    %453 = vdwg.mxu0
    %454 = vmatpush.msra.mxu0 %v419
    %455 = vmatpush.msra.mxu0 %v415
    %456 = vmatpush.msra.mxu0 %v411
    %457 = vmatpush.msra.mxu0 %v407
    %458 = vmatpush.msra.mxu0 %v403
    %459 = vmatpush.msra.mxu0 %v399
    %460 = vmatpush.msra.mxu0 %v395
    %461 = vmatpush.msra.mxu0 %v391
    %462 = vmatpush.msra.mxu0 %v387
    %463 = vmatpush.msra.mxu0 %v383
    %464 = vmatpush.msra.mxu0 %v379
    %465 = vmatpush.msra.mxu0 %v375
    %466 = vmatpush.msra.mxu0 %v371
    %467 = vmatpush.msra.mxu0 %v367
    %468 = vmatpush.msra.mxu0 %v363
    %469 = vmatpush.msra.mxu0 %v359
    %470 = vmatmul.f32.gmra.mxu0 %v294
    %v471 = vpop.f32.mrf.mxu0
    %v472 = vadd.f32 %v452, %v471
    %473 = vdwg.mxu0
    %474 = vmatpush.msra.mxu0 %v356
    %475 = vmatpush.msra.mxu0 %v352
    %476 = vmatpush.msra.mxu0 %v348
    %477 = vmatpush.msra.mxu0 %v344
    %478 = vmatpush.msra.mxu0 %v340
    %479 = vmatpush.msra.mxu0 %v336
    %480 = vmatpush.msra.mxu0 %v332
    %481 = vmatpush.msra.mxu0 %v328
    %482 = vmatpush.msra.mxu0 %v324
    %483 = vmatpush.msra.mxu0 %v320
    %484 = vmatpush.msra.mxu0 %v316
    %485 = vmatpush.msra.mxu0 %v312
    %486 = vmatpush.msra.mxu0 %v308
    %487 = vmatpush.msra.mxu0 %v304
    %488 = vmatpush.msra.mxu0 %v300
    %489 = vmatpush.msra.mxu0 %v296
    %490 = vmatmul.f32.gmra.mxu0 %v424
    %v491 = vpop.f32.mrf.mxu0
    %v492 = vadd.f32 %v427, %v491
    %493 = vdwg.mxu0
    %494 = vmatpush.msra.mxu0 %v420
    %495 = vmatpush.msra.mxu0 %v416
    %496 = vmatpush.msra.mxu0 %v412
    %497 = vmatpush.msra.mxu0 %v408
    %498 = vmatpush.msra.mxu0 %v404
    %499 = vmatpush.msra.mxu0 %v400
    %500 = vmatpush.msra.mxu0 %v396
    %501 = vmatpush.msra.mxu0 %v392
    %502 = vmatpush.msra.mxu0 %v388
    %503 = vmatpush.msra.mxu0 %v384
    %504 = vmatpush.msra.mxu0 %v380
    %505 = vmatpush.msra.mxu0 %v376
    %506 = vmatpush.msra.mxu0 %v372
    %507 = vmatpush.msra.mxu0 %v368
    %508 = vmatpush.msra.mxu0 %v364
    %509 = vmatpush.msra.mxu0 %v360
    %510 = vmatmul.f32.gmra.mxu0 %v294
    %v511 = vpop.f32.mrf.mxu0
    %v512 = vadd.f32 %v492, %v511
    %513 = vdwg.mxu0
    %514 = vmatpush.msra.mxu0 %v357
    %515 = vmatpush.msra.mxu0 %v353
    %516 = vmatpush.msra.mxu0 %v349
    %517 = vmatpush.msra.mxu0 %v345
    %518 = vmatpush.msra.mxu0 %v341
    %519 = vmatpush.msra.mxu0 %v337
    %520 = vmatpush.msra.mxu0 %v333
    %521 = vmatpush.msra.mxu0 %v329
    %522 = vmatpush.msra.mxu0 %v325
    %523 = vmatpush.msra.mxu0 %v321
    %524 = vmatpush.msra.mxu0 %v317
    %525 = vmatpush.msra.mxu0 %v313
    %526 = vmatpush.msra.mxu0 %v309
    %527 = vmatpush.msra.mxu0 %v305
    %528 = vmatpush.msra.mxu0 %v301
    %529 = vmatpush.msra.mxu0 %v297
    %530 = vmatmul.f32.gmra.mxu0 %v424
    %v531 = vpop.f32.mrf.mxu0
    %v532 = vadd.f32 %v428, %v531
    %533 = vdwg.mxu0
    %534 = vmatpush.msra.mxu0 %v421
    %535 = vmatpush.msra.mxu0 %v417
    %536 = vmatpush.msra.mxu0 %v413
    %537 = vmatpush.msra.mxu0 %v409
    %538 = vmatpush.msra.mxu0 %v405
    %539 = vmatpush.msra.mxu0 %v401
    %540 = vmatpush.msra.mxu0 %v397
    %541 = vmatpush.msra.mxu0 %v393
    %542 = vmatpush.msra.mxu0 %v389
    %543 = vmatpush.msra.mxu0 %v385
    %544 = vmatpush.msra.mxu0 %v381
    %545 = vmatpush.msra.mxu0 %v377
    %546 = vmatpush.msra.mxu0 %v373
    %547 = vmatpush.msra.mxu0 %v369
    %548 = vmatpush.msra.mxu0 %v365
    %549 = vmatpush.msra.mxu0 %v361
    %550 = vmatmul.f32.gmra.mxu0 %v294
    %v551 = vpop.f32.mrf.mxu0
    %v552 = vadd.f32 %v532, %v551
    %553 = vdwg.mxu0
    %554 = vmatpush.msra.mxu0 %v358
    %555 = vmatpush.msra.mxu0 %v354
    %556 = vmatpush.msra.mxu0 %v350
    %557 = vmatpush.msra.mxu0 %v346
    %558 = vmatpush.msra.mxu0 %v342
    %559 = vmatpush.msra.mxu0 %v338
    %560 = vmatpush.msra.mxu0 %v334
    %561 = vmatpush.msra.mxu0 %v330
    %562 = vmatpush.msra.mxu0 %v326
    %563 = vmatpush.msra.mxu0 %v322
    %564 = vmatpush.msra.mxu0 %v318
    %565 = vmatpush.msra.mxu0 %v314
    %566 = vmatpush.msra.mxu0 %v310
    %567 = vmatpush.msra.mxu0 %v306
    %568 = vmatpush.msra.mxu0 %v302
    %569 = vmatpush.msra.mxu0 %v298
    %570 = vmatmul.f32.gmra.mxu0 %v424
    %v571 = vpop.f32.mrf.mxu0
    %v572 = vadd.f32 %v429, %v571
    %573 = vdwg.mxu0
    %574 = vmatpush.msra.mxu0 %v422
    %575 = vmatpush.msra.mxu0 %v418
    %576 = vmatpush.msra.mxu0 %v414
    %577 = vmatpush.msra.mxu0 %v410
    %578 = vmatpush.msra.mxu0 %v406
    %579 = vmatpush.msra.mxu0 %v402
    %580 = vmatpush.msra.mxu0 %v398
    %581 = vmatpush.msra.mxu0 %v394
    %582 = vmatpush.msra.mxu0 %v390
    %583 = vmatpush.msra.mxu0 %v386
    %584 = vmatpush.msra.mxu0 %v382
    %585 = vmatpush.msra.mxu0 %v378
    %586 = vmatpush.msra.mxu0 %v374
    %587 = vmatpush.msra.mxu0 %v370
    %588 = vmatpush.msra.mxu0 %v366
    %589 = vmatpush.msra.mxu0 %v362
    %590 = vmatmul.f32.gmra.mxu0 %v294
    %v591 = vpop.f32.mrf.mxu0
    %v592 = vadd.f32 %v572, %v591
    %593 = vdwg.mxu0
    %v594 = vxor.u32 %v472, 2147483648
    %v595 = vmul.f32 %v594, 1.442695
    %v596 = vpow.pop %v595
    %v597 = vadd.f32 %v596, 1.0
    %v598 = vrcp.pop %v597
    %v599 = vmul.f32 %v597, %v598
    %v600 = vsub.f32 1.0, %v599
    %v601 = vmul.f32 %v598, %v600
    %v602 = vadd.f32 %v598, %v601
    %vm603 = vweird.f32 %v597
    %vm604 = vweird.f32 %v598
    %vm605 = vmor %vm603, %vm604
    %v606 = vsel %vm605, %v598, %v602
    %v607 = vand.u32 2147483647, %v597
    %vm608 = vcmp.eq.f32.partialorder %v607, 8.507059e+37
    %v609 = vand.u32 %v597, 2147483648
    %v610 = vor.u32 1.1754944e-38, %v609
    %v611 = vsel %vm608, %v610, %v606
    %v612 = vmul.f32 1.0, %v611
    %v613 = vxor.u32 %v512, 2147483648
    %v614 = vmul.f32 %v613, 1.442695
    %v615 = vpow.pop %v614
    %v616 = vadd.f32 %v615, 1.0
    %v617 = vrcp.pop %v616
    %v618 = vmul.f32 %v616, %v617
    %v619 = vsub.f32 1.0, %v618
    %v620 = vmul.f32 %v617, %v619
    %v621 = vadd.f32 %v617, %v620
    %vm622 = vweird.f32 %v616
    %vm623 = vweird.f32 %v617
    %vm624 = vmor %vm622, %vm623
    %v625 = vsel %vm624, %v617, %v621
    %v626 = vand.u32 2147483647, %v616
    %vm627 = vcmp.eq.f32.partialorder %v626, 8.507059e+37
    %v628 = vand.u32 %v616, 2147483648
    %v629 = vor.u32 1.1754944e-38, %v628
    %v630 = vsel %vm627, %v629, %v625
    %v631 = vmul.f32 1.0, %v630
    %v632 = vtanh.pop %v552
    %v633 = vxor.u32 %v592, 2147483648
    %v634 = vmul.f32 %v633, 1.442695
    %v635 = vpow.pop %v634
    %v636 = vadd.f32 %v635, 1.0
    %v637 = vrcp.pop %v636
    %v638 = vmul.f32 %v636, %v637
    %v639 = vsub.f32 1.0, %v638
    %v640 = vmul.f32 %v637, %v639
    %v641 = vadd.f32 %v637, %v640
    %vm642 = vweird.f32 %v636
    %vm643 = vweird.f32 %v637
    %vm644 = vmor %vm642, %vm643
    %v645 = vsel %vm644, %v637, %v641
    %v646 = vand.u32 2147483647, %v636
    %vm647 = vcmp.eq.f32.partialorder %v646, 8.507059e+37
    %v648 = vand.u32 %v636, 2147483648
    %v649 = vor.u32 1.1754944e-38, %v648
    %v650 = vsel %vm647, %v649, %v645
    %v651 = vmul.f32 1.0, %v650
    %v652 = vmul.f32 %v631, 0.0
    %v653 = vmul.f32 %v612, %v632
    %v654 = vadd.f32 %v652, %v653
    %v655 = vtanh.pop %v654
    %v656 = vmul.f32 %v651, %v655
    %v657 = vld [vmem:[#allocation2 + $0x1] sm:$0x1]
    %658 = vmatpush.msra.mxu0 %v355
    %659 = vmatpush.msra.mxu0 %v351
    %660 = vmatpush.msra.mxu0 %v347
    %661 = vmatpush.msra.mxu0 %v343
    %662 = vmatpush.msra.mxu0 %v339
    %663 = vmatpush.msra.mxu0 %v335
    %664 = vmatpush.msra.mxu0 %v331
    %665 = vmatpush.msra.mxu0 %v327
    %666 = vmatpush.msra.mxu0 %v323
    %667 = vmatpush.msra.mxu0 %v319
    %668 = vmatpush.msra.mxu0 %v315
    %669 = vmatpush.msra.mxu0 %v311
    %670 = vmatpush.msra.mxu0 %v307
    %671 = vmatpush.msra.mxu0 %v303
    %672 = vmatpush.msra.mxu0 %v299
    %673 = vmatpush.msra.mxu0 %v295
    %674 = vmatmul.f32.gmra.mxu0 %v657
    %v675 = vpop.f32.mrf.mxu0
    %v676 = vadd.f32 %v426, %v675
    %677 = vdwg.mxu0
    %678 = vmatpush.msra.mxu0 %v419
    %679 = vmatpush.msra.mxu0 %v415
    %680 = vmatpush.msra.mxu0 %v411
    %681 = vmatpush.msra.mxu0 %v407
    %682 = vmatpush.msra.mxu0 %v403
    %683 = vmatpush.msra.mxu0 %v399
    %684 = vmatpush.msra.mxu0 %v395
    %685 = vmatpush.msra.mxu0 %v391
    %686 = vmatpush.msra.mxu0 %v387
    %687 = vmatpush.msra.mxu0 %v383
    %688 = vmatpush.msra.mxu0 %v379
    %689 = vmatpush.msra.mxu0 %v375
    %690 = vmatpush.msra.mxu0 %v371
    %691 = vmatpush.msra.mxu0 %v367
    %692 = vmatpush.msra.mxu0 %v363
    %693 = vmatpush.msra.mxu0 %v359
    %694 = vmatmul.f32.gmra.mxu0 %v656
    %v695 = vpop.f32.mrf.mxu0
    %v696 = vadd.f32 %v676, %v695
    %697 = vdwg.mxu0
    %698 = vmatpush.msra.mxu0 %v356
    %699 = vmatpush.msra.mxu0 %v352
    %700 = vmatpush.msra.mxu0 %v348
    %701 = vmatpush.msra.mxu0 %v344
    %702 = vmatpush.msra.mxu0 %v340
    %703 = vmatpush.msra.mxu0 %v336
    %704 = vmatpush.msra.mxu0 %v332
    %705 = vmatpush.msra.mxu0 %v328
    %706 = vmatpush.msra.mxu0 %v324
    %707 = vmatpush.msra.mxu0 %v320
    %708 = vmatpush.msra.mxu0 %v316
    %709 = vmatpush.msra.mxu0 %v312
    %710 = vmatpush.msra.mxu0 %v308
    %711 = vmatpush.msra.mxu0 %v304
    %712 = vmatpush.msra.mxu0 %v300
    %713 = vmatpush.msra.mxu0 %v296
    %714 = vmatmul.f32.gmra.mxu0 %v657
    %v715 = vpop.f32.mrf.mxu0
    %v716 = vadd.f32 %v427, %v715
    %717 = vdwg.mxu0
    %718 = vmatpush.msra.mxu0 %v420
    %719 = vmatpush.msra.mxu0 %v416
    %720 = vmatpush.msra.mxu0 %v412
    %721 = vmatpush.msra.mxu0 %v408
    %722 = vmatpush.msra.mxu0 %v404
    %723 = vmatpush.msra.mxu0 %v400
    %724 = vmatpush.msra.mxu0 %v396
    %725 = vmatpush.msra.mxu0 %v392
    %726 = vmatpush.msra.mxu0 %v388
    %727 = vmatpush.msra.mxu0 %v384
    %728 = vmatpush.msra.mxu0 %v380
    %729 = vmatpush.msra.mxu0 %v376
    %730 = vmatpush.msra.mxu0 %v372
    %731 = vmatpush.msra.mxu0 %v368
    %732 = vmatpush.msra.mxu0 %v364
    %733 = vmatpush.msra.mxu0 %v360
    %734 = vmatmul.f32.gmra.mxu0 %v656
    %v735 = vpop.f32.mrf.mxu0
    %v736 = vadd.f32 %v716, %v735
    %737 = vdwg.mxu0
    %738 = vmatpush.msra.mxu0 %v357
    %739 = vmatpush.msra.mxu0 %v353
    %740 = vmatpush.msra.mxu0 %v349
    %741 = vmatpush.msra.mxu0 %v345
    %742 = vmatpush.msra.mxu0 %v341
    %743 = vmatpush.msra.mxu0 %v337
    %744 = vmatpush.msra.mxu0 %v333
    %745 = vmatpush.msra.mxu0 %v329
    %746 = vmatpush.msra.mxu0 %v325
    %747 = vmatpush.msra.mxu0 %v321
    %748 = vmatpush.msra.mxu0 %v317
    %749 = vmatpush.msra.mxu0 %v313
    %750 = vmatpush.msra.mxu0 %v309
    %751 = vmatpush.msra.mxu0 %v305
    %752 = vmatpush.msra.mxu0 %v301
    %753 = vmatpush.msra.mxu0 %v297
    %754 = vmatmul.f32.gmra.mxu0 %v657
    %v755 = vpop.f32.mrf.mxu0
    %v756 = vadd.f32 %v428, %v755
    %757 = vdwg.mxu0
    %758 = vmatpush.msra.mxu0 %v421
    %759 = vmatpush.msra.mxu0 %v417
    %760 = vmatpush.msra.mxu0 %v413
    %761 = vmatpush.msra.mxu0 %v409
    %762 = vmatpush.msra.mxu0 %v405
    %763 = vmatpush.msra.mxu0 %v401
    %764 = vmatpush.msra.mxu0 %v397
    %765 = vmatpush.msra.mxu0 %v393
    %766 = vmatpush.msra.mxu0 %v389
    %767 = vmatpush.msra.mxu0 %v385
    %768 = vmatpush.msra.mxu0 %v381
    %769 = vmatpush.msra.mxu0 %v377
    %770 = vmatpush.msra.mxu0 %v373
    %771 = vmatpush.msra.mxu0 %v369
    %772 = vmatpush.msra.mxu0 %v365
    %773 = vmatpush.msra.mxu0 %v361
    %774 = vmatmul.f32.gmra.mxu0 %v656
    %v775 = vpop.f32.mrf.mxu0
    %v776 = vadd.f32 %v756, %v775
    %777 = vdwg.mxu0
    %778 = vmatpush.msra.mxu0 %v358
    %779 = vmatpush.msra.mxu0 %v354
    %780 = vmatpush.msra.mxu0 %v350
    %781 = vmatpush.msra.mxu0 %v346
    %782 = vmatpush.msra.mxu0 %v342
    %783 = vmatpush.msra.mxu0 %v338
    %784 = vmatpush.msra.mxu0 %v334
    %785 = vmatpush.msra.mxu0 %v330
    %786 = vmatpush.msra.mxu0 %v326
    %787 = vmatpush.msra.mxu0 %v322
    %788 = vmatpush.msra.mxu0 %v318
    %789 = vmatpush.msra.mxu0 %v314
    %790 = vmatpush.msra.mxu0 %v310
    %791 = vmatpush.msra.mxu0 %v306
    %792 = vmatpush.msra.mxu0 %v302
    %793 = vmatpush.msra.mxu0 %v298
    %794 = vmatmul.f32.gmra.mxu0 %v657
    %v795 = vpop.f32.mrf.mxu0
    %v796 = vadd.f32 %v429, %v795
    %797 = vdwg.mxu0
    %798 = vmatpush.msra.mxu0 %v422
    %799 = vmatpush.msra.mxu0 %v418
    %800 = vmatpush.msra.mxu0 %v414
    %801 = vmatpush.msra.mxu0 %v410
    %802 = vmatpush.msra.mxu0 %v406
    %803 = vmatpush.msra.mxu0 %v402
    %804 = vmatpush.msra.mxu0 %v398
    %805 = vmatpush.msra.mxu0 %v394
    %806 = vmatpush.msra.mxu0 %v390
    %807 = vmatpush.msra.mxu0 %v386
    %808 = vmatpush.msra.mxu0 %v382
    %809 = vmatpush.msra.mxu0 %v378
    %810 = vmatpush.msra.mxu0 %v374
    %811 = vmatpush.msra.mxu0 %v370
    %812 = vmatpush.msra.mxu0 %v366
    %813 = vmatpush.msra.mxu0 %v362
    %814 = vmatmul.f32.gmra.mxu0 %v656
    %v815 = vpop.f32.mrf.mxu0
    %v816 = vadd.f32 %v796, %v815
    %817 = vdwg.mxu0
    %v818 = vxor.u32 %v696, 2147483648
    %v819 = vmul.f32 %v818, 1.442695
    %v820 = vpow.pop %v819
    %v821 = vadd.f32 %v820, 1.0
    %v822 = vrcp.pop %v821
    %v823 = vmul.f32 %v821, %v822
    %v824 = vsub.f32 1.0, %v823
    %v825 = vmul.f32 %v822, %v824
    %v826 = vadd.f32 %v822, %v825
    %vm827 = vweird.f32 %v821
    %vm828 = vweird.f32 %v822
    %vm829 = vmor %vm827, %vm828
    %v830 = vsel %vm829, %v822, %v826
    %v831 = vand.u32 2147483647, %v821
    %vm832 = vcmp.eq.f32.partialorder %v831, 8.507059e+37
    %v833 = vand.u32 %v821, 2147483648
    %v834 = vor.u32 1.1754944e-38, %v833
    %v835 = vsel %vm832, %v834, %v830
    %v836 = vmul.f32 1.0, %v835
    %v837 = vxor.u32 %v736, 2147483648
    %v838 = vmul.f32 %v837, 1.442695
    %v839 = vpow.pop %v838
    %v840 = vadd.f32 %v839, 1.0
    %v841 = vrcp.pop %v840
    %v842 = vmul.f32 %v840, %v841
    %v843 = vsub.f32 1.0, %v842
    %v844 = vmul.f32 %v841, %v843
    %v845 = vadd.f32 %v841, %v844
    %vm846 = vweird.f32 %v840
    %vm847 = vweird.f32 %v841
    %vm848 = vmor %vm846, %vm847
    %v849 = vsel %vm848, %v841, %v845
    %v850 = vand.u32 2147483647, %v840
    %vm851 = vcmp.eq.f32.partialorder %v850, 8.507059e+37
    %v852 = vand.u32 %v840, 2147483648
    %v853 = vor.u32 1.1754944e-38, %v852
    %v854 = vsel %vm851, %v853, %v849
    %v855 = vmul.f32 1.0, %v854
    %v856 = vtanh.pop %v776
    %v857 = vxor.u32 %v816, 2147483648
    %v858 = vmul.f32 %v857, 1.442695
    %v859 = vpow.pop %v858
    %v860 = vadd.f32 %v859, 1.0
    %v861 = vrcp.pop %v860
    %v862 = vmul.f32 %v860, %v861
    %v863 = vsub.f32 1.0, %v862
    %v864 = vmul.f32 %v861, %v863
    %v865 = vadd.f32 %v861, %v864
    %vm866 = vweird.f32 %v860
    %vm867 = vweird.f32 %v861
    %vm868 = vmor %vm866, %vm867
    %v869 = vsel %vm868, %v861, %v865
    %v870 = vand.u32 2147483647, %v860
    %vm871 = vcmp.eq.f32.partialorder %v870, 8.507059e+37
    %v872 = vand.u32 %v860, 2147483648
    %v873 = vor.u32 1.1754944e-38, %v872
    %v874 = vsel %vm871, %v873, %v869
    %v875 = vmul.f32 1.0, %v874
    %v876 = vmul.f32 %v855, %v654
    %v877 = vmul.f32 %v836, %v856
    %v878 = vadd.f32 %v876, %v877
    %v879 = vtanh.pop %v878
    %v880 = vmul.f32 %v875, %v879
    %v881 = vld [vmem:[#allocation2 + $0x2] sm:$0x1]
    %882 = vmatpush.msra.mxu0 %v355
    %883 = vmatpush.msra.mxu0 %v351
    %884 = vmatpush.msra.mxu0 %v347
    %885 = vmatpush.msra.mxu0 %v343
    %886 = vmatpush.msra.mxu0 %v339
    %887 = vmatpush.msra.mxu0 %v335
    %888 = vmatpush.msra.mxu0 %v331
    %889 = vmatpush.msra.mxu0 %v327
    %890 = vmatpush.msra.mxu0 %v323
    %891 = vmatpush.msra.mxu0 %v319
    %892 = vmatpush.msra.mxu0 %v315
    %893 = vmatpush.msra.mxu0 %v311
    %894 = vmatpush.msra.mxu0 %v307
    %895 = vmatpush.msra.mxu0 %v303
    %896 = vmatpush.msra.mxu0 %v299
    %897 = vmatpush.msra.mxu0 %v295
    %898 = vmatmul.f32.gmra.mxu0 %v881
    %v899 = vpop.f32.mrf.mxu0
    %v900 = vadd.f32 %v426, %v899
    %901 = vdwg.mxu0
    %902 = vmatpush.msra.mxu0 %v419
    %903 = vmatpush.msra.mxu0 %v415
    %904 = vmatpush.msra.mxu0 %v411
    %905 = vmatpush.msra.mxu0 %v407
    %906 = vmatpush.msra.mxu0 %v403
    %907 = vmatpush.msra.mxu0 %v399
    %908 = vmatpush.msra.mxu0 %v395
    %909 = vmatpush.msra.mxu0 %v391
    %910 = vmatpush.msra.mxu0 %v387
    %911 = vmatpush.msra.mxu0 %v383
    %912 = vmatpush.msra.mxu0 %v379
    %913 = vmatpush.msra.mxu0 %v375
    %914 = vmatpush.msra.mxu0 %v371
    %915 = vmatpush.msra.mxu0 %v367
    %916 = vmatpush.msra.mxu0 %v363
    %917 = vmatpush.msra.mxu0 %v359
    %918 = vmatmul.f32.gmra.mxu0 %v880
    %v919 = vpop.f32.mrf.mxu0
    %v920 = vadd.f32 %v900, %v919
    %921 = vdwg.mxu0
    %922 = vmatpush.msra.mxu0 %v356
    %923 = vmatpush.msra.mxu0 %v352
    %924 = vmatpush.msra.mxu0 %v348
    %925 = vmatpush.msra.mxu0 %v344
    %926 = vmatpush.msra.mxu0 %v340
    %927 = vmatpush.msra.mxu0 %v336
    %928 = vmatpush.msra.mxu0 %v332
    %929 = vmatpush.msra.mxu0 %v328
    %930 = vmatpush.msra.mxu0 %v324
    %931 = vmatpush.msra.mxu0 %v320
    %932 = vmatpush.msra.mxu0 %v316
    %933 = vmatpush.msra.mxu0 %v312
    %934 = vmatpush.msra.mxu0 %v308
    %935 = vmatpush.msra.mxu0 %v304
    %936 = vmatpush.msra.mxu0 %v300
    %937 = vmatpush.msra.mxu0 %v296
    %938 = vmatmul.f32.gmra.mxu0 %v881
    %v939 = vpop.f32.mrf.mxu0
    %v940 = vadd.f32 %v427, %v939
    %941 = vdwg.mxu0
    %942 = vmatpush.msra.mxu0 %v420
    %943 = vmatpush.msra.mxu0 %v416
    %944 = vmatpush.msra.mxu0 %v412
    %945 = vmatpush.msra.mxu0 %v408
    %946 = vmatpush.msra.mxu0 %v404
    %947 = vmatpush.msra.mxu0 %v400
    %948 = vmatpush.msra.mxu0 %v396
    %949 = vmatpush.msra.mxu0 %v392
    %950 = vmatpush.msra.mxu0 %v388
    %951 = vmatpush.msra.mxu0 %v384
    %952 = vmatpush.msra.mxu0 %v380
    %953 = vmatpush.msra.mxu0 %v376
    %954 = vmatpush.msra.mxu0 %v372
    %955 = vmatpush.msra.mxu0 %v368
    %956 = vmatpush.msra.mxu0 %v364
    %957 = vmatpush.msra.mxu0 %v360
    %958 = vmatmul.f32.gmra.mxu0 %v880
    %v959 = vpop.f32.mrf.mxu0
    %v960 = vadd.f32 %v940, %v959
    %961 = vdwg.mxu0
    %962 = vmatpush.msra.mxu0 %v357
    %963 = vmatpush.msra.mxu0 %v353
    %964 = vmatpush.msra.mxu0 %v349
    %965 = vmatpush.msra.mxu0 %v345
    %966 = vmatpush.msra.mxu0 %v341
    %967 = vmatpush.msra.mxu0 %v337
    %968 = vmatpush.msra.mxu0 %v333
    %969 = vmatpush.msra.mxu0 %v329
    %970 = vmatpush.msra.mxu0 %v325
    %971 = vmatpush.msra.mxu0 %v321
    %972 = vmatpush.msra.mxu0 %v317
    %973 = vmatpush.msra.mxu0 %v313
    %974 = vmatpush.msra.mxu0 %v309
    %975 = vmatpush.msra.mxu0 %v305
    %976 = vmatpush.msra.mxu0 %v301
    %977 = vmatpush.msra.mxu0 %v297
    %978 = vmatmul.f32.gmra.mxu0 %v881
    %v979 = vpop.f32.mrf.mxu0
    %v980 = vadd.f32 %v428, %v979
    %981 = vdwg.mxu0
    %982 = vmatpush.msra.mxu0 %v421
    %983 = vmatpush.msra.mxu0 %v417
    %984 = vmatpush.msra.mxu0 %v413
    %985 = vmatpush.msra.mxu0 %v409
    %986 = vmatpush.msra.mxu0 %v405
    %987 = vmatpush.msra.mxu0 %v401
    %988 = vmatpush.msra.mxu0 %v397
    %989 = vmatpush.msra.mxu0 %v393
    %990 = vmatpush.msra.mxu0 %v389
    %991 = vmatpush.msra.mxu0 %v385
    %992 = vmatpush.msra.mxu0 %v381
    %993 = vmatpush.msra.mxu0 %v377
    %994 = vmatpush.msra.mxu0 %v373
    %995 = vmatpush.msra.mxu0 %v369
    %996 = vmatpush.msra.mxu0 %v365
    %997 = vmatpush.msra.mxu0 %v361
    %998 = vmatmul.f32.gmra.mxu0 %v880
    %v999 = vpop.f32.mrf.mxu0
    %v1000 = vadd.f32 %v980, %v999
    %1001 = vdwg.mxu0
    %1002 = vmatpush.msra.mxu0 %v358
    %1003 = vmatpush.msra.mxu0 %v354
    %1004 = vmatpush.msra.mxu0 %v350
    %1005 = vmatpush.msra.mxu0 %v346
    %1006 = vmatpush.msra.mxu0 %v342
    %1007 = vmatpush.msra.mxu0 %v338
    %1008 = vmatpush.msra.mxu0 %v334
    %1009 = vmatpush.msra.mxu0 %v330
    %1010 = vmatpush.msra.mxu0 %v326
    %1011 = vmatpush.msra.mxu0 %v322
    %1012 = vmatpush.msra.mxu0 %v318
    %1013 = vmatpush.msra.mxu0 %v314
    %1014 = vmatpush.msra.mxu0 %v310
    %1015 = vmatpush.msra.mxu0 %v306
    %1016 = vmatpush.msra.mxu0 %v302
    %1017 = vmatpush.msra.mxu0 %v298
    %1018 = vmatmul.f32.gmra.mxu0 %v881
    %v1019 = vpop.f32.mrf.mxu0
    %v1020 = vadd.f32 %v429, %v1019
    %1021 = vdwg.mxu0
    %1022 = vmatpush.msra.mxu0 %v422
    %1023 = vmatpush.msra.mxu0 %v418
    %1024 = vmatpush.msra.mxu0 %v414
    %1025 = vmatpush.msra.mxu0 %v410
    %1026 = vmatpush.msra.mxu0 %v406
    %1027 = vmatpush.msra.mxu0 %v402
    %1028 = vmatpush.msra.mxu0 %v398
    %1029 = vmatpush.msra.mxu0 %v394
    %1030 = vmatpush.msra.mxu0 %v390
    %1031 = vmatpush.msra.mxu0 %v386
    %1032 = vmatpush.msra.mxu0 %v382
    %1033 = vmatpush.msra.mxu0 %v378
    %1034 = vmatpush.msra.mxu0 %v374
    %1035 = vmatpush.msra.mxu0 %v370
    %1036 = vmatpush.msra.mxu0 %v366
    %1037 = vmatpush.msra.mxu0 %v362
    %1038 = vmatmul.f32.gmra.mxu0 %v880
    %v1039 = vpop.f32.mrf.mxu0
    %v1040 = vadd.f32 %v1020, %v1039
    %1041 = vdwg.mxu0
    %v1042 = vxor.u32 %v920, 2147483648
    %v1043 = vmul.f32 %v1042, 1.442695
    %v1044 = vpow.pop %v1043
    %v1045 = vadd.f32 %v1044, 1.0
    %v1046 = vrcp.pop %v1045
    %v1047 = vmul.f32 %v1045, %v1046
    %v1048 = vsub.f32 1.0, %v1047
    %v1049 = vmul.f32 %v1046, %v1048
    %v1050 = vadd.f32 %v1046, %v1049
    %vm1051 = vweird.f32 %v1045
    %vm1052 = vweird.f32 %v1046
    %vm1053 = vmor %vm1051, %vm1052
    %v1054 = vsel %vm1053, %v1046, %v1050
    %v1055 = vand.u32 2147483647, %v1045
    %vm1056 = vcmp.eq.f32.partialorder %v1055, 8.507059e+37
    %v1057 = vand.u32 %v1045, 2147483648
    %v1058 = vor.u32 1.1754944e-38, %v1057
    %v1059 = vsel %vm1056, %v1058, %v1054
    %v1060 = vmul.f32 1.0, %v1059
    %v1061 = vxor.u32 %v960, 2147483648
    %v1062 = vmul.f32 %v1061, 1.442695
    %v1063 = vpow.pop %v1062
    %v1064 = vadd.f32 %v1063, 1.0
    %v1065 = vrcp.pop %v1064
    %v1066 = vmul.f32 %v1064, %v1065
    %v1067 = vsub.f32 1.0, %v1066
    %v1068 = vmul.f32 %v1065, %v1067
    %v1069 = vadd.f32 %v1065, %v1068
    %vm1070 = vweird.f32 %v1064
    %vm1071 = vweird.f32 %v1065
    %vm1072 = vmor %vm1070, %vm1071
    %v1073 = vsel %vm1072, %v1065, %v1069
    %v1074 = vand.u32 2147483647, %v1064
    %vm1075 = vcmp.eq.f32.partialorder %v1074, 8.507059e+37
    %v1076 = vand.u32 %v1064, 2147483648
    %v1077 = vor.u32 1.1754944e-38, %v1076
    %v1078 = vsel %vm1075, %v1077, %v1073
    %v1079 = vmul.f32 1.0, %v1078
    %v1080 = vtanh.pop %v1000
    %v1081 = vxor.u32 %v1040, 2147483648
    %v1082 = vmul.f32 %v1081, 1.442695
    %v1083 = vpow.pop %v1082
    %v1084 = vadd.f32 %v1083, 1.0
    %v1085 = vrcp.pop %v1084
    %v1086 = vmul.f32 %v1084, %v1085
    %v1087 = vsub.f32 1.0, %v1086
    %v1088 = vmul.f32 %v1085, %v1087
    %v1089 = vadd.f32 %v1085, %v1088
    %vm1090 = vweird.f32 %v1084
    %vm1091 = vweird.f32 %v1085
    %vm1092 = vmor %vm1090, %vm1091
    %v1093 = vsel %vm1092, %v1085, %v1089
    %v1094 = vand.u32 2147483647, %v1084
    %vm1095 = vcmp.eq.f32.partialorder %v1094, 8.507059e+37
    %v1096 = vand.u32 %v1084, 2147483648
    %v1097 = vor.u32 1.1754944e-38, %v1096
    %v1098 = vsel %vm1095, %v1097, %v1093
    %v1099 = vmul.f32 1.0, %v1098
    %v1100 = vmul.f32 %v1079, %v878
    %v1101 = vmul.f32 %v1060, %v1080
    %v1102 = vadd.f32 %v1100, %v1101
    %v1103 = vtanh.pop %v1102
    %v1104 = vmul.f32 %v1099, %v1103
    %v1105 = vld [vmem:[#allocation2 + $0x3] sm:$0x1]
    %1106 = vmatpush.msra.mxu0 %v355
    %1107 = vmatpush.msra.mxu0 %v351
    %1108 = vmatpush.msra.mxu0 %v347
    %1109 = vmatpush.msra.mxu0 %v343
    %1110 = vmatpush.msra.mxu0 %v339
    %1111 = vmatpush.msra.mxu0 %v335
    %1112 = vmatpush.msra.mxu0 %v331
    %1113 = vmatpush.msra.mxu0 %v327
    %1114 = vmatpush.msra.mxu0 %v323
    %1115 = vmatpush.msra.mxu0 %v319
    %1116 = vmatpush.msra.mxu0 %v315
    %1117 = vmatpush.msra.mxu0 %v311
    %1118 = vmatpush.msra.mxu0 %v307
    %1119 = vmatpush.msra.mxu0 %v303
    %1120 = vmatpush.msra.mxu0 %v299
    %1121 = vmatpush.msra.mxu0 %v295
    %1122 = vmatmul.f32.gmra.mxu0 %v1105
    %v1123 = vpop.f32.mrf.mxu0
    %v1124 = vadd.f32 %v426, %v1123
    %1125 = vdwg.mxu0
    %1126 = vmatpush.msra.mxu0 %v419
    %1127 = vmatpush.msra.mxu0 %v415
    %1128 = vmatpush.msra.mxu0 %v411
    %1129 = vmatpush.msra.mxu0 %v407
    %1130 = vmatpush.msra.mxu0 %v403
    %1131 = vmatpush.msra.mxu0 %v399
    %1132 = vmatpush.msra.mxu0 %v395
    %1133 = vmatpush.msra.mxu0 %v391
    %1134 = vmatpush.msra.mxu0 %v387
    %1135 = vmatpush.msra.mxu0 %v383
    %1136 = vmatpush.msra.mxu0 %v379
    %1137 = vmatpush.msra.mxu0 %v375
    %1138 = vmatpush.msra.mxu0 %v371
    %1139 = vmatpush.msra.mxu0 %v367
    %1140 = vmatpush.msra.mxu0 %v363
    %1141 = vmatpush.msra.mxu0 %v359
    %1142 = vmatmul.f32.gmra.mxu0 %v1104
    %v1143 = vpop.f32.mrf.mxu0
    %v1144 = vadd.f32 %v1124, %v1143
    %1145 = vdwg.mxu0
    %1146 = vmatpush.msra.mxu0 %v356
    %1147 = vmatpush.msra.mxu0 %v352
    %1148 = vmatpush.msra.mxu0 %v348
    %1149 = vmatpush.msra.mxu0 %v344
    %1150 = vmatpush.msra.mxu0 %v340
    %1151 = vmatpush.msra.mxu0 %v336
    %1152 = vmatpush.msra.mxu0 %v332
    %1153 = vmatpush.msra.mxu0 %v328
    %1154 = vmatpush.msra.mxu0 %v324
    %1155 = vmatpush.msra.mxu0 %v320
    %1156 = vmatpush.msra.mxu0 %v316
    %1157 = vmatpush.msra.mxu0 %v312
    %1158 = vmatpush.msra.mxu0 %v308
    %1159 = vmatpush.msra.mxu0 %v304
    %1160 = vmatpush.msra.mxu0 %v300
    %1161 = vmatpush.msra.mxu0 %v296
    %1162 = vmatmul.f32.gmra.mxu0 %v1105
    %v1163 = vpop.f32.mrf.mxu0
    %v1164 = vadd.f32 %v427, %v1163
    %1165 = vdwg.mxu0
    %1166 = vmatpush.msra.mxu0 %v420
    %1167 = vmatpush.msra.mxu0 %v416
    %1168 = vmatpush.msra.mxu0 %v412
    %1169 = vmatpush.msra.mxu0 %v408
    %1170 = vmatpush.msra.mxu0 %v404
    %1171 = vmatpush.msra.mxu0 %v400
    %1172 = vmatpush.msra.mxu0 %v396
    %1173 = vmatpush.msra.mxu0 %v392
    %1174 = vmatpush.msra.mxu0 %v388
    %1175 = vmatpush.msra.mxu0 %v384
    %1176 = vmatpush.msra.mxu0 %v380
    %1177 = vmatpush.msra.mxu0 %v376
    %1178 = vmatpush.msra.mxu0 %v372
    %1179 = vmatpush.msra.mxu0 %v368
    %1180 = vmatpush.msra.mxu0 %v364
    %1181 = vmatpush.msra.mxu0 %v360
    %1182 = vmatmul.f32.gmra.mxu0 %v1104
    %v1183 = vpop.f32.mrf.mxu0
    %v1184 = vadd.f32 %v1164, %v1183
    %1185 = vdwg.mxu0
    %1186 = vmatpush.msra.mxu0 %v357
    %1187 = vmatpush.msra.mxu0 %v353
    %1188 = vmatpush.msra.mxu0 %v349
    %1189 = vmatpush.msra.mxu0 %v345
    %1190 = vmatpush.msra.mxu0 %v341
    %1191 = vmatpush.msra.mxu0 %v337
    %1192 = vmatpush.msra.mxu0 %v333
    %1193 = vmatpush.msra.mxu0 %v329
    %1194 = vmatpush.msra.mxu0 %v325
    %1195 = vmatpush.msra.mxu0 %v321
    %1196 = vmatpush.msra.mxu0 %v317
    %1197 = vmatpush.msra.mxu0 %v313
    %1198 = vmatpush.msra.mxu0 %v309
    %1199 = vmatpush.msra.mxu0 %v305
    %1200 = vmatpush.msra.mxu0 %v301
    %1201 = vmatpush.msra.mxu0 %v297
    %1202 = vmatmul.f32.gmra.mxu0 %v1105
    %v1203 = vpop.f32.mrf.mxu0
    %v1204 = vadd.f32 %v428, %v1203
    %1205 = vdwg.mxu0
    %1206 = vmatpush.msra.mxu0 %v421
    %1207 = vmatpush.msra.mxu0 %v417
    %1208 = vmatpush.msra.mxu0 %v413
    %1209 = vmatpush.msra.mxu0 %v409
    %1210 = vmatpush.msra.mxu0 %v405
    %1211 = vmatpush.msra.mxu0 %v401
    %1212 = vmatpush.msra.mxu0 %v397
    %1213 = vmatpush.msra.mxu0 %v393
    %1214 = vmatpush.msra.mxu0 %v389
    %1215 = vmatpush.msra.mxu0 %v385
    %1216 = vmatpush.msra.mxu0 %v381
    %1217 = vmatpush.msra.mxu0 %v377
    %1218 = vmatpush.msra.mxu0 %v373
    %1219 = vmatpush.msra.mxu0 %v369
    %1220 = vmatpush.msra.mxu0 %v365
    %1221 = vmatpush.msra.mxu0 %v361
    %1222 = vmatmul.f32.gmra.mxu0 %v1104
    %v1223 = vpop.f32.mrf.mxu0
    %v1224 = vadd.f32 %v1204, %v1223
    %1225 = vdwg.mxu0
    %1226 = vmatpush.msra.mxu0 %v358
    %1227 = vmatpush.msra.mxu0 %v354
    %1228 = vmatpush.msra.mxu0 %v350
    %1229 = vmatpush.msra.mxu0 %v346
    %1230 = vmatpush.msra.mxu0 %v342
    %1231 = vmatpush.msra.mxu0 %v338
    %1232 = vmatpush.msra.mxu0 %v334
    %1233 = vmatpush.msra.mxu0 %v330
    %1234 = vmatpush.msra.mxu0 %v326
    %1235 = vmatpush.msra.mxu0 %v322
    %1236 = vmatpush.msra.mxu0 %v318
    %1237 = vmatpush.msra.mxu0 %v314
    %1238 = vmatpush.msra.mxu0 %v310
    %1239 = vmatpush.msra.mxu0 %v306
    %1240 = vmatpush.msra.mxu0 %v302
    %1241 = vmatpush.msra.mxu0 %v298
    %1242 = vmatmul.f32.gmra.mxu0 %v1105
    %v1243 = vpop.f32.mrf.mxu0
    %v1244 = vadd.f32 %v429, %v1243
    %1245 = vdwg.mxu0
    %1246 = vmatpush.msra.mxu0 %v422
    %1247 = vmatpush.msra.mxu0 %v418
    %1248 = vmatpush.msra.mxu0 %v414
    %1249 = vmatpush.msra.mxu0 %v410
    %1250 = vmatpush.msra.mxu0 %v406
    %1251 = vmatpush.msra.mxu0 %v402
    %1252 = vmatpush.msra.mxu0 %v398
    %1253 = vmatpush.msra.mxu0 %v394
    %1254 = vmatpush.msra.mxu0 %v390
    %1255 = vmatpush.msra.mxu0 %v386
    %1256 = vmatpush.msra.mxu0 %v382
    %1257 = vmatpush.msra.mxu0 %v378
    %1258 = vmatpush.msra.mxu0 %v374
    %1259 = vmatpush.msra.mxu0 %v370
    %1260 = vmatpush.msra.mxu0 %v366
    %1261 = vmatpush.msra.mxu0 %v362
    %1262 = vmatmul.f32.gmra.mxu0 %v1104
    %v1263 = vpop.f32.mrf.mxu0
    %v1264 = vadd.f32 %v1244, %v1263
    %1265 = vdwg.mxu0
    %v1266 = vxor.u32 %v1144, 2147483648
    %v1267 = vmul.f32 %v1266, 1.442695
    %v1268 = vpow.pop %v1267
    %v1269 = vadd.f32 %v1268, 1.0
    %v1270 = vrcp.pop %v1269
    %v1271 = vmul.f32 %v1269, %v1270
    %v1272 = vsub.f32 1.0, %v1271
    %v1273 = vmul.f32 %v1270, %v1272
    %v1274 = vadd.f32 %v1270, %v1273
    %vm1275 = vweird.f32 %v1269
    %vm1276 = vweird.f32 %v1270
    %vm1277 = vmor %vm1275, %vm1276
    %v1278 = vsel %vm1277, %v1270, %v1274
    %v1279 = vand.u32 2147483647, %v1269
    %vm1280 = vcmp.eq.f32.partialorder %v1279, 8.507059e+37
    %v1281 = vand.u32 %v1269, 2147483648
    %v1282 = vor.u32 1.1754944e-38, %v1281
    %v1283 = vsel %vm1280, %v1282, %v1278
    %v1284 = vmul.f32 1.0, %v1283
    %v1285 = vxor.u32 %v1184, 2147483648
    %v1286 = vmul.f32 %v1285, 1.442695
    %v1287 = vpow.pop %v1286
    %v1288 = vadd.f32 %v1287, 1.0
    %v1289 = vrcp.pop %v1288
    %v1290 = vmul.f32 %v1288, %v1289
    %v1291 = vsub.f32 1.0, %v1290
    %v1292 = vmul.f32 %v1289, %v1291
    %v1293 = vadd.f32 %v1289, %v1292
    %vm1294 = vweird.f32 %v1288
    %vm1295 = vweird.f32 %v1289
    %vm1296 = vmor %vm1294, %vm1295
    %v1297 = vsel %vm1296, %v1289, %v1293
    %v1298 = vand.u32 2147483647, %v1288
    %vm1299 = vcmp.eq.f32.partialorder %v1298, 8.507059e+37
    %v1300 = vand.u32 %v1288, 2147483648
    %v1301 = vor.u32 1.1754944e-38, %v1300
    %v1302 = vsel %vm1299, %v1301, %v1297
    %v1303 = vmul.f32 1.0, %v1302
    %v1304 = vtanh.pop %v1224
    %v1305 = vxor.u32 %v1264, 2147483648
    %v1306 = vmul.f32 %v1305, 1.442695
    %v1307 = vpow.pop %v1306
    %v1308 = vadd.f32 %v1307, 1.0
    %v1309 = vrcp.pop %v1308
    %v1310 = vmul.f32 %v1308, %v1309
    %v1311 = vsub.f32 1.0, %v1310
    %v1312 = vmul.f32 %v1309, %v1311
    %v1313 = vadd.f32 %v1309, %v1312
    %vm1314 = vweird.f32 %v1308
    %vm1315 = vweird.f32 %v1309
    %vm1316 = vmor %vm1314, %vm1315
    %v1317 = vsel %vm1316, %v1309, %v1313
    %v1318 = vand.u32 2147483647, %v1308
    %vm1319 = vcmp.eq.f32.partialorder %v1318, 8.507059e+37
    %v1320 = vand.u32 %v1308, 2147483648
    %v1321 = vor.u32 1.1754944e-38, %v1320
    %v1322 = vsel %vm1319, %v1321, %v1317
    %v1323 = vmul.f32 1.0, %v1322
    %v1324 = vmul.f32 %v1303, %v1102
    %v1325 = vmul.f32 %v1284, %v1304
    %v1326 = vadd.f32 %v1324, %v1325
    %v1327 = vtanh.pop %v1326
    %v1328 = vmul.f32 %v1323, %v1327
    %v1329 = vld [vmem:[#allocation2 + $0x4] sm:$0x1]
    %1330 = vmatpush.msra.mxu0 %v355
    %1331 = vmatpush.msra.mxu0 %v351
    %1332 = vmatpush.msra.mxu0 %v347
    %1333 = vmatpush.msra.mxu0 %v343
    %1334 = vmatpush.msra.mxu0 %v339
    %1335 = vmatpush.msra.mxu0 %v335
    %1336 = vmatpush.msra.mxu0 %v331
    %1337 = vmatpush.msra.mxu0 %v327
    %1338 = vmatpush.msra.mxu0 %v323
    %1339 = vmatpush.msra.mxu0 %v319
    %1340 = vmatpush.msra.mxu0 %v315
    %1341 = vmatpush.msra.mxu0 %v311
    %1342 = vmatpush.msra.mxu0 %v307
    %1343 = vmatpush.msra.mxu0 %v303
    %1344 = vmatpush.msra.mxu0 %v299
    %1345 = vmatpush.msra.mxu0 %v295
    %1346 = vmatmul.f32.gmra.mxu0 %v1329
    %v1347 = vpop.f32.mrf.mxu0
    %v1348 = vadd.f32 %v426, %v1347
    %1349 = vdwg.mxu0
    %1350 = vmatpush.msra.mxu0 %v419
    %1351 = vmatpush.msra.mxu0 %v415
    %1352 = vmatpush.msra.mxu0 %v411
    %1353 = vmatpush.msra.mxu0 %v407
    %1354 = vmatpush.msra.mxu0 %v403
    %1355 = vmatpush.msra.mxu0 %v399
    %1356 = vmatpush.msra.mxu0 %v395
    %1357 = vmatpush.msra.mxu0 %v391
    %1358 = vmatpush.msra.mxu0 %v387
    %1359 = vmatpush.msra.mxu0 %v383
    %1360 = vmatpush.msra.mxu0 %v379
    %1361 = vmatpush.msra.mxu0 %v375
    %1362 = vmatpush.msra.mxu0 %v371
    %1363 = vmatpush.msra.mxu0 %v367
    %1364 = vmatpush.msra.mxu0 %v363
    %1365 = vmatpush.msra.mxu0 %v359
    %1366 = vmatmul.f32.gmra.mxu0 %v1328
    %v1367 = vpop.f32.mrf.mxu0
    %v1368 = vadd.f32 %v1348, %v1367
    %1369 = vdwg.mxu0
    %1370 = vmatpush.msra.mxu0 %v356
    %1371 = vmatpush.msra.mxu0 %v352
    %1372 = vmatpush.msra.mxu0 %v348
    %1373 = vmatpush.msra.mxu0 %v344
    %1374 = vmatpush.msra.mxu0 %v340
    %1375 = vmatpush.msra.mxu0 %v336
    %1376 = vmatpush.msra.mxu0 %v332
    %1377 = vmatpush.msra.mxu0 %v328
    %1378 = vmatpush.msra.mxu0 %v324
    %1379 = vmatpush.msra.mxu0 %v320
    %1380 = vmatpush.msra.mxu0 %v316
    %1381 = vmatpush.msra.mxu0 %v312
    %1382 = vmatpush.msra.mxu0 %v308
    %1383 = vmatpush.msra.mxu0 %v304
    %1384 = vmatpush.msra.mxu0 %v300
    %1385 = vmatpush.msra.mxu0 %v296
    %1386 = vmatmul.f32.gmra.mxu0 %v1329
    %v1387 = vpop.f32.mrf.mxu0
    %v1388 = vadd.f32 %v427, %v1387
    %1389 = vdwg.mxu0
    %1390 = vmatpush.msra.mxu0 %v420
    %1391 = vmatpush.msra.mxu0 %v416
    %1392 = vmatpush.msra.mxu0 %v412
    %1393 = vmatpush.msra.mxu0 %v408
    %1394 = vmatpush.msra.mxu0 %v404
    %1395 = vmatpush.msra.mxu0 %v400
    %1396 = vmatpush.msra.mxu0 %v396
    %1397 = vmatpush.msra.mxu0 %v392
    %1398 = vmatpush.msra.mxu0 %v388
    %1399 = vmatpush.msra.mxu0 %v384
    %1400 = vmatpush.msra.mxu0 %v380
    %1401 = vmatpush.msra.mxu0 %v376
    %1402 = vmatpush.msra.mxu0 %v372
    %1403 = vmatpush.msra.mxu0 %v368
    %1404 = vmatpush.msra.mxu0 %v364
    %1405 = vmatpush.msra.mxu0 %v360
    %1406 = vmatmul.f32.gmra.mxu0 %v1328
    %v1407 = vpop.f32.mrf.mxu0
    %v1408 = vadd.f32 %v1388, %v1407
    %1409 = vdwg.mxu0
    %1410 = vmatpush.msra.mxu0 %v357
    %1411 = vmatpush.msra.mxu0 %v353
    %1412 = vmatpush.msra.mxu0 %v349
    %1413 = vmatpush.msra.mxu0 %v345
    %1414 = vmatpush.msra.mxu0 %v341
    %1415 = vmatpush.msra.mxu0 %v337
    %1416 = vmatpush.msra.mxu0 %v333
    %1417 = vmatpush.msra.mxu0 %v329
    %1418 = vmatpush.msra.mxu0 %v325
    %1419 = vmatpush.msra.mxu0 %v321
    %1420 = vmatpush.msra.mxu0 %v317
    %1421 = vmatpush.msra.mxu0 %v313
    %1422 = vmatpush.msra.mxu0 %v309
    %1423 = vmatpush.msra.mxu0 %v305
    %1424 = vmatpush.msra.mxu0 %v301
    %1425 = vmatpush.msra.mxu0 %v297
    %1426 = vmatmul.f32.gmra.mxu0 %v1329
    %v1427 = vpop.f32.mrf.mxu0
    %v1428 = vadd.f32 %v428, %v1427
    %1429 = vdwg.mxu0
    %1430 = vmatpush.msra.mxu0 %v421
    %1431 = vmatpush.msra.mxu0 %v417
    %1432 = vmatpush.msra.mxu0 %v413
    %1433 = vmatpush.msra.mxu0 %v409
    %1434 = vmatpush.msra.mxu0 %v405
    %1435 = vmatpush.msra.mxu0 %v401
    %1436 = vmatpush.msra.mxu0 %v397
    %1437 = vmatpush.msra.mxu0 %v393
    %1438 = vmatpush.msra.mxu0 %v389
    %1439 = vmatpush.msra.mxu0 %v385
    %1440 = vmatpush.msra.mxu0 %v381
    %1441 = vmatpush.msra.mxu0 %v377
    %1442 = vmatpush.msra.mxu0 %v373
    %1443 = vmatpush.msra.mxu0 %v369
    %1444 = vmatpush.msra.mxu0 %v365
    %1445 = vmatpush.msra.mxu0 %v361
    %1446 = vmatmul.f32.gmra.mxu0 %v1328
    %v1447 = vpop.f32.mrf.mxu0
    %v1448 = vadd.f32 %v1428, %v1447
    %1449 = vdwg.mxu0
    %1450 = vmatpush.msra.mxu0 %v358
    %1451 = vmatpush.msra.mxu0 %v354
    %1452 = vmatpush.msra.mxu0 %v350
    %1453 = vmatpush.msra.mxu0 %v346
    %1454 = vmatpush.msra.mxu0 %v342
    %1455 = vmatpush.msra.mxu0 %v338
    %1456 = vmatpush.msra.mxu0 %v334
    %1457 = vmatpush.msra.mxu0 %v330
    %1458 = vmatpush.msra.mxu0 %v326
    %1459 = vmatpush.msra.mxu0 %v322
    %1460 = vmatpush.msra.mxu0 %v318
    %1461 = vmatpush.msra.mxu0 %v314
    %1462 = vmatpush.msra.mxu0 %v310
    %1463 = vmatpush.msra.mxu0 %v306
    %1464 = vmatpush.msra.mxu0 %v302
    %1465 = vmatpush.msra.mxu0 %v298
    %1466 = vmatmul.f32.gmra.mxu0 %v1329
    %v1467 = vpop.f32.mrf.mxu0
    %v1468 = vadd.f32 %v429, %v1467
    %1469 = vdwg.mxu0
    %1470 = vmatpush.msra.mxu0 %v422
    %1471 = vmatpush.msra.mxu0 %v418
    %1472 = vmatpush.msra.mxu0 %v414
    %1473 = vmatpush.msra.mxu0 %v410
    %1474 = vmatpush.msra.mxu0 %v406
    %1475 = vmatpush.msra.mxu0 %v402
    %1476 = vmatpush.msra.mxu0 %v398
    %1477 = vmatpush.msra.mxu0 %v394
    %1478 = vmatpush.msra.mxu0 %v390
    %1479 = vmatpush.msra.mxu0 %v386
    %1480 = vmatpush.msra.mxu0 %v382
    %1481 = vmatpush.msra.mxu0 %v378
    %1482 = vmatpush.msra.mxu0 %v374
    %1483 = vmatpush.msra.mxu0 %v370
    %1484 = vmatpush.msra.mxu0 %v366
    %1485 = vmatpush.msra.mxu0 %v362
    %1486 = vmatmul.f32.gmra.mxu0 %v1328
    %v1487 = vpop.f32.mrf.mxu0
    %v1488 = vadd.f32 %v1468, %v1487
    %1489 = vdwg.mxu0
    %v1490 = vxor.u32 %v1368, 2147483648
    %v1491 = vmul.f32 %v1490, 1.442695
    %v1492 = vpow.pop %v1491
    %v1493 = vadd.f32 %v1492, 1.0
    %v1494 = vrcp.pop %v1493
    %v1495 = vmul.f32 %v1493, %v1494
    %v1496 = vsub.f32 1.0, %v1495
    %v1497 = vmul.f32 %v1494, %v1496
    %v1498 = vadd.f32 %v1494, %v1497
    %vm1499 = vweird.f32 %v1493
    %vm1500 = vweird.f32 %v1494
    %vm1501 = vmor %vm1499, %vm1500
    %v1502 = vsel %vm1501, %v1494, %v1498
    %v1503 = vand.u32 2147483647, %v1493
    %vm1504 = vcmp.eq.f32.partialorder %v1503, 8.507059e+37
    %v1505 = vand.u32 %v1493, 2147483648
    %v1506 = vor.u32 1.1754944e-38, %v1505
    %v1507 = vsel %vm1504, %v1506, %v1502
    %v1508 = vmul.f32 1.0, %v1507
    %v1509 = vxor.u32 %v1408, 2147483648
    %v1510 = vmul.f32 %v1509, 1.442695
    %v1511 = vpow.pop %v1510
    %v1512 = vadd.f32 %v1511, 1.0
    %v1513 = vrcp.pop %v1512
    %v1514 = vmul.f32 %v1512, %v1513
    %v1515 = vsub.f32 1.0, %v1514
    %v1516 = vmul.f32 %v1513, %v1515
    %v1517 = vadd.f32 %v1513, %v1516
    %vm1518 = vweird.f32 %v1512
    %vm1519 = vweird.f32 %v1513
    %vm1520 = vmor %vm1518, %vm1519
    %v1521 = vsel %vm1520, %v1513, %v1517
    %v1522 = vand.u32 2147483647, %v1512
    %vm1523 = vcmp.eq.f32.partialorder %v1522, 8.507059e+37
    %v1524 = vand.u32 %v1512, 2147483648
    %v1525 = vor.u32 1.1754944e-38, %v1524
    %v1526 = vsel %vm1523, %v1525, %v1521
    %v1527 = vmul.f32 1.0, %v1526
    %v1528 = vtanh.pop %v1448
    %v1529 = vxor.u32 %v1488, 2147483648
    %v1530 = vmul.f32 %v1529, 1.442695
    %v1531 = vpow.pop %v1530
    %v1532 = vadd.f32 %v1531, 1.0
    %v1533 = vrcp.pop %v1532
    %v1534 = vmul.f32 %v1532, %v1533
    %v1535 = vsub.f32 1.0, %v1534
    %v1536 = vmul.f32 %v1533, %v1535
    %v1537 = vadd.f32 %v1533, %v1536
    %vm1538 = vweird.f32 %v1532
    %vm1539 = vweird.f32 %v1533
    %vm1540 = vmor %vm1538, %vm1539
    %v1541 = vsel %vm1540, %v1533, %v1537
    %v1542 = vand.u32 2147483647, %v1532
    %vm1543 = vcmp.eq.f32.partialorder %v1542, 8.507059e+37
    %v1544 = vand.u32 %v1532, 2147483648
    %v1545 = vor.u32 1.1754944e-38, %v1544
    %v1546 = vsel %vm1543, %v1545, %v1541
    %v1547 = vmul.f32 1.0, %v1546
    %v1548 = vmul.f32 %v1527, %v1326
    %v1549 = vmul.f32 %v1508, %v1528
    %v1550 = vadd.f32 %v1548, %v1549
    %v1551 = vtanh.pop %v1550
    %v1552 = vmul.f32 %v1547, %v1551
    %v1553 = vld [vmem:[#allocation2 + $0x5] sm:$0x1]
    %1554 = vmatpush.msra.mxu0 %v355
    %1555 = vmatpush.msra.mxu0 %v351
    %1556 = vmatpush.msra.mxu0 %v347
    %1557 = vmatpush.msra.mxu0 %v343
    %1558 = vmatpush.msra.mxu0 %v339
    %1559 = vmatpush.msra.mxu0 %v335
    %1560 = vmatpush.msra.mxu0 %v331
    %1561 = vmatpush.msra.mxu0 %v327
    %1562 = vmatpush.msra.mxu0 %v323
    %1563 = vmatpush.msra.mxu0 %v319
    %1564 = vmatpush.msra.mxu0 %v315
    %1565 = vmatpush.msra.mxu0 %v311
    %1566 = vmatpush.msra.mxu0 %v307
    %1567 = vmatpush.msra.mxu0 %v303
    %1568 = vmatpush.msra.mxu0 %v299
    %1569 = vmatpush.msra.mxu0 %v295
    %1570 = vmatmul.f32.gmra.mxu0 %v1553
    %v1571 = vpop.f32.mrf.mxu0
    %v1572 = vadd.f32 %v426, %v1571
    %1573 = vdwg.mxu0
    %1574 = vmatpush.msra.mxu0 %v419
    %1575 = vmatpush.msra.mxu0 %v415
    %1576 = vmatpush.msra.mxu0 %v411
    %1577 = vmatpush.msra.mxu0 %v407
    %1578 = vmatpush.msra.mxu0 %v403
    %1579 = vmatpush.msra.mxu0 %v399
    %1580 = vmatpush.msra.mxu0 %v395
    %1581 = vmatpush.msra.mxu0 %v391
    %1582 = vmatpush.msra.mxu0 %v387
    %1583 = vmatpush.msra.mxu0 %v383
    %1584 = vmatpush.msra.mxu0 %v379
    %1585 = vmatpush.msra.mxu0 %v375
    %1586 = vmatpush.msra.mxu0 %v371
    %1587 = vmatpush.msra.mxu0 %v367
    %1588 = vmatpush.msra.mxu0 %v363
    %1589 = vmatpush.msra.mxu0 %v359
    %1590 = vmatmul.f32.gmra.mxu0 %v1552
    %v1591 = vpop.f32.mrf.mxu0
    %v1592 = vadd.f32 %v1572, %v1591
    %1593 = vdwg.mxu0
    %1594 = vmatpush.msra.mxu0 %v356
    %1595 = vmatpush.msra.mxu0 %v352
    %1596 = vmatpush.msra.mxu0 %v348
    %1597 = vmatpush.msra.mxu0 %v344
    %1598 = vmatpush.msra.mxu0 %v340
    %1599 = vmatpush.msra.mxu0 %v336
    %1600 = vmatpush.msra.mxu0 %v332
    %1601 = vmatpush.msra.mxu0 %v328
    %1602 = vmatpush.msra.mxu0 %v324
    %1603 = vmatpush.msra.mxu0 %v320
    %1604 = vmatpush.msra.mxu0 %v316
    %1605 = vmatpush.msra.mxu0 %v312
    %1606 = vmatpush.msra.mxu0 %v308
    %1607 = vmatpush.msra.mxu0 %v304
    %1608 = vmatpush.msra.mxu0 %v300
    %1609 = vmatpush.msra.mxu0 %v296
    %1610 = vmatmul.f32.gmra.mxu0 %v1553
    %v1611 = vpop.f32.mrf.mxu0
    %v1612 = vadd.f32 %v427, %v1611
    %1613 = vdwg.mxu0
    %1614 = vmatpush.msra.mxu0 %v420
    %1615 = vmatpush.msra.mxu0 %v416
    %1616 = vmatpush.msra.mxu0 %v412
    %1617 = vmatpush.msra.mxu0 %v408
    %1618 = vmatpush.msra.mxu0 %v404
    %1619 = vmatpush.msra.mxu0 %v400
    %1620 = vmatpush.msra.mxu0 %v396
    %1621 = vmatpush.msra.mxu0 %v392
    %1622 = vmatpush.msra.mxu0 %v388
    %1623 = vmatpush.msra.mxu0 %v384
    %1624 = vmatpush.msra.mxu0 %v380
    %1625 = vmatpush.msra.mxu0 %v376
    %1626 = vmatpush.msra.mxu0 %v372
    %1627 = vmatpush.msra.mxu0 %v368
    %1628 = vmatpush.msra.mxu0 %v364
    %1629 = vmatpush.msra.mxu0 %v360
    %1630 = vmatmul.f32.gmra.mxu0 %v1552
    %v1631 = vpop.f32.mrf.mxu0
    %v1632 = vadd.f32 %v1612, %v1631
    %1633 = vdwg.mxu0
    %1634 = vmatpush.msra.mxu0 %v357
    %1635 = vmatpush.msra.mxu0 %v353
    %1636 = vmatpush.msra.mxu0 %v349
    %1637 = vmatpush.msra.mxu0 %v345
    %1638 = vmatpush.msra.mxu0 %v341
    %1639 = vmatpush.msra.mxu0 %v337
    %1640 = vmatpush.msra.mxu0 %v333
    %1641 = vmatpush.msra.mxu0 %v329
    %1642 = vmatpush.msra.mxu0 %v325
    %1643 = vmatpush.msra.mxu0 %v321
    %1644 = vmatpush.msra.mxu0 %v317
    %1645 = vmatpush.msra.mxu0 %v313
    %1646 = vmatpush.msra.mxu0 %v309
    %1647 = vmatpush.msra.mxu0 %v305
    %1648 = vmatpush.msra.mxu0 %v301
    %1649 = vmatpush.msra.mxu0 %v297
    %1650 = vmatmul.f32.gmra.mxu0 %v1553
    %v1651 = vpop.f32.mrf.mxu0
    %v1652 = vadd.f32 %v428, %v1651
    %1653 = vdwg.mxu0
    %1654 = vmatpush.msra.mxu0 %v421
    %1655 = vmatpush.msra.mxu0 %v417
    %1656 = vmatpush.msra.mxu0 %v413
    %1657 = vmatpush.msra.mxu0 %v409
    %1658 = vmatpush.msra.mxu0 %v405
    %1659 = vmatpush.msra.mxu0 %v401
    %1660 = vmatpush.msra.mxu0 %v397
    %1661 = vmatpush.msra.mxu0 %v393
    %1662 = vmatpush.msra.mxu0 %v389
    %1663 = vmatpush.msra.mxu0 %v385
    %1664 = vmatpush.msra.mxu0 %v381
    %1665 = vmatpush.msra.mxu0 %v377
    %1666 = vmatpush.msra.mxu0 %v373
    %1667 = vmatpush.msra.mxu0 %v369
    %1668 = vmatpush.msra.mxu0 %v365
    %1669 = vmatpush.msra.mxu0 %v361
    %1670 = vmatmul.f32.gmra.mxu0 %v1552
    %v1671 = vpop.f32.mrf.mxu0
    %v1672 = vadd.f32 %v1652, %v1671
    %1673 = vdwg.mxu0
    %1674 = vmatpush.msra.mxu0 %v358
    %1675 = vmatpush.msra.mxu0 %v354
    %1676 = vmatpush.msra.mxu0 %v350
    %1677 = vmatpush.msra.mxu0 %v346
    %1678 = vmatpush.msra.mxu0 %v342
    %1679 = vmatpush.msra.mxu0 %v338
    %1680 = vmatpush.msra.mxu0 %v334
    %1681 = vmatpush.msra.mxu0 %v330
    %1682 = vmatpush.msra.mxu0 %v326
    %1683 = vmatpush.msra.mxu0 %v322
    %1684 = vmatpush.msra.mxu0 %v318
    %1685 = vmatpush.msra.mxu0 %v314
    %1686 = vmatpush.msra.mxu0 %v310
    %1687 = vmatpush.msra.mxu0 %v306
    %1688 = vmatpush.msra.mxu0 %v302
    %1689 = vmatpush.msra.mxu0 %v298
    %1690 = vmatmul.f32.gmra.mxu0 %v1553
    %v1691 = vpop.f32.mrf.mxu0
    %v1692 = vadd.f32 %v429, %v1691
    %1693 = vdwg.mxu0
    %1694 = vmatpush.msra.mxu0 %v422
    %1695 = vmatpush.msra.mxu0 %v418
    %1696 = vmatpush.msra.mxu0 %v414
    %1697 = vmatpush.msra.mxu0 %v410
    %1698 = vmatpush.msra.mxu0 %v406
    %1699 = vmatpush.msra.mxu0 %v402
    %1700 = vmatpush.msra.mxu0 %v398
    %1701 = vmatpush.msra.mxu0 %v394
    %1702 = vmatpush.msra.mxu0 %v390
    %1703 = vmatpush.msra.mxu0 %v386
    %1704 = vmatpush.msra.mxu0 %v382
    %1705 = vmatpush.msra.mxu0 %v378
    %1706 = vmatpush.msra.mxu0 %v374
    %1707 = vmatpush.msra.mxu0 %v370
    %1708 = vmatpush.msra.mxu0 %v366
    %1709 = vmatpush.msra.mxu0 %v362
    %1710 = vmatmul.f32.gmra.mxu0 %v1552
    %v1711 = vpop.f32.mrf.mxu0
    %v1712 = vadd.f32 %v1692, %v1711
    %1713 = vdwg.mxu0
    %v1714 = vxor.u32 %v1592, 2147483648
    %v1715 = vmul.f32 %v1714, 1.442695
    %v1716 = vpow.pop %v1715
    %v1717 = vadd.f32 %v1716, 1.0
    %v1718 = vrcp.pop %v1717
    %v1719 = vmul.f32 %v1717, %v1718
    %v1720 = vsub.f32 1.0, %v1719
    %v1721 = vmul.f32 %v1718, %v1720
    %v1722 = vadd.f32 %v1718, %v1721
    %vm1723 = vweird.f32 %v1717
    %vm1724 = vweird.f32 %v1718
    %vm1725 = vmor %vm1723, %vm1724
    %v1726 = vsel %vm1725, %v1718, %v1722
    %v1727 = vand.u32 2147483647, %v1717
    %vm1728 = vcmp.eq.f32.partialorder %v1727, 8.507059e+37
    %v1729 = vand.u32 %v1717, 2147483648
    %v1730 = vor.u32 1.1754944e-38, %v1729
    %v1731 = vsel %vm1728, %v1730, %v1726
    %v1732 = vmul.f32 1.0, %v1731
    %v1733 = vxor.u32 %v1632, 2147483648
    %v1734 = vmul.f32 %v1733, 1.442695
    %v1735 = vpow.pop %v1734
    %v1736 = vadd.f32 %v1735, 1.0
    %v1737 = vrcp.pop %v1736
    %v1738 = vmul.f32 %v1736, %v1737
    %v1739 = vsub.f32 1.0, %v1738
    %v1740 = vmul.f32 %v1737, %v1739
    %v1741 = vadd.f32 %v1737, %v1740
    %vm1742 = vweird.f32 %v1736
    %vm1743 = vweird.f32 %v1737
    %vm1744 = vmor %vm1742, %vm1743
    %v1745 = vsel %vm1744, %v1737, %v1741
    %v1746 = vand.u32 2147483647, %v1736
    %vm1747 = vcmp.eq.f32.partialorder %v1746, 8.507059e+37
    %v1748 = vand.u32 %v1736, 2147483648
    %v1749 = vor.u32 1.1754944e-38, %v1748
    %v1750 = vsel %vm1747, %v1749, %v1745
    %v1751 = vmul.f32 1.0, %v1750
    %v1752 = vtanh.pop %v1672
    %v1753 = vxor.u32 %v1712, 2147483648
    %v1754 = vmul.f32 %v1753, 1.442695
    %v1755 = vpow.pop %v1754
    %v1756 = vadd.f32 %v1755, 1.0
    %v1757 = vrcp.pop %v1756
    %v1758 = vmul.f32 %v1756, %v1757
    %v1759 = vsub.f32 1.0, %v1758
    %v1760 = vmul.f32 %v1757, %v1759
    %v1761 = vadd.f32 %v1757, %v1760
    %vm1762 = vweird.f32 %v1756
    %vm1763 = vweird.f32 %v1757
    %vm1764 = vmor %vm1762, %vm1763
    %v1765 = vsel %vm1764, %v1757, %v1761
    %v1766 = vand.u32 2147483647, %v1756
    %vm1767 = vcmp.eq.f32.partialorder %v1766, 8.507059e+37
    %v1768 = vand.u32 %v1756, 2147483648
    %v1769 = vor.u32 1.1754944e-38, %v1768
    %v1770 = vsel %vm1767, %v1769, %v1765
    %v1771 = vmul.f32 1.0, %v1770
    %v1772 = vmul.f32 %v1751, %v1550
    %v1773 = vmul.f32 %v1732, %v1752
    %v1774 = vadd.f32 %v1772, %v1773
    %v1775 = vtanh.pop %v1774
    %v1776 = vmul.f32 %v1771, %v1775
    %v1777 = vld [vmem:[#allocation13] sm:$0xff]
    %v1778 = vld [vmem:[#allocation13 + $0x8] sm:$0xff]
    %v1779 = vld [vmem:[#allocation13 + $0x10] sm:$0xff]
    %v1780 = vld [vmem:[#allocation13 + $0x18] sm:$0xff]
    %v1781 = vld [vmem:[#allocation13 + $0x20] sm:$0xff]
    %v1782 = vld [vmem:[#allocation13 + $0x28] sm:$0xff]
    %v1783 = vld [vmem:[#allocation13 + $0x30] sm:$0xff]
    %v1784 = vld [vmem:[#allocation13 + $0x38] sm:$0xff]
    %v1785 = vld [vmem:[#allocation13 + $0x40] sm:$0xff]
    %v1786 = vld [vmem:[#allocation13 + $0x48] sm:$0xff]
    %v1787 = vld [vmem:[#allocation13 + $0x50] sm:$0xff]
    %v1788 = vld [vmem:[#allocation13 + $0x58] sm:$0xff]
    %v1789 = vld [vmem:[#allocation13 + $0x60] sm:$0xff]
    %v1790 = vld [vmem:[#allocation13 + $0x68] sm:$0xff]
    %v1791 = vld [vmem:[#allocation13 + $0x70] sm:$0xff]
    %v1792 = vld [vmem:[#allocation13 + $0x78] sm:$0xff]
    %v1793 = vld [vmem:[#allocation14] sm:$0x1]
    %1794 = vmatpush.msra.mxu0 %v1792
    %1795 = vmatpush.msra.mxu0 %v1791
    %1796 = vmatpush.msra.mxu0 %v1790
    %1797 = vmatpush.msra.mxu0 %v1789
    %1798 = vmatpush.msra.mxu0 %v1788
    %1799 = vmatpush.msra.mxu0 %v1787
    %1800 = vmatpush.msra.mxu0 %v1786
    %1801 = vmatpush.msra.mxu0 %v1785
    %1802 = vmatpush.msra.mxu0 %v1784
    %1803 = vmatpush.msra.mxu0 %v1783
    %1804 = vmatpush.msra.mxu0 %v1782
    %1805 = vmatpush.msra.mxu0 %v1781
    %1806 = vmatpush.msra.mxu0 %v1780
    %1807 = vmatpush.msra.mxu0 %v1779
    %1808 = vmatpush.msra.mxu0 %v1778
    %1809 = vmatpush.msra.mxu0 %v1777
    %1810 = vmatmul.f32.gmra.mxu0 %v1776
    %v1811 = vpop.f32.mrf.mxu0
    %v1812 = vadd.f32 %v1793, %v1811
    %1813 = vdwg.mxu0
    %v1814 = vld [vmem:[#allocation16] sm:$0xff]
    %v1815 = vld [vmem:[#allocation16 + $0x8] sm:$0xff]
    %v1816 = vld [vmem:[#allocation16 + $0x10] sm:$0xff]
    %v1817 = vld [vmem:[#allocation16 + $0x18] sm:$0xff]
    %v1818 = vld [vmem:[#allocation16 + $0x20] sm:$0xff]
    %v1819 = vld [vmem:[#allocation16 + $0x28] sm:$0xff]
    %v1820 = vld [vmem:[#allocation16 + $0x30] sm:$0xff]
    %v1821 = vld [vmem:[#allocation16 + $0x38] sm:$0xff]
    %v1822 = vld [vmem:[#allocation16 + $0x40] sm:$0xff]
    %v1823 = vld [vmem:[#allocation16 + $0x48] sm:$0xff]
    %v1824 = vld [vmem:[#allocation16 + $0x50] sm:$0xff]
    %v1825 = vld [vmem:[#allocation16 + $0x58] sm:$0xff]
    %v1826 = vld [vmem:[#allocation16 + $0x60] sm:$0xff]
    %v1827 = vld [vmem:[#allocation16 + $0x68] sm:$0xff]
    %v1828 = vld [vmem:[#allocation16 + $0x70] sm:$0xff]
    %v1829 = vld [vmem:[#allocation16 + $0x78] sm:$0xff]
    %v1830 = vld [vmem:[%s10] sm:$0x1]
    %1831 = vmatpush.msra.mxu0 %v1829
    %1832 = vmatpush.msra.mxu0 %v1828
    %1833 = vmatpush.msra.mxu0 %v1827
    %1834 = vmatpush.msra.mxu0 %v1826
    %1835 = vmatpush.msra.mxu0 %v1825
    %1836 = vmatpush.msra.mxu0 %v1824
    %1837 = vmatpush.msra.mxu0 %v1823
    %1838 = vmatpush.msra.mxu0 %v1822
    %1839 = vmatpush.msra.mxu0 %v1821
    %1840 = vmatpush.msra.mxu0 %v1820
    %1841 = vmatpush.msra.mxu0 %v1819
    %1842 = vmatpush.msra.mxu0 %v1818
    %1843 = vmatpush.msra.mxu0 %v1817
    %1844 = vmatpush.msra.mxu0 %v1816
    %1845 = vmatpush.msra.mxu0 %v1815
    %1846 = vmatpush.msra.mxu0 %v1814
    %1847 = vmatmul.f32.gmra.mxu0 %v1776
    %v1848 = vpop.f32.mrf.mxu0
    %v1849 = vadd.f32 %v1830, %v1848
    %1850 = vdwg.mxu0
    %v1851 = vld [vmem:[#allocation10] sm:$0x1]
    %v1852 = vmul.f32 %v1849, 0.5
    %v1853 = vmul.f32 %v1852, 1.442695
    %v1854 = vpow.pop %v1853
    %v1855 = vmul.f32 %v1851, %v1854
    %v1856 = vadd.f32 %v1855, %v1812
    %v1857 = vld [vmem:[#allocation8] sm:$0x1]
    %v1858 = vld [vmem:[#allocation17] sm:$0xff]
    %v1859 = vld [vmem:[#allocation17 + $0x8] sm:$0xff]
    %v1860 = vld [vmem:[#allocation17 + $0x10] sm:$0xff]
    %v1861 = vld [vmem:[#allocation17 + $0x18] sm:$0xff]
    %v1862 = vld [vmem:[#allocation17 + $0x20] sm:$0xff]
    %v1863 = vld [vmem:[#allocation17 + $0x28] sm:$0xff]
    %v1864 = vld [vmem:[#allocation17 + $0x30] sm:$0xff]
    %v1865 = vld [vmem:[#allocation17 + $0x38] sm:$0xff]
    %v1866 = vld [vmem:[#allocation17 + $0x40] sm:$0xff]
    %v1867 = vld [vmem:[#allocation17 + $0x48] sm:$0xff]
    %v1868 = vld [vmem:[#allocation17 + $0x50] sm:$0xff]
    %v1869 = vld [vmem:[#allocation17 + $0x58] sm:$0xff]
    %v1870 = vld [vmem:[#allocation17 + $0x60] sm:$0xff]
    %v1871 = vld [vmem:[#allocation17 + $0x68] sm:$0xff]
    %v1872 = vld [vmem:[#allocation17 + $0x70] sm:$0xff]
    %v1873 = vld [vmem:[#allocation17 + $0x78] sm:$0xff]
    %v1874 = vld [vmem:[#allocation19] sm:$0xff]
    %v1875 = vld [vmem:[#allocation19 + $0x8] sm:$0xff]
    %v1876 = vld [vmem:[#allocation19 + $0x10] sm:$0xff]
    %v1877 = vld [vmem:[#allocation19 + $0x18] sm:$0xff]
    %v1878 = vld [vmem:[#allocation19 + $0x20] sm:$0xff]
    %v1879 = vld [vmem:[#allocation19 + $0x28] sm:$0xff]
    %v1880 = vld [vmem:[#allocation19 + $0x30] sm:$0xff]
    %v1881 = vld [vmem:[#allocation19 + $0x38] sm:$0xff]
    %v1882 = vld [vmem:[#allocation19 + $0x40] sm:$0xff]
    %v1883 = vld [vmem:[#allocation19 + $0x48] sm:$0xff]
    %v1884 = vld [vmem:[#allocation19 + $0x50] sm:$0xff]
    %v1885 = vld [vmem:[#allocation19 + $0x58] sm:$0xff]
    %v1886 = vld [vmem:[#allocation19 + $0x60] sm:$0xff]
    %v1887 = vld [vmem:[#allocation19 + $0x68] sm:$0xff]
    %v1888 = vld [vmem:[#allocation19 + $0x70] sm:$0xff]
    %v1889 = vld [vmem:[#allocation19 + $0x78] sm:$0xff]
    %1890 = vmatpush.msra.mxu0 %v1889
    %1891 = vmatpush.msra.mxu0 %v1888
    %1892 = vmatpush.msra.mxu0 %v1887
    %1893 = vmatpush.msra.mxu0 %v1886
    %1894 = vmatpush.msra.mxu0 %v1885
    %1895 = vmatpush.msra.mxu0 %v1884
    %1896 = vmatpush.msra.mxu0 %v1883
    %1897 = vmatpush.msra.mxu0 %v1882
    %1898 = vmatpush.msra.mxu0 %v1881
    %1899 = vmatpush.msra.mxu0 %v1880
    %1900 = vmatpush.msra.mxu0 %v1879
    %1901 = vmatpush.msra.mxu0 %v1878
    %1902 = vmatpush.msra.mxu0 %v1877
    %1903 = vmatpush.msra.mxu0 %v1876
    %1904 = vmatpush.msra.mxu0 %v1875
    %1905 = vmatpush.msra.mxu0 %v1874
    %1906 = vmatmul.f32.gmra.mxu0 %v1857
    %v1907 = vpop.f32.mrf.mxu0
    %v1908 = vadd.f32 0.0, %v1907
    %1909 = vdwg.mxu0
    %1910 = vmatpush.msra.mxu0 %v1873
    %1911 = vmatpush.msra.mxu0 %v1872
    %1912 = vmatpush.msra.mxu0 %v1871
    %1913 = vmatpush.msra.mxu0 %v1870
    %1914 = vmatpush.msra.mxu0 %v1869
    %1915 = vmatpush.msra.mxu0 %v1868
    %1916 = vmatpush.msra.mxu0 %v1867
    %1917 = vmatpush.msra.mxu0 %v1866
    %1918 = vmatpush.msra.mxu0 %v1865
    %1919 = vmatpush.msra.mxu0 %v1864
    %1920 = vmatpush.msra.mxu0 %v1863
    %1921 = vmatpush.msra.mxu0 %v1862
    %1922 = vmatpush.msra.mxu0 %v1861
    %1923 = vmatpush.msra.mxu0 %v1860
    %1924 = vmatpush.msra.mxu0 %v1859
    %1925 = vmatpush.msra.mxu0 %v1858
    %1926 = vmatmul.f32.gmra.mxu0 %v1856
    %v1927 = vpop.f32.mrf.mxu0
    %v1928 = vadd.f32 %v1908, %v1927
    %1929 = vdwg.mxu0
    %v1930 = vld [vmem:[%s13] sm:$0x1]
    %v1931 = vadd.f32 %v1928, %v1930
    %v1932 = vld [vmem:[#allocation20] sm:$0xff]
    %v1933 = vld [vmem:[#allocation20 + $0x8] sm:$0xff]
    %v1934 = vld [vmem:[#allocation20 + $0x10] sm:$0xff]
    %v1935 = vld [vmem:[#allocation20 + $0x18] sm:$0xff]
    %v1936 = vld [vmem:[#allocation20 + $0x20] sm:$0xff]
    %v1937 = vld [vmem:[#allocation20 + $0x28] sm:$0xff]
    %v1938 = vld [vmem:[#allocation20 + $0x30] sm:$0xff]
    %v1939 = vld [vmem:[#allocation20 + $0x38] sm:$0xff]
    %v1940 = vld [vmem:[#allocation20 + $0x40] sm:$0xff]
    %v1941 = vld [vmem:[#allocation20 + $0x48] sm:$0xff]
    %v1942 = vld [vmem:[#allocation20 + $0x50] sm:$0xff]
    %v1943 = vld [vmem:[#allocation20 + $0x58] sm:$0xff]
    %v1944 = vld [vmem:[#allocation20 + $0x60] sm:$0xff]
    %v1945 = vld [vmem:[#allocation20 + $0x68] sm:$0xff]
    %v1946 = vld [vmem:[#allocation20 + $0x70] sm:$0xff]
    %v1947 = vld [vmem:[#allocation20 + $0x78] sm:$0xff]
    %v1948 = vld [vmem:[#allocation22] sm:$0xff]
    %v1949 = vld [vmem:[#allocation22 + $0x8] sm:$0xff]
    %v1950 = vld [vmem:[#allocation22 + $0x10] sm:$0xff]
    %v1951 = vld [vmem:[#allocation22 + $0x18] sm:$0xff]
    %v1952 = vld [vmem:[#allocation22 + $0x20] sm:$0xff]
    %v1953 = vld [vmem:[#allocation22 + $0x28] sm:$0xff]
    %v1954 = vld [vmem:[#allocation22 + $0x30] sm:$0xff]
    %v1955 = vld [vmem:[#allocation22 + $0x38] sm:$0xff]
    %v1956 = vld [vmem:[#allocation22 + $0x40] sm:$0xff]
    %v1957 = vld [vmem:[#allocation22 + $0x48] sm:$0xff]
    %v1958 = vld [vmem:[#allocation22 + $0x50] sm:$0xff]
    %v1959 = vld [vmem:[#allocation22 + $0x58] sm:$0xff]
    %v1960 = vld [vmem:[#allocation22 + $0x60] sm:$0xff]
    %v1961 = vld [vmem:[#allocation22 + $0x68] sm:$0xff]
    %v1962 = vld [vmem:[#allocation22 + $0x70] sm:$0xff]
    %v1963 = vld [vmem:[#allocation22 + $0x78] sm:$0xff]
    %1964 = vmatpush.msra.mxu0 %v1963
    %1965 = vmatpush.msra.mxu0 %v1962
    %1966 = vmatpush.msra.mxu0 %v1961
    %1967 = vmatpush.msra.mxu0 %v1960
    %1968 = vmatpush.msra.mxu0 %v1959
    %1969 = vmatpush.msra.mxu0 %v1958
    %1970 = vmatpush.msra.mxu0 %v1957
    %1971 = vmatpush.msra.mxu0 %v1956
    %1972 = vmatpush.msra.mxu0 %v1955
    %1973 = vmatpush.msra.mxu0 %v1954
    %1974 = vmatpush.msra.mxu0 %v1953
    %1975 = vmatpush.msra.mxu0 %v1952
    %1976 = vmatpush.msra.mxu0 %v1951
    %1977 = vmatpush.msra.mxu0 %v1950
    %1978 = vmatpush.msra.mxu0 %v1949
    %1979 = vmatpush.msra.mxu0 %v1948
    %1980 = vmatmul.f32.gmra.mxu0 %v1857
    %v1981 = vpop.f32.mrf.mxu0
    %v1982 = vadd.f32 0.0, %v1981
    %1983 = vdwg.mxu0
    %1984 = vmatpush.msra.mxu0 %v1947
    %1985 = vmatpush.msra.mxu0 %v1946
    %1986 = vmatpush.msra.mxu0 %v1945
    %1987 = vmatpush.msra.mxu0 %v1944
    %1988 = vmatpush.msra.mxu0 %v1943
    %1989 = vmatpush.msra.mxu0 %v1942
    %1990 = vmatpush.msra.mxu0 %v1941
    %1991 = vmatpush.msra.mxu0 %v1940
    %1992 = vmatpush.msra.mxu0 %v1939
    %1993 = vmatpush.msra.mxu0 %v1938
    %1994 = vmatpush.msra.mxu0 %v1937
    %1995 = vmatpush.msra.mxu0 %v1936
    %1996 = vmatpush.msra.mxu0 %v1935
    %1997 = vmatpush.msra.mxu0 %v1934
    %1998 = vmatpush.msra.mxu0 %v1933
    %1999 = vmatpush.msra.mxu0 %v1932
    %2000 = vmatmul.f32.gmra.mxu0 %v1856
    %v2001 = vpop.f32.mrf.mxu0
    %v2002 = vadd.f32 %v1982, %v2001
    %2003 = vdwg.mxu0
    %v2004 = vld [vmem:[%s16] sm:$0x1]
    %v2005 = vadd.f32 %v2002, %v2004
    %2006 = vst [vmem:[#allocation27] sm:$0x1] %v1812
    %2007 = vst [vmem:[#allocation29] sm:$0x1] %v1849
    %v2008 = vld [vmem:[#allocation23] sm:$0xff]
    %v2009 = vld [vmem:[#allocation23 + $0x8] sm:$0xff]
    %v2010 = vld [vmem:[#allocation23 + $0x10] sm:$0xff]
    %v2011 = vld [vmem:[#allocation23 + $0x18] sm:$0xff]
    %v2012 = vld [vmem:[#allocation23 + $0x20] sm:$0xff]
    %v2013 = vld [vmem:[#allocation23 + $0x28] sm:$0xff]
    %v2014 = vld [vmem:[#allocation23 + $0x30] sm:$0xff]
    %v2015 = vld [vmem:[#allocation23 + $0x38] sm:$0xff]
    %v2016 = vld [vmem:[#allocation23 + $0x40] sm:$0xff]
    %v2017 = vld [vmem:[#allocation23 + $0x48] sm:$0xff]
    %v2018 = vld [vmem:[#allocation23 + $0x50] sm:$0xff]
    %v2019 = vld [vmem:[#allocation23 + $0x58] sm:$0xff]
    %v2020 = vld [vmem:[#allocation23 + $0x60] sm:$0xff]
    %v2021 = vld [vmem:[#allocation23 + $0x68] sm:$0xff]
    %v2022 = vld [vmem:[#allocation23 + $0x70] sm:$0xff]
    %v2023 = vld [vmem:[#allocation23 + $0x78] sm:$0xff]
    %v2024 = vld [vmem:[#allocation23 + $0x80] sm:$0xff]
    %v2025 = vld [vmem:[#allocation23 + $0x88] sm:$0xff]
    %v2026 = vld [vmem:[#allocation23 + $0x90] sm:$0xff]
    %v2027 = vld [vmem:[#allocation23 + $0x98] sm:$0xff]
    %v2028 = vld [vmem:[#allocation23 + $0xa0] sm:$0xff]
    %v2029 = vld [vmem:[#allocation23 + $0xa8] sm:$0xff]
    %v2030 = vld [vmem:[#allocation23 + $0xb0] sm:$0xff]
    %v2031 = vld [vmem:[#allocation23 + $0xb8] sm:$0xff]
    %v2032 = vld [vmem:[#allocation23 + $0xc0] sm:$0xff]
    %v2033 = vld [vmem:[#allocation23 + $0xc8] sm:$0xff]
    %v2034 = vld [vmem:[#allocation23 + $0xd0] sm:$0xff]
    %v2035 = vld [vmem:[#allocation23 + $0xd8] sm:$0xff]
    %v2036 = vld [vmem:[#allocation23 + $0xe0] sm:$0xff]
    %v2037 = vld [vmem:[#allocation23 + $0xe8] sm:$0xff]
    %v2038 = vld [vmem:[#allocation23 + $0xf0] sm:$0xff]
    %v2039 = vld [vmem:[#allocation23 + $0xf8] sm:$0xff]
    %v2040 = vld [vmem:[#allocation23 + $0x100] sm:$0xff]
    %v2041 = vld [vmem:[#allocation23 + $0x108] sm:$0xff]
    %v2042 = vld [vmem:[#allocation23 + $0x110] sm:$0xff]
    %v2043 = vld [vmem:[#allocation23 + $0x118] sm:$0xff]
    %v2044 = vld [vmem:[#allocation23 + $0x120] sm:$0xff]
    %v2045 = vld [vmem:[#allocation23 + $0x128] sm:$0xff]
    %v2046 = vld [vmem:[#allocation23 + $0x130] sm:$0xff]
    %v2047 = vld [vmem:[#allocation23 + $0x138] sm:$0xff]
    %v2048 = vld [vmem:[#allocation23 + $0x140] sm:$0xff]
    %v2049 = vld [vmem:[#allocation23 + $0x148] sm:$0xff]
    %v2050 = vld [vmem:[#allocation23 + $0x150] sm:$0xff]
    %v2051 = vld [vmem:[#allocation23 + $0x158] sm:$0xff]
    %v2052 = vld [vmem:[#allocation23 + $0x160] sm:$0xff]
    %v2053 = vld [vmem:[#allocation23 + $0x168] sm:$0xff]
    %v2054 = vld [vmem:[#allocation23 + $0x170] sm:$0xff]
    %v2055 = vld [vmem:[#allocation23 + $0x178] sm:$0xff]
    %v2056 = vld [vmem:[#allocation23 + $0x180] sm:$0xff]
    %v2057 = vld [vmem:[#allocation23 + $0x188] sm:$0xff]
    %v2058 = vld [vmem:[#allocation23 + $0x190] sm:$0xff]
    %v2059 = vld [vmem:[#allocation23 + $0x198] sm:$0xff]
    %v2060 = vld [vmem:[#allocation23 + $0x1a0] sm:$0xff]
    %v2061 = vld [vmem:[#allocation23 + $0x1a8] sm:$0xff]
    %v2062 = vld [vmem:[#allocation23 + $0x1b0] sm:$0xff]
    %v2063 = vld [vmem:[#allocation23 + $0x1b8] sm:$0xff]
    %v2064 = vld [vmem:[#allocation23 + $0x1c0] sm:$0xff]
    %v2065 = vld [vmem:[#allocation23 + $0x1c8] sm:$0xff]
    %v2066 = vld [vmem:[#allocation23 + $0x1d0] sm:$0xff]
    %v2067 = vld [vmem:[#allocation23 + $0x1d8] sm:$0xff]
    %v2068 = vld [vmem:[#allocation23 + $0x1e0] sm:$0xff]
    %v2069 = vld [vmem:[#allocation23 + $0x1e8] sm:$0xff]
    %v2070 = vld [vmem:[#allocation23 + $0x1f0] sm:$0xff]
    %v2071 = vld [vmem:[#allocation23 + $0x1f8] sm:$0xff]
    %v2072 = vld [vmem:[#allocation23 + $0x200] sm:$0xff]
    %v2073 = vld [vmem:[#allocation23 + $0x208] sm:$0xff]
    %v2074 = vld [vmem:[#allocation23 + $0x210] sm:$0xff]
    %v2075 = vld [vmem:[#allocation23 + $0x218] sm:$0xff]
    %v2076 = vld [vmem:[#allocation23 + $0x220] sm:$0xff]
    %v2077 = vld [vmem:[#allocation23 + $0x228] sm:$0xff]
    %v2078 = vld [vmem:[#allocation23 + $0x230] sm:$0xff]
    %v2079 = vld [vmem:[#allocation23 + $0x238] sm:$0xff]
    %v2080 = vld [vmem:[#allocation23 + $0x240] sm:$0xff]
    %v2081 = vld [vmem:[#allocation23 + $0x248] sm:$0xff]
    %v2082 = vld [vmem:[#allocation23 + $0x250] sm:$0xff]
    %v2083 = vld [vmem:[#allocation23 + $0x258] sm:$0xff]
    %v2084 = vld [vmem:[#allocation23 + $0x260] sm:$0xff]
    %v2085 = vld [vmem:[#allocation23 + $0x268] sm:$0xff]
    %v2086 = vld [vmem:[#allocation23 + $0x270] sm:$0xff]
    %v2087 = vld [vmem:[#allocation23 + $0x278] sm:$0xff]
    %v2088 = vld [vmem:[#allocation23 + $0x280] sm:$0xff]
    %v2089 = vld [vmem:[#allocation23 + $0x288] sm:$0xff]
    %v2090 = vld [vmem:[#allocation23 + $0x290] sm:$0xff]
    %v2091 = vld [vmem:[#allocation23 + $0x298] sm:$0xff]
    %v2092 = vld [vmem:[#allocation23 + $0x2a0] sm:$0xff]
    %v2093 = vld [vmem:[#allocation23 + $0x2a8] sm:$0xff]
    %v2094 = vld [vmem:[#allocation23 + $0x2b0] sm:$0xff]
    %v2095 = vld [vmem:[#allocation23 + $0x2b8] sm:$0xff]
    %v2096 = vld [vmem:[#allocation23 + $0x2c0] sm:$0xff]
    %v2097 = vld [vmem:[#allocation23 + $0x2c8] sm:$0xff]
    %v2098 = vld [vmem:[#allocation23 + $0x2d0] sm:$0xff]
    %v2099 = vld [vmem:[#allocation23 + $0x2d8] sm:$0xff]
    %v2100 = vld [vmem:[#allocation23 + $0x2e0] sm:$0xff]
    %v2101 = vld [vmem:[#allocation23 + $0x2e8] sm:$0xff]
    %v2102 = vld [vmem:[#allocation23 + $0x2f0] sm:$0xff]
    %v2103 = vld [vmem:[#allocation23 + $0x2f8] sm:$0xff]
    %v2104 = vld [vmem:[#allocation23 + $0x300] sm:$0xff]
    %v2105 = vld [vmem:[#allocation23 + $0x308] sm:$0xff]
    %v2106 = vld [vmem:[#allocation23 + $0x310] sm:$0xff]
    %v2107 = vld [vmem:[#allocation23 + $0x318] sm:$0xff]
    %v2108 = vld [vmem:[#allocation23 + $0x320] sm:$0xff]
    %v2109 = vld [vmem:[#allocation23 + $0x328] sm:$0xff]
    %v2110 = vld [vmem:[#allocation23 + $0x330] sm:$0xff]
    %v2111 = vld [vmem:[#allocation23 + $0x338] sm:$0xff]
    %v2112 = vld [vmem:[#allocation23 + $0x340] sm:$0xff]
    %v2113 = vld [vmem:[#allocation23 + $0x348] sm:$0xff]
    %v2114 = vld [vmem:[#allocation23 + $0x350] sm:$0xff]
    %v2115 = vld [vmem:[#allocation23 + $0x358] sm:$0xff]
    %v2116 = vld [vmem:[#allocation23 + $0x360] sm:$0xff]
    %v2117 = vld [vmem:[#allocation23 + $0x368] sm:$0xff]
    %v2118 = vld [vmem:[#allocation23 + $0x370] sm:$0xff]
    %v2119 = vld [vmem:[#allocation23 + $0x378] sm:$0xff]
    %v2120 = vld [vmem:[#allocation23 + $0x380] sm:$0xff]
    %v2121 = vld [vmem:[#allocation23 + $0x388] sm:$0xff]
    %v2122 = vld [vmem:[#allocation23 + $0x390] sm:$0xff]
    %v2123 = vld [vmem:[#allocation23 + $0x398] sm:$0xff]
    %v2124 = vld [vmem:[#allocation23 + $0x3a0] sm:$0xff]
    %v2125 = vld [vmem:[#allocation23 + $0x3a8] sm:$0xff]
    %v2126 = vld [vmem:[#allocation23 + $0x3b0] sm:$0xff]
    %v2127 = vld [vmem:[#allocation23 + $0x3b8] sm:$0xff]
    %v2128 = vld [vmem:[#allocation23 + $0x3c0] sm:$0xff]
    %v2129 = vld [vmem:[#allocation23 + $0x3c8] sm:$0xff]
    %v2130 = vld [vmem:[#allocation23 + $0x3d0] sm:$0xff]
    %v2131 = vld [vmem:[#allocation23 + $0x3d8] sm:$0xff]
    %v2132 = vld [vmem:[#allocation23 + $0x3e0] sm:$0xff]
    %v2133 = vld [vmem:[#allocation23 + $0x3e8] sm:$0xff]
    %v2134 = vld [vmem:[#allocation23 + $0x3f0] sm:$0xff]
    %v2135 = vld [vmem:[#allocation23 + $0x3f8] sm:$0xff]
    %v2136 = vld [vmem:[%s18] sm:$0xf]
    %v2137 = vld [vmem:[#allocation25] sm:$0xff]
    %v2138 = vld [vmem:[#allocation25 + $0x8] sm:$0xff]
    %v2139 = vld [vmem:[#allocation25 + $0x10] sm:$0xff]
    %v2140 = vld [vmem:[#allocation25 + $0x18] sm:$0xff]
    %v2141 = vld [vmem:[#allocation25 + $0x20] sm:$0xff]
    %v2142 = vld [vmem:[#allocation25 + $0x28] sm:$0xff]
    %v2143 = vld [vmem:[#allocation25 + $0x30] sm:$0xff]
    %v2144 = vld [vmem:[#allocation25 + $0x38] sm:$0xff]
    %v2145 = vld [vmem:[#allocation25 + $0x40] sm:$0xff]
    %v2146 = vld [vmem:[#allocation25 + $0x48] sm:$0xff]
    %v2147 = vld [vmem:[#allocation25 + $0x50] sm:$0xff]
    %v2148 = vld [vmem:[#allocation25 + $0x58] sm:$0xff]
    %v2149 = vld [vmem:[#allocation25 + $0x60] sm:$0xff]
    %v2150 = vld [vmem:[#allocation25 + $0x68] sm:$0xff]
    %v2151 = vld [vmem:[#allocation25 + $0x70] sm:$0xff]
    %v2152 = vld [vmem:[#allocation25 + $0x78] sm:$0xff]
    %v2153 = vld [vmem:[%s20] sm:$0x1]
    %v2154 = vlaneseq
    %v2155 = vand.u32 %v2154, 127
    %vm2156 = vcmp.lt.s32.totalorder %v2155, 28
    %v2157 = vsel %vm2156, 0.0, -1e+30
    %v2158 = vld [vmem:[#allocation5] sm:$0x1]
    %v2159 = vmax.f32 %v2158, 0.0
    %v2161 = vperm.slane %v2136, 0
    %v2162 = vperm.slane %v2136, 1
    %v2163 = vperm.slane %v2136, 2
    %v2164 = vperm.slane %v2136, 3
    %2169 = vmatpush.msra.mxu0 %v2068
    %2170 = vmatpush.msra.mxu0 %v2064
    %2171 = vmatpush.msra.mxu0 %v2060
    %2172 = vmatpush.msra.mxu0 %v2056
    %2173 = vmatpush.msra.mxu0 %v2052
    %2174 = vmatpush.msra.mxu0 %v2048
    %2175 = vmatpush.msra.mxu0 %v2044
    %2176 = vmatpush.msra.mxu0 %v2040
    %2177 = vmatpush.msra.mxu0 %v2036
    %2178 = vmatpush.msra.mxu0 %v2032
    %2179 = vmatpush.msra.mxu0 %v2028
    %2180 = vmatpush.msra.mxu0 %v2024
    %2181 = vmatpush.msra.mxu0 %v2020
    %2182 = vmatpush.msra.mxu0 %v2016
    %2183 = vmatpush.msra.mxu0 %v2012
    %2184 = vmatpush.msra.mxu0 %v2008
    %2185 = vmatmul.f32.gmra.mxu0 %v2159
    %v2186 = vpop.f32.mrf.mxu0
    %v2187 = vadd.f32 %v2161, %v2186
    %2188 = vdwg.mxu0
    %2189 = vmatpush.msra.mxu0 %v2132
    %2190 = vmatpush.msra.mxu0 %v2128
    %2191 = vmatpush.msra.mxu0 %v2124
    %2192 = vmatpush.msra.mxu0 %v2120
    %2193 = vmatpush.msra.mxu0 %v2116
    %2194 = vmatpush.msra.mxu0 %v2112
    %2195 = vmatpush.msra.mxu0 %v2108
    %2196 = vmatpush.msra.mxu0 %v2104
    %2197 = vmatpush.msra.mxu0 %v2100
    %2198 = vmatpush.msra.mxu0 %v2096
    %2199 = vmatpush.msra.mxu0 %v2092
    %2200 = vmatpush.msra.mxu0 %v2088
    %2201 = vmatpush.msra.mxu0 %v2084
    %2202 = vmatpush.msra.mxu0 %v2080
    %2203 = vmatpush.msra.mxu0 %v2076
    %2204 = vmatpush.msra.mxu0 %v2072
    %2205 = vmatmul.f32.gmra.mxu0 %v1931
    %v2206 = vpop.f32.mrf.mxu0
    %v2207 = vadd.f32 %v2187, %v2206
    %2208 = vdwg.mxu0
    %2209 = vmatpush.msra.mxu0 %v2069
    %2210 = vmatpush.msra.mxu0 %v2065
    %2211 = vmatpush.msra.mxu0 %v2061
    %2212 = vmatpush.msra.mxu0 %v2057
    %2213 = vmatpush.msra.mxu0 %v2053
    %2214 = vmatpush.msra.mxu0 %v2049
    %2215 = vmatpush.msra.mxu0 %v2045
    %2216 = vmatpush.msra.mxu0 %v2041
    %2217 = vmatpush.msra.mxu0 %v2037
    %2218 = vmatpush.msra.mxu0 %v2033
    %2219 = vmatpush.msra.mxu0 %v2029
    %2220 = vmatpush.msra.mxu0 %v2025
    %2221 = vmatpush.msra.mxu0 %v2021
    %2222 = vmatpush.msra.mxu0 %v2017
    %2223 = vmatpush.msra.mxu0 %v2013
    %2224 = vmatpush.msra.mxu0 %v2009
    %2225 = vmatmul.f32.gmra.mxu0 %v2159
    %v2226 = vpop.f32.mrf.mxu0
    %v2227 = vadd.f32 %v2162, %v2226
    %2228 = vdwg.mxu0
    %2229 = vmatpush.msra.mxu0 %v2133
    %2230 = vmatpush.msra.mxu0 %v2129
    %2231 = vmatpush.msra.mxu0 %v2125
    %2232 = vmatpush.msra.mxu0 %v2121
    %2233 = vmatpush.msra.mxu0 %v2117
    %2234 = vmatpush.msra.mxu0 %v2113
    %2235 = vmatpush.msra.mxu0 %v2109
    %2236 = vmatpush.msra.mxu0 %v2105
    %2237 = vmatpush.msra.mxu0 %v2101
    %2238 = vmatpush.msra.mxu0 %v2097
    %2239 = vmatpush.msra.mxu0 %v2093
    %2240 = vmatpush.msra.mxu0 %v2089
    %2241 = vmatpush.msra.mxu0 %v2085
    %2242 = vmatpush.msra.mxu0 %v2081
    %2243 = vmatpush.msra.mxu0 %v2077
    %2244 = vmatpush.msra.mxu0 %v2073
    %2245 = vmatmul.f32.gmra.mxu0 %v1931
    %v2246 = vpop.f32.mrf.mxu0
    %v2247 = vadd.f32 %v2227, %v2246
    %2248 = vdwg.mxu0
    %2249 = vmatpush.msra.mxu0 %v2070
    %2250 = vmatpush.msra.mxu0 %v2066
    %2251 = vmatpush.msra.mxu0 %v2062
    %2252 = vmatpush.msra.mxu0 %v2058
    %2253 = vmatpush.msra.mxu0 %v2054
    %2254 = vmatpush.msra.mxu0 %v2050
    %2255 = vmatpush.msra.mxu0 %v2046
    %2256 = vmatpush.msra.mxu0 %v2042
    %2257 = vmatpush.msra.mxu0 %v2038
    %2258 = vmatpush.msra.mxu0 %v2034
    %2259 = vmatpush.msra.mxu0 %v2030
    %2260 = vmatpush.msra.mxu0 %v2026
    %2261 = vmatpush.msra.mxu0 %v2022
    %2262 = vmatpush.msra.mxu0 %v2018
    %2263 = vmatpush.msra.mxu0 %v2014
    %2264 = vmatpush.msra.mxu0 %v2010
    %2265 = vmatmul.f32.gmra.mxu0 %v2159
    %v2266 = vpop.f32.mrf.mxu0
    %v2267 = vadd.f32 %v2163, %v2266
    %2268 = vdwg.mxu0
    %2269 = vmatpush.msra.mxu0 %v2134
    %2270 = vmatpush.msra.mxu0 %v2130
    %2271 = vmatpush.msra.mxu0 %v2126
    %2272 = vmatpush.msra.mxu0 %v2122
    %2273 = vmatpush.msra.mxu0 %v2118
    %2274 = vmatpush.msra.mxu0 %v2114
    %2275 = vmatpush.msra.mxu0 %v2110
    %2276 = vmatpush.msra.mxu0 %v2106
    %2277 = vmatpush.msra.mxu0 %v2102
    %2278 = vmatpush.msra.mxu0 %v2098
    %2279 = vmatpush.msra.mxu0 %v2094
    %2280 = vmatpush.msra.mxu0 %v2090
    %2281 = vmatpush.msra.mxu0 %v2086
    %2282 = vmatpush.msra.mxu0 %v2082
    %2283 = vmatpush.msra.mxu0 %v2078
    %2284 = vmatpush.msra.mxu0 %v2074
    %2285 = vmatmul.f32.gmra.mxu0 %v1931
    %v2286 = vpop.f32.mrf.mxu0
    %v2287 = vadd.f32 %v2267, %v2286
    %2288 = vdwg.mxu0
    %2289 = vmatpush.msra.mxu0 %v2071
    %2290 = vmatpush.msra.mxu0 %v2067
    %2291 = vmatpush.msra.mxu0 %v2063
    %2292 = vmatpush.msra.mxu0 %v2059
    %2293 = vmatpush.msra.mxu0 %v2055
    %2294 = vmatpush.msra.mxu0 %v2051
    %2295 = vmatpush.msra.mxu0 %v2047
    %2296 = vmatpush.msra.mxu0 %v2043
    %2297 = vmatpush.msra.mxu0 %v2039
    %2298 = vmatpush.msra.mxu0 %v2035
    %2299 = vmatpush.msra.mxu0 %v2031
    %2300 = vmatpush.msra.mxu0 %v2027
    %2301 = vmatpush.msra.mxu0 %v2023
    %2302 = vmatpush.msra.mxu0 %v2019
    %2303 = vmatpush.msra.mxu0 %v2015
    %2304 = vmatpush.msra.mxu0 %v2011
    %2305 = vmatmul.f32.gmra.mxu0 %v2159
    %v2306 = vpop.f32.mrf.mxu0
    %v2307 = vadd.f32 %v2164, %v2306
    %2308 = vdwg.mxu0
    %2309 = vmatpush.msra.mxu0 %v2135
    %2310 = vmatpush.msra.mxu0 %v2131
    %2311 = vmatpush.msra.mxu0 %v2127
    %2312 = vmatpush.msra.mxu0 %v2123
    %2313 = vmatpush.msra.mxu0 %v2119
    %2314 = vmatpush.msra.mxu0 %v2115
    %2315 = vmatpush.msra.mxu0 %v2111
    %2316 = vmatpush.msra.mxu0 %v2107
    %2317 = vmatpush.msra.mxu0 %v2103
    %2318 = vmatpush.msra.mxu0 %v2099
    %2319 = vmatpush.msra.mxu0 %v2095
    %2320 = vmatpush.msra.mxu0 %v2091
    %2321 = vmatpush.msra.mxu0 %v2087
    %2322 = vmatpush.msra.mxu0 %v2083
    %2323 = vmatpush.msra.mxu0 %v2079
    %2324 = vmatpush.msra.mxu0 %v2075
    %2325 = vmatmul.f32.gmra.mxu0 %v1931
    %v2326 = vpop.f32.mrf.mxu0
    %v2327 = vadd.f32 %v2307, %v2326
    %2328 = vdwg.mxu0
    %v2329 = vxor.u32 %v2207, 2147483648
    %v2330 = vmul.f32 %v2329, 1.442695
    %v2331 = vpow.pop %v2330
    %v2332 = vadd.f32 %v2331, 1.0
    %v2333 = vrcp.pop %v2332
    %v2334 = vmul.f32 %v2332, %v2333
    %v2335 = vsub.f32 1.0, %v2334
    %v2336 = vmul.f32 %v2333, %v2335
    %v2337 = vadd.f32 %v2333, %v2336
    %vm2338 = vweird.f32 %v2332
    %vm2339 = vweird.f32 %v2333
    %vm2340 = vmor %vm2338, %vm2339
    %v2341 = vsel %vm2340, %v2333, %v2337
    %v2342 = vand.u32 2147483647, %v2332
    %vm2343 = vcmp.eq.f32.partialorder %v2342, 8.507059e+37
    %v2344 = vand.u32 %v2332, 2147483648
    %v2345 = vor.u32 1.1754944e-38, %v2344
    %v2346 = vsel %vm2343, %v2345, %v2341
    %v2347 = vmul.f32 1.0, %v2346
    %v2348 = vxor.u32 %v2247, 2147483648
    %v2349 = vmul.f32 %v2348, 1.442695
    %v2350 = vpow.pop %v2349
    %v2351 = vadd.f32 %v2350, 1.0
    %v2352 = vrcp.pop %v2351
    %v2353 = vmul.f32 %v2351, %v2352
    %v2354 = vsub.f32 1.0, %v2353
    %v2355 = vmul.f32 %v2352, %v2354
    %v2356 = vadd.f32 %v2352, %v2355
    %vm2357 = vweird.f32 %v2351
    %vm2358 = vweird.f32 %v2352
    %vm2359 = vmor %vm2357, %vm2358
    %v2360 = vsel %vm2359, %v2352, %v2356
    %v2361 = vand.u32 2147483647, %v2351
    %vm2362 = vcmp.eq.f32.partialorder %v2361, 8.507059e+37
    %v2363 = vand.u32 %v2351, 2147483648
    %v2364 = vor.u32 1.1754944e-38, %v2363
    %v2365 = vsel %vm2362, %v2364, %v2360
    %v2366 = vmul.f32 1.0, %v2365
    %v2367 = vtanh.pop %v2287
    %v2368 = vxor.u32 %v2327, 2147483648
    %v2369 = vmul.f32 %v2368, 1.442695
    %v2370 = vpow.pop %v2369
    %v2371 = vadd.f32 %v2370, 1.0
    %v2372 = vrcp.pop %v2371
    %v2373 = vmul.f32 %v2371, %v2372
    %v2374 = vsub.f32 1.0, %v2373
    %v2375 = vmul.f32 %v2372, %v2374
    %v2376 = vadd.f32 %v2372, %v2375
    %vm2377 = vweird.f32 %v2371
    %vm2378 = vweird.f32 %v2372
    %vm2379 = vmor %vm2377, %vm2378
    %v2380 = vsel %vm2379, %v2372, %v2376
    %v2381 = vand.u32 2147483647, %v2371
    %vm2382 = vcmp.eq.f32.partialorder %v2381, 8.507059e+37
    %v2383 = vand.u32 %v2371, 2147483648
    %v2384 = vor.u32 1.1754944e-38, %v2383
    %v2385 = vsel %vm2382, %v2384, %v2380
    %v2386 = vmul.f32 1.0, %v2385
    %v2387 = vmul.f32 %v2366, %v2005
    %v2388 = vmul.f32 %v2347, %v2367
    %v2389 = vadd.f32 %v2387, %v2388
    %v2390 = vtanh.pop %v2389
    %v2391 = vmul.f32 %v2386, %v2390
    %2392 = vmatpush.msra.mxu0 %v2152
    %2393 = vmatpush.msra.mxu0 %v2151
    %2394 = vmatpush.msra.mxu0 %v2150
    %2395 = vmatpush.msra.mxu0 %v2149
    %2396 = vmatpush.msra.mxu0 %v2148
    %2397 = vmatpush.msra.mxu0 %v2147
    %2398 = vmatpush.msra.mxu0 %v2146
    %2399 = vmatpush.msra.mxu0 %v2145
    %2400 = vmatpush.msra.mxu0 %v2144
    %2401 = vmatpush.msra.mxu0 %v2143
    %2402 = vmatpush.msra.mxu0 %v2142
    %2403 = vmatpush.msra.mxu0 %v2141
    %2404 = vmatpush.msra.mxu0 %v2140
    %2405 = vmatpush.msra.mxu0 %v2139
    %2406 = vmatpush.msra.mxu0 %v2138
    %2407 = vmatpush.msra.mxu0 %v2137
    %2408 = vmatmul.f32.gmra.mxu0 %v2391
    %v2409 = vpop.f32.mrf.mxu0
    %v2410 = vadd.f32 %v2153, %v2409
    %2411 = vdwg.mxu0
    %v2412 = vadd.f32 %v2410, %v2157
    %vm2413 = vcmask 1040384
    %v2414 = vsel %vm2413, %v2412, -inf
    %2415 = vmax.xlane.f32.xlu0 %v2414
    %v2416 = vpop.xlane.xlu0 %2415
    %v2417 = vsub.f32 %v2412, %v2416
    %v2418 = vmul.f32 %v2417, 1.442695
    %v2419 = vpow.pop %v2418
    %v2420 = vsel %vm2413, %v2419, 0.0
    %2421 = vadd.xlane.f32.xlu0 %v2420
    %v2422 = vpop.xlane.xlu0 %2421
    %v2423 = vlog2.pop %v2422
    %v2424 = vmul.f32 %v2423, 0.6931472
    %v2425 = vsub.f32 %v2417, %v2424
    %2426 = vst [vmem:[#allocation26] sm:$0x1] %v2425
    %v2427 = vld [vmem:[#allocation5 + $0x1] sm:$0x1]
    %v2428 = vmax.f32 %v2427, 0.0
    %2429 = vmatpush.msra.mxu0 %v2068
    %2430 = vmatpush.msra.mxu0 %v2064
    %2431 = vmatpush.msra.mxu0 %v2060
    %2432 = vmatpush.msra.mxu0 %v2056
    %2433 = vmatpush.msra.mxu0 %v2052
    %2434 = vmatpush.msra.mxu0 %v2048
    %2435 = vmatpush.msra.mxu0 %v2044
    %2436 = vmatpush.msra.mxu0 %v2040
    %2437 = vmatpush.msra.mxu0 %v2036
    %2438 = vmatpush.msra.mxu0 %v2032
    %2439 = vmatpush.msra.mxu0 %v2028
    %2440 = vmatpush.msra.mxu0 %v2024
    %2441 = vmatpush.msra.mxu0 %v2020
    %2442 = vmatpush.msra.mxu0 %v2016
    %2443 = vmatpush.msra.mxu0 %v2012
    %2444 = vmatpush.msra.mxu0 %v2008
    %2445 = vmatmul.f32.gmra.mxu0 %v2428
    %v2446 = vpop.f32.mrf.mxu0
    %v2447 = vadd.f32 %v2161, %v2446
    %2448 = vdwg.mxu0
    %2449 = vmatpush.msra.mxu0 %v2132
    %2450 = vmatpush.msra.mxu0 %v2128
    %2451 = vmatpush.msra.mxu0 %v2124
    %2452 = vmatpush.msra.mxu0 %v2120
    %2453 = vmatpush.msra.mxu0 %v2116
    %2454 = vmatpush.msra.mxu0 %v2112
    %2455 = vmatpush.msra.mxu0 %v2108
    %2456 = vmatpush.msra.mxu0 %v2104
    %2457 = vmatpush.msra.mxu0 %v2100
    %2458 = vmatpush.msra.mxu0 %v2096
    %2459 = vmatpush.msra.mxu0 %v2092
    %2460 = vmatpush.msra.mxu0 %v2088
    %2461 = vmatpush.msra.mxu0 %v2084
    %2462 = vmatpush.msra.mxu0 %v2080
    %2463 = vmatpush.msra.mxu0 %v2076
    %2464 = vmatpush.msra.mxu0 %v2072
    %2465 = vmatmul.f32.gmra.mxu0 %v2391
    %v2466 = vpop.f32.mrf.mxu0
    %v2467 = vadd.f32 %v2447, %v2466
    %2468 = vdwg.mxu0
    %2469 = vmatpush.msra.mxu0 %v2069
    %2470 = vmatpush.msra.mxu0 %v2065
    %2471 = vmatpush.msra.mxu0 %v2061
    %2472 = vmatpush.msra.mxu0 %v2057
    %2473 = vmatpush.msra.mxu0 %v2053
    %2474 = vmatpush.msra.mxu0 %v2049
    %2475 = vmatpush.msra.mxu0 %v2045
    %2476 = vmatpush.msra.mxu0 %v2041
    %2477 = vmatpush.msra.mxu0 %v2037
    %2478 = vmatpush.msra.mxu0 %v2033
    %2479 = vmatpush.msra.mxu0 %v2029
    %2480 = vmatpush.msra.mxu0 %v2025
    %2481 = vmatpush.msra.mxu0 %v2021
    %2482 = vmatpush.msra.mxu0 %v2017
    %2483 = vmatpush.msra.mxu0 %v2013
    %2484 = vmatpush.msra.mxu0 %v2009
    %2485 = vmatmul.f32.gmra.mxu0 %v2428
    %v2486 = vpop.f32.mrf.mxu0
    %v2487 = vadd.f32 %v2162, %v2486
    %2488 = vdwg.mxu0
    %2489 = vmatpush.msra.mxu0 %v2133
    %2490 = vmatpush.msra.mxu0 %v2129
    %2491 = vmatpush.msra.mxu0 %v2125
    %2492 = vmatpush.msra.mxu0 %v2121
    %2493 = vmatpush.msra.mxu0 %v2117
    %2494 = vmatpush.msra.mxu0 %v2113
    %2495 = vmatpush.msra.mxu0 %v2109
    %2496 = vmatpush.msra.mxu0 %v2105
    %2497 = vmatpush.msra.mxu0 %v2101
    %2498 = vmatpush.msra.mxu0 %v2097
    %2499 = vmatpush.msra.mxu0 %v2093
    %2500 = vmatpush.msra.mxu0 %v2089
    %2501 = vmatpush.msra.mxu0 %v2085
    %2502 = vmatpush.msra.mxu0 %v2081
    %2503 = vmatpush.msra.mxu0 %v2077
    %2504 = vmatpush.msra.mxu0 %v2073
    %2505 = vmatmul.f32.gmra.mxu0 %v2391
    %v2506 = vpop.f32.mrf.mxu0
    %v2507 = vadd.f32 %v2487, %v2506
    %2508 = vdwg.mxu0
    %2509 = vmatpush.msra.mxu0 %v2070
    %2510 = vmatpush.msra.mxu0 %v2066
    %2511 = vmatpush.msra.mxu0 %v2062
    %2512 = vmatpush.msra.mxu0 %v2058
    %2513 = vmatpush.msra.mxu0 %v2054
    %2514 = vmatpush.msra.mxu0 %v2050
    %2515 = vmatpush.msra.mxu0 %v2046
    %2516 = vmatpush.msra.mxu0 %v2042
    %2517 = vmatpush.msra.mxu0 %v2038
    %2518 = vmatpush.msra.mxu0 %v2034
    %2519 = vmatpush.msra.mxu0 %v2030
    %2520 = vmatpush.msra.mxu0 %v2026
    %2521 = vmatpush.msra.mxu0 %v2022
    %2522 = vmatpush.msra.mxu0 %v2018
    %2523 = vmatpush.msra.mxu0 %v2014
    %2524 = vmatpush.msra.mxu0 %v2010
    %2525 = vmatmul.f32.gmra.mxu0 %v2428
    %v2526 = vpop.f32.mrf.mxu0
    %v2527 = vadd.f32 %v2163, %v2526
    %2528 = vdwg.mxu0
    %2529 = vmatpush.msra.mxu0 %v2134
    %2530 = vmatpush.msra.mxu0 %v2130
    %2531 = vmatpush.msra.mxu0 %v2126
    %2532 = vmatpush.msra.mxu0 %v2122
    %2533 = vmatpush.msra.mxu0 %v2118
    %2534 = vmatpush.msra.mxu0 %v2114
    %2535 = vmatpush.msra.mxu0 %v2110
    %2536 = vmatpush.msra.mxu0 %v2106
    %2537 = vmatpush.msra.mxu0 %v2102
    %2538 = vmatpush.msra.mxu0 %v2098
    %2539 = vmatpush.msra.mxu0 %v2094
    %2540 = vmatpush.msra.mxu0 %v2090
    %2541 = vmatpush.msra.mxu0 %v2086
    %2542 = vmatpush.msra.mxu0 %v2082
    %2543 = vmatpush.msra.mxu0 %v2078
    %2544 = vmatpush.msra.mxu0 %v2074
    %2545 = vmatmul.f32.gmra.mxu0 %v2391
    %v2546 = vpop.f32.mrf.mxu0
    %v2547 = vadd.f32 %v2527, %v2546
    %2548 = vdwg.mxu0
    %2549 = vmatpush.msra.mxu0 %v2071
    %2550 = vmatpush.msra.mxu0 %v2067
    %2551 = vmatpush.msra.mxu0 %v2063
    %2552 = vmatpush.msra.mxu0 %v2059
    %2553 = vmatpush.msra.mxu0 %v2055
    %2554 = vmatpush.msra.mxu0 %v2051
    %2555 = vmatpush.msra.mxu0 %v2047
    %2556 = vmatpush.msra.mxu0 %v2043
    %2557 = vmatpush.msra.mxu0 %v2039
    %2558 = vmatpush.msra.mxu0 %v2035
    %2559 = vmatpush.msra.mxu0 %v2031
    %2560 = vmatpush.msra.mxu0 %v2027
    %2561 = vmatpush.msra.mxu0 %v2023
    %2562 = vmatpush.msra.mxu0 %v2019
    %2563 = vmatpush.msra.mxu0 %v2015
    %2564 = vmatpush.msra.mxu0 %v2011
    %2565 = vmatmul.f32.gmra.mxu0 %v2428
    %v2566 = vpop.f32.mrf.mxu0
    %v2567 = vadd.f32 %v2164, %v2566
    %2568 = vdwg.mxu0
    %2569 = vmatpush.msra.mxu0 %v2135
    %2570 = vmatpush.msra.mxu0 %v2131
    %2571 = vmatpush.msra.mxu0 %v2127
    %2572 = vmatpush.msra.mxu0 %v2123
    %2573 = vmatpush.msra.mxu0 %v2119
    %2574 = vmatpush.msra.mxu0 %v2115
    %2575 = vmatpush.msra.mxu0 %v2111
    %2576 = vmatpush.msra.mxu0 %v2107
    %2577 = vmatpush.msra.mxu0 %v2103
    %2578 = vmatpush.msra.mxu0 %v2099
    %2579 = vmatpush.msra.mxu0 %v2095
    %2580 = vmatpush.msra.mxu0 %v2091
    %2581 = vmatpush.msra.mxu0 %v2087
    %2582 = vmatpush.msra.mxu0 %v2083
    %2583 = vmatpush.msra.mxu0 %v2079
    %2584 = vmatpush.msra.mxu0 %v2075
    %2585 = vmatmul.f32.gmra.mxu0 %v2391
    %v2586 = vpop.f32.mrf.mxu0
    %v2587 = vadd.f32 %v2567, %v2586
    %2588 = vdwg.mxu0
    %v2589 = vxor.u32 %v2467, 2147483648
    %v2590 = vmul.f32 %v2589, 1.442695
    %v2591 = vpow.pop %v2590
    %v2592 = vadd.f32 %v2591, 1.0
    %v2593 = vrcp.pop %v2592
    %v2594 = vmul.f32 %v2592, %v2593
    %v2595 = vsub.f32 1.0, %v2594
    %v2596 = vmul.f32 %v2593, %v2595
    %v2597 = vadd.f32 %v2593, %v2596
    %vm2598 = vweird.f32 %v2592
    %vm2599 = vweird.f32 %v2593
    %vm2600 = vmor %vm2598, %vm2599
    %v2601 = vsel %vm2600, %v2593, %v2597
    %v2602 = vand.u32 2147483647, %v2592
    %vm2603 = vcmp.eq.f32.partialorder %v2602, 8.507059e+37
    %v2604 = vand.u32 %v2592, 2147483648
    %v2605 = vor.u32 1.1754944e-38, %v2604
    %v2606 = vsel %vm2603, %v2605, %v2601
    %v2607 = vmul.f32 1.0, %v2606
    %v2608 = vxor.u32 %v2507, 2147483648
    %v2609 = vmul.f32 %v2608, 1.442695
    %v2610 = vpow.pop %v2609
    %v2611 = vadd.f32 %v2610, 1.0
    %v2612 = vrcp.pop %v2611
    %v2613 = vmul.f32 %v2611, %v2612
    %v2614 = vsub.f32 1.0, %v2613
    %v2615 = vmul.f32 %v2612, %v2614
    %v2616 = vadd.f32 %v2612, %v2615
    %vm2617 = vweird.f32 %v2611
    %vm2618 = vweird.f32 %v2612
    %vm2619 = vmor %vm2617, %vm2618
    %v2620 = vsel %vm2619, %v2612, %v2616
    %v2621 = vand.u32 2147483647, %v2611
    %vm2622 = vcmp.eq.f32.partialorder %v2621, 8.507059e+37
    %v2623 = vand.u32 %v2611, 2147483648
    %v2624 = vor.u32 1.1754944e-38, %v2623
    %v2625 = vsel %vm2622, %v2624, %v2620
    %v2626 = vmul.f32 1.0, %v2625
    %v2627 = vtanh.pop %v2547
    %v2628 = vxor.u32 %v2587, 2147483648
    %v2629 = vmul.f32 %v2628, 1.442695
    %v2630 = vpow.pop %v2629
    %v2631 = vadd.f32 %v2630, 1.0
    %v2632 = vrcp.pop %v2631
    %v2633 = vmul.f32 %v2631, %v2632
    %v2634 = vsub.f32 1.0, %v2633
    %v2635 = vmul.f32 %v2632, %v2634
    %v2636 = vadd.f32 %v2632, %v2635
    %vm2637 = vweird.f32 %v2631
    %vm2638 = vweird.f32 %v2632
    %vm2639 = vmor %vm2637, %vm2638
    %v2640 = vsel %vm2639, %v2632, %v2636
    %v2641 = vand.u32 2147483647, %v2631
    %vm2642 = vcmp.eq.f32.partialorder %v2641, 8.507059e+37
    %v2643 = vand.u32 %v2631, 2147483648
    %v2644 = vor.u32 1.1754944e-38, %v2643
    %v2645 = vsel %vm2642, %v2644, %v2640
    %v2646 = vmul.f32 1.0, %v2645
    %v2647 = vmul.f32 %v2626, %v2389
    %v2648 = vmul.f32 %v2607, %v2627
    %v2649 = vadd.f32 %v2647, %v2648
    %v2650 = vtanh.pop %v2649
    %v2651 = vmul.f32 %v2646, %v2650
    %2652 = vmatpush.msra.mxu0 %v2152
    %2653 = vmatpush.msra.mxu0 %v2151
    %2654 = vmatpush.msra.mxu0 %v2150
    %2655 = vmatpush.msra.mxu0 %v2149
    %2656 = vmatpush.msra.mxu0 %v2148
    %2657 = vmatpush.msra.mxu0 %v2147
    %2658 = vmatpush.msra.mxu0 %v2146
    %2659 = vmatpush.msra.mxu0 %v2145
    %2660 = vmatpush.msra.mxu0 %v2144
    %2661 = vmatpush.msra.mxu0 %v2143
    %2662 = vmatpush.msra.mxu0 %v2142
    %2663 = vmatpush.msra.mxu0 %v2141
    %2664 = vmatpush.msra.mxu0 %v2140
    %2665 = vmatpush.msra.mxu0 %v2139
    %2666 = vmatpush.msra.mxu0 %v2138
    %2667 = vmatpush.msra.mxu0 %v2137
    %2668 = vmatmul.f32.gmra.mxu0 %v2651
    %v2669 = vpop.f32.mrf.mxu0
    %v2670 = vadd.f32 %v2153, %v2669
    %2671 = vdwg.mxu0
    %v2672 = vadd.f32 %v2670, %v2157
    %v2673 = vsel %vm2413, %v2672, -inf
    %2674 = vmax.xlane.f32.xlu0 %v2673
    %v2675 = vpop.xlane.xlu0 %2674
    %v2676 = vsub.f32 %v2672, %v2675
    %v2677 = vmul.f32 %v2676, 1.442695
    %v2678 = vpow.pop %v2677
    %v2679 = vsel %vm2413, %v2678, 0.0
    %2680 = vadd.xlane.f32.xlu0 %v2679
    %v2681 = vpop.xlane.xlu0 %2680
    %v2682 = vlog2.pop %v2681
    %v2683 = vmul.f32 %v2682, 0.6931472
    %v2684 = vsub.f32 %v2676, %v2683
    %2685 = vst [vmem:[#allocation26 + $0x1] sm:$0x1] %v2684
    %v2686 = vld [vmem:[#allocation5 + $0x2] sm:$0x1]
    %v2687 = vmax.f32 %v2686, 0.0
    %2688 = vmatpush.msra.mxu0 %v2068
    %2689 = vmatpush.msra.mxu0 %v2064
    %2690 = vmatpush.msra.mxu0 %v2060
    %2691 = vmatpush.msra.mxu0 %v2056
    %2692 = vmatpush.msra.mxu0 %v2052
    %2693 = vmatpush.msra.mxu0 %v2048
    %2694 = vmatpush.msra.mxu0 %v2044
    %2695 = vmatpush.msra.mxu0 %v2040
    %2696 = vmatpush.msra.mxu0 %v2036
    %2697 = vmatpush.msra.mxu0 %v2032
    %2698 = vmatpush.msra.mxu0 %v2028
    %2699 = vmatpush.msra.mxu0 %v2024
    %2700 = vmatpush.msra.mxu0 %v2020
    %2701 = vmatpush.msra.mxu0 %v2016
    %2702 = vmatpush.msra.mxu0 %v2012
    %2703 = vmatpush.msra.mxu0 %v2008
    %2704 = vmatmul.f32.gmra.mxu0 %v2687
    %v2705 = vpop.f32.mrf.mxu0
    %v2706 = vadd.f32 %v2161, %v2705
    %2707 = vdwg.mxu0
    %2708 = vmatpush.msra.mxu0 %v2132
    %2709 = vmatpush.msra.mxu0 %v2128
    %2710 = vmatpush.msra.mxu0 %v2124
    %2711 = vmatpush.msra.mxu0 %v2120
    %2712 = vmatpush.msra.mxu0 %v2116
    %2713 = vmatpush.msra.mxu0 %v2112
    %2714 = vmatpush.msra.mxu0 %v2108
    %2715 = vmatpush.msra.mxu0 %v2104
    %2716 = vmatpush.msra.mxu0 %v2100
    %2717 = vmatpush.msra.mxu0 %v2096
    %2718 = vmatpush.msra.mxu0 %v2092
    %2719 = vmatpush.msra.mxu0 %v2088
    %2720 = vmatpush.msra.mxu0 %v2084
    %2721 = vmatpush.msra.mxu0 %v2080
    %2722 = vmatpush.msra.mxu0 %v2076
    %2723 = vmatpush.msra.mxu0 %v2072
    %2724 = vmatmul.f32.gmra.mxu0 %v2651
    %v2725 = vpop.f32.mrf.mxu0
    %v2726 = vadd.f32 %v2706, %v2725
    %2727 = vdwg.mxu0
    %2728 = vmatpush.msra.mxu0 %v2069
    %2729 = vmatpush.msra.mxu0 %v2065
    %2730 = vmatpush.msra.mxu0 %v2061
    %2731 = vmatpush.msra.mxu0 %v2057
    %2732 = vmatpush.msra.mxu0 %v2053
    %2733 = vmatpush.msra.mxu0 %v2049
    %2734 = vmatpush.msra.mxu0 %v2045
    %2735 = vmatpush.msra.mxu0 %v2041
    %2736 = vmatpush.msra.mxu0 %v2037
    %2737 = vmatpush.msra.mxu0 %v2033
    %2738 = vmatpush.msra.mxu0 %v2029
    %2739 = vmatpush.msra.mxu0 %v2025
    %2740 = vmatpush.msra.mxu0 %v2021
    %2741 = vmatpush.msra.mxu0 %v2017
    %2742 = vmatpush.msra.mxu0 %v2013
    %2743 = vmatpush.msra.mxu0 %v2009
    %2744 = vmatmul.f32.gmra.mxu0 %v2687
    %v2745 = vpop.f32.mrf.mxu0
    %v2746 = vadd.f32 %v2162, %v2745
    %2747 = vdwg.mxu0
    %2748 = vmatpush.msra.mxu0 %v2133
    %2749 = vmatpush.msra.mxu0 %v2129
    %2750 = vmatpush.msra.mxu0 %v2125
    %2751 = vmatpush.msra.mxu0 %v2121
    %2752 = vmatpush.msra.mxu0 %v2117
    %2753 = vmatpush.msra.mxu0 %v2113
    %2754 = vmatpush.msra.mxu0 %v2109
    %2755 = vmatpush.msra.mxu0 %v2105
    %2756 = vmatpush.msra.mxu0 %v2101
    %2757 = vmatpush.msra.mxu0 %v2097
    %2758 = vmatpush.msra.mxu0 %v2093
    %2759 = vmatpush.msra.mxu0 %v2089
    %2760 = vmatpush.msra.mxu0 %v2085
    %2761 = vmatpush.msra.mxu0 %v2081
    %2762 = vmatpush.msra.mxu0 %v2077
    %2763 = vmatpush.msra.mxu0 %v2073
    %2764 = vmatmul.f32.gmra.mxu0 %v2651
    %v2765 = vpop.f32.mrf.mxu0
    %v2766 = vadd.f32 %v2746, %v2765
    %2767 = vdwg.mxu0
    %2768 = vmatpush.msra.mxu0 %v2070
    %2769 = vmatpush.msra.mxu0 %v2066
    %2770 = vmatpush.msra.mxu0 %v2062
    %2771 = vmatpush.msra.mxu0 %v2058
    %2772 = vmatpush.msra.mxu0 %v2054
    %2773 = vmatpush.msra.mxu0 %v2050
    %2774 = vmatpush.msra.mxu0 %v2046
    %2775 = vmatpush.msra.mxu0 %v2042
    %2776 = vmatpush.msra.mxu0 %v2038
    %2777 = vmatpush.msra.mxu0 %v2034
    %2778 = vmatpush.msra.mxu0 %v2030
    %2779 = vmatpush.msra.mxu0 %v2026
    %2780 = vmatpush.msra.mxu0 %v2022
    %2781 = vmatpush.msra.mxu0 %v2018
    %2782 = vmatpush.msra.mxu0 %v2014
    %2783 = vmatpush.msra.mxu0 %v2010
    %2784 = vmatmul.f32.gmra.mxu0 %v2687
    %v2785 = vpop.f32.mrf.mxu0
    %v2786 = vadd.f32 %v2163, %v2785
    %2787 = vdwg.mxu0
    %2788 = vmatpush.msra.mxu0 %v2134
    %2789 = vmatpush.msra.mxu0 %v2130
    %2790 = vmatpush.msra.mxu0 %v2126
    %2791 = vmatpush.msra.mxu0 %v2122
    %2792 = vmatpush.msra.mxu0 %v2118
    %2793 = vmatpush.msra.mxu0 %v2114
    %2794 = vmatpush.msra.mxu0 %v2110
    %2795 = vmatpush.msra.mxu0 %v2106
    %2796 = vmatpush.msra.mxu0 %v2102
    %2797 = vmatpush.msra.mxu0 %v2098
    %2798 = vmatpush.msra.mxu0 %v2094
    %2799 = vmatpush.msra.mxu0 %v2090
    %2800 = vmatpush.msra.mxu0 %v2086
    %2801 = vmatpush.msra.mxu0 %v2082
    %2802 = vmatpush.msra.mxu0 %v2078
    %2803 = vmatpush.msra.mxu0 %v2074
    %2804 = vmatmul.f32.gmra.mxu0 %v2651
    %v2805 = vpop.f32.mrf.mxu0
    %v2806 = vadd.f32 %v2786, %v2805
    %2807 = vdwg.mxu0
    %2808 = vmatpush.msra.mxu0 %v2071
    %2809 = vmatpush.msra.mxu0 %v2067
    %2810 = vmatpush.msra.mxu0 %v2063
    %2811 = vmatpush.msra.mxu0 %v2059
    %2812 = vmatpush.msra.mxu0 %v2055
    %2813 = vmatpush.msra.mxu0 %v2051
    %2814 = vmatpush.msra.mxu0 %v2047
    %2815 = vmatpush.msra.mxu0 %v2043
    %2816 = vmatpush.msra.mxu0 %v2039
    %2817 = vmatpush.msra.mxu0 %v2035
    %2818 = vmatpush.msra.mxu0 %v2031
    %2819 = vmatpush.msra.mxu0 %v2027
    %2820 = vmatpush.msra.mxu0 %v2023
    %2821 = vmatpush.msra.mxu0 %v2019
    %2822 = vmatpush.msra.mxu0 %v2015
    %2823 = vmatpush.msra.mxu0 %v2011
    %2824 = vmatmul.f32.gmra.mxu0 %v2687
    %v2825 = vpop.f32.mrf.mxu0
    %v2826 = vadd.f32 %v2164, %v2825
    %2827 = vdwg.mxu0
    %2828 = vmatpush.msra.mxu0 %v2135
    %2829 = vmatpush.msra.mxu0 %v2131
    %2830 = vmatpush.msra.mxu0 %v2127
    %2831 = vmatpush.msra.mxu0 %v2123
    %2832 = vmatpush.msra.mxu0 %v2119
    %2833 = vmatpush.msra.mxu0 %v2115
    %2834 = vmatpush.msra.mxu0 %v2111
    %2835 = vmatpush.msra.mxu0 %v2107
    %2836 = vmatpush.msra.mxu0 %v2103
    %2837 = vmatpush.msra.mxu0 %v2099
    %2838 = vmatpush.msra.mxu0 %v2095
    %2839 = vmatpush.msra.mxu0 %v2091
    %2840 = vmatpush.msra.mxu0 %v2087
    %2841 = vmatpush.msra.mxu0 %v2083
    %2842 = vmatpush.msra.mxu0 %v2079
    %2843 = vmatpush.msra.mxu0 %v2075
    %2844 = vmatmul.f32.gmra.mxu0 %v2651
    %v2845 = vpop.f32.mrf.mxu0
    %v2846 = vadd.f32 %v2826, %v2845
    %2847 = vdwg.mxu0
    %v2848 = vxor.u32 %v2726, 2147483648
    %v2849 = vmul.f32 %v2848, 1.442695
    %v2850 = vpow.pop %v2849
    %v2851 = vadd.f32 %v2850, 1.0
    %v2852 = vrcp.pop %v2851
    %v2853 = vmul.f32 %v2851, %v2852
    %v2854 = vsub.f32 1.0, %v2853
    %v2855 = vmul.f32 %v2852, %v2854
    %v2856 = vadd.f32 %v2852, %v2855
    %vm2857 = vweird.f32 %v2851
    %vm2858 = vweird.f32 %v2852
    %vm2859 = vmor %vm2857, %vm2858
    %v2860 = vsel %vm2859, %v2852, %v2856
    %v2861 = vand.u32 2147483647, %v2851
    %vm2862 = vcmp.eq.f32.partialorder %v2861, 8.507059e+37
    %v2863 = vand.u32 %v2851, 2147483648
    %v2864 = vor.u32 1.1754944e-38, %v2863
    %v2865 = vsel %vm2862, %v2864, %v2860
    %v2866 = vmul.f32 1.0, %v2865
    %v2867 = vxor.u32 %v2766, 2147483648
    %v2868 = vmul.f32 %v2867, 1.442695
    %v2869 = vpow.pop %v2868
    %v2870 = vadd.f32 %v2869, 1.0
    %v2871 = vrcp.pop %v2870
    %v2872 = vmul.f32 %v2870, %v2871
    %v2873 = vsub.f32 1.0, %v2872
    %v2874 = vmul.f32 %v2871, %v2873
    %v2875 = vadd.f32 %v2871, %v2874
    %vm2876 = vweird.f32 %v2870
    %vm2877 = vweird.f32 %v2871
    %vm2878 = vmor %vm2876, %vm2877
    %v2879 = vsel %vm2878, %v2871, %v2875
    %v2880 = vand.u32 2147483647, %v2870
    %vm2881 = vcmp.eq.f32.partialorder %v2880, 8.507059e+37
    %v2882 = vand.u32 %v2870, 2147483648
    %v2883 = vor.u32 1.1754944e-38, %v2882
    %v2884 = vsel %vm2881, %v2883, %v2879
    %v2885 = vmul.f32 1.0, %v2884
    %v2886 = vtanh.pop %v2806
    %v2887 = vxor.u32 %v2846, 2147483648
    %v2888 = vmul.f32 %v2887, 1.442695
    %v2889 = vpow.pop %v2888
    %v2890 = vadd.f32 %v2889, 1.0
    %v2891 = vrcp.pop %v2890
    %v2892 = vmul.f32 %v2890, %v2891
    %v2893 = vsub.f32 1.0, %v2892
    %v2894 = vmul.f32 %v2891, %v2893
    %v2895 = vadd.f32 %v2891, %v2894
    %vm2896 = vweird.f32 %v2890
    %vm2897 = vweird.f32 %v2891
    %vm2898 = vmor %vm2896, %vm2897
    %v2899 = vsel %vm2898, %v2891, %v2895
    %v2900 = vand.u32 2147483647, %v2890
    %vm2901 = vcmp.eq.f32.partialorder %v2900, 8.507059e+37
    %v2902 = vand.u32 %v2890, 2147483648
    %v2903 = vor.u32 1.1754944e-38, %v2902
    %v2904 = vsel %vm2901, %v2903, %v2899
    %v2905 = vmul.f32 1.0, %v2904
    %v2906 = vmul.f32 %v2885, %v2649
    %v2907 = vmul.f32 %v2866, %v2886
    %v2908 = vadd.f32 %v2906, %v2907
    %v2909 = vtanh.pop %v2908
    %v2910 = vmul.f32 %v2905, %v2909
    %2911 = vmatpush.msra.mxu0 %v2152
    %2912 = vmatpush.msra.mxu0 %v2151
    %2913 = vmatpush.msra.mxu0 %v2150
    %2914 = vmatpush.msra.mxu0 %v2149
    %2915 = vmatpush.msra.mxu0 %v2148
    %2916 = vmatpush.msra.mxu0 %v2147
    %2917 = vmatpush.msra.mxu0 %v2146
    %2918 = vmatpush.msra.mxu0 %v2145
    %2919 = vmatpush.msra.mxu0 %v2144
    %2920 = vmatpush.msra.mxu0 %v2143
    %2921 = vmatpush.msra.mxu0 %v2142
    %2922 = vmatpush.msra.mxu0 %v2141
    %2923 = vmatpush.msra.mxu0 %v2140
    %2924 = vmatpush.msra.mxu0 %v2139
    %2925 = vmatpush.msra.mxu0 %v2138
    %2926 = vmatpush.msra.mxu0 %v2137
    %2927 = vmatmul.f32.gmra.mxu0 %v2910
    %v2928 = vpop.f32.mrf.mxu0
    %v2929 = vadd.f32 %v2153, %v2928
    %2930 = vdwg.mxu0
    %v2931 = vadd.f32 %v2929, %v2157
    %v2932 = vsel %vm2413, %v2931, -inf
    %2933 = vmax.xlane.f32.xlu0 %v2932
    %v2934 = vpop.xlane.xlu0 %2933
    %v2935 = vsub.f32 %v2931, %v2934
    %v2936 = vmul.f32 %v2935, 1.442695
    %v2937 = vpow.pop %v2936
    %v2938 = vsel %vm2413, %v2937, 0.0
    %2939 = vadd.xlane.f32.xlu0 %v2938
    %v2940 = vpop.xlane.xlu0 %2939
    %v2941 = vlog2.pop %v2940
    %v2942 = vmul.f32 %v2941, 0.6931472
    %v2943 = vsub.f32 %v2935, %v2942
    %2944 = vst [vmem:[#allocation26 + $0x2] sm:$0x1] %v2943
    %v2945 = vld [vmem:[#allocation5 + $0x3] sm:$0x1]
    %v2946 = vmax.f32 %v2945, 0.0
    %2947 = vmatpush.msra.mxu0 %v2068
    %2948 = vmatpush.msra.mxu0 %v2064
    %2949 = vmatpush.msra.mxu0 %v2060
    %2950 = vmatpush.msra.mxu0 %v2056
    %2951 = vmatpush.msra.mxu0 %v2052
    %2952 = vmatpush.msra.mxu0 %v2048
    %2953 = vmatpush.msra.mxu0 %v2044
    %2954 = vmatpush.msra.mxu0 %v2040
    %2955 = vmatpush.msra.mxu0 %v2036
    %2956 = vmatpush.msra.mxu0 %v2032
    %2957 = vmatpush.msra.mxu0 %v2028
    %2958 = vmatpush.msra.mxu0 %v2024
    %2959 = vmatpush.msra.mxu0 %v2020
    %2960 = vmatpush.msra.mxu0 %v2016
    %2961 = vmatpush.msra.mxu0 %v2012
    %2962 = vmatpush.msra.mxu0 %v2008
    %2963 = vmatmul.f32.gmra.mxu0 %v2946
    %v2964 = vpop.f32.mrf.mxu0
    %v2965 = vadd.f32 %v2161, %v2964
    %2966 = vdwg.mxu0
    %2967 = vmatpush.msra.mxu0 %v2132
    %2968 = vmatpush.msra.mxu0 %v2128
    %2969 = vmatpush.msra.mxu0 %v2124
    %2970 = vmatpush.msra.mxu0 %v2120
    %2971 = vmatpush.msra.mxu0 %v2116
    %2972 = vmatpush.msra.mxu0 %v2112
    %2973 = vmatpush.msra.mxu0 %v2108
    %2974 = vmatpush.msra.mxu0 %v2104
    %2975 = vmatpush.msra.mxu0 %v2100
    %2976 = vmatpush.msra.mxu0 %v2096
    %2977 = vmatpush.msra.mxu0 %v2092
    %2978 = vmatpush.msra.mxu0 %v2088
    %2979 = vmatpush.msra.mxu0 %v2084
    %2980 = vmatpush.msra.mxu0 %v2080
    %2981 = vmatpush.msra.mxu0 %v2076
    %2982 = vmatpush.msra.mxu0 %v2072
    %2983 = vmatmul.f32.gmra.mxu0 %v2910
    %v2984 = vpop.f32.mrf.mxu0
    %v2985 = vadd.f32 %v2965, %v2984
    %2986 = vdwg.mxu0
    %2987 = vmatpush.msra.mxu0 %v2069
    %2988 = vmatpush.msra.mxu0 %v2065
    %2989 = vmatpush.msra.mxu0 %v2061
    %2990 = vmatpush.msra.mxu0 %v2057
    %2991 = vmatpush.msra.mxu0 %v2053
    %2992 = vmatpush.msra.mxu0 %v2049
    %2993 = vmatpush.msra.mxu0 %v2045
    %2994 = vmatpush.msra.mxu0 %v2041
    %2995 = vmatpush.msra.mxu0 %v2037
    %2996 = vmatpush.msra.mxu0 %v2033
    %2997 = vmatpush.msra.mxu0 %v2029
    %2998 = vmatpush.msra.mxu0 %v2025
    %2999 = vmatpush.msra.mxu0 %v2021
    %3000 = vmatpush.msra.mxu0 %v2017
    %3001 = vmatpush.msra.mxu0 %v2013
    %3002 = vmatpush.msra.mxu0 %v2009
    %3003 = vmatmul.f32.gmra.mxu0 %v2946
    %v3004 = vpop.f32.mrf.mxu0
    %v3005 = vadd.f32 %v2162, %v3004
    %3006 = vdwg.mxu0
    %3007 = vmatpush.msra.mxu0 %v2133
    %3008 = vmatpush.msra.mxu0 %v2129
    %3009 = vmatpush.msra.mxu0 %v2125
    %3010 = vmatpush.msra.mxu0 %v2121
    %3011 = vmatpush.msra.mxu0 %v2117
    %3012 = vmatpush.msra.mxu0 %v2113
    %3013 = vmatpush.msra.mxu0 %v2109
    %3014 = vmatpush.msra.mxu0 %v2105
    %3015 = vmatpush.msra.mxu0 %v2101
    %3016 = vmatpush.msra.mxu0 %v2097
    %3017 = vmatpush.msra.mxu0 %v2093
    %3018 = vmatpush.msra.mxu0 %v2089
    %3019 = vmatpush.msra.mxu0 %v2085
    %3020 = vmatpush.msra.mxu0 %v2081
    %3021 = vmatpush.msra.mxu0 %v2077
    %3022 = vmatpush.msra.mxu0 %v2073
    %3023 = vmatmul.f32.gmra.mxu0 %v2910
    %v3024 = vpop.f32.mrf.mxu0
    %v3025 = vadd.f32 %v3005, %v3024
    %3026 = vdwg.mxu0
    %3027 = vmatpush.msra.mxu0 %v2070
    %3028 = vmatpush.msra.mxu0 %v2066
    %3029 = vmatpush.msra.mxu0 %v2062
    %3030 = vmatpush.msra.mxu0 %v2058
    %3031 = vmatpush.msra.mxu0 %v2054
    %3032 = vmatpush.msra.mxu0 %v2050
    %3033 = vmatpush.msra.mxu0 %v2046
    %3034 = vmatpush.msra.mxu0 %v2042
    %3035 = vmatpush.msra.mxu0 %v2038
    %3036 = vmatpush.msra.mxu0 %v2034
    %3037 = vmatpush.msra.mxu0 %v2030
    %3038 = vmatpush.msra.mxu0 %v2026
    %3039 = vmatpush.msra.mxu0 %v2022
    %3040 = vmatpush.msra.mxu0 %v2018
    %3041 = vmatpush.msra.mxu0 %v2014
    %3042 = vmatpush.msra.mxu0 %v2010
    %3043 = vmatmul.f32.gmra.mxu0 %v2946
    %v3044 = vpop.f32.mrf.mxu0
    %v3045 = vadd.f32 %v2163, %v3044
    %3046 = vdwg.mxu0
    %3047 = vmatpush.msra.mxu0 %v2134
    %3048 = vmatpush.msra.mxu0 %v2130
    %3049 = vmatpush.msra.mxu0 %v2126
    %3050 = vmatpush.msra.mxu0 %v2122
    %3051 = vmatpush.msra.mxu0 %v2118
    %3052 = vmatpush.msra.mxu0 %v2114
    %3053 = vmatpush.msra.mxu0 %v2110
    %3054 = vmatpush.msra.mxu0 %v2106
    %3055 = vmatpush.msra.mxu0 %v2102
    %3056 = vmatpush.msra.mxu0 %v2098
    %3057 = vmatpush.msra.mxu0 %v2094
    %3058 = vmatpush.msra.mxu0 %v2090
    %3059 = vmatpush.msra.mxu0 %v2086
    %3060 = vmatpush.msra.mxu0 %v2082
    %3061 = vmatpush.msra.mxu0 %v2078
    %3062 = vmatpush.msra.mxu0 %v2074
    %3063 = vmatmul.f32.gmra.mxu0 %v2910
    %v3064 = vpop.f32.mrf.mxu0
    %v3065 = vadd.f32 %v3045, %v3064
    %3066 = vdwg.mxu0
    %3067 = vmatpush.msra.mxu0 %v2071
    %3068 = vmatpush.msra.mxu0 %v2067
    %3069 = vmatpush.msra.mxu0 %v2063
    %3070 = vmatpush.msra.mxu0 %v2059
    %3071 = vmatpush.msra.mxu0 %v2055
    %3072 = vmatpush.msra.mxu0 %v2051
    %3073 = vmatpush.msra.mxu0 %v2047
    %3074 = vmatpush.msra.mxu0 %v2043
    %3075 = vmatpush.msra.mxu0 %v2039
    %3076 = vmatpush.msra.mxu0 %v2035
    %3077 = vmatpush.msra.mxu0 %v2031
    %3078 = vmatpush.msra.mxu0 %v2027
    %3079 = vmatpush.msra.mxu0 %v2023
    %3080 = vmatpush.msra.mxu0 %v2019
    %3081 = vmatpush.msra.mxu0 %v2015
    %3082 = vmatpush.msra.mxu0 %v2011
    %3083 = vmatmul.f32.gmra.mxu0 %v2946
    %v3084 = vpop.f32.mrf.mxu0
    %v3085 = vadd.f32 %v2164, %v3084
    %3086 = vdwg.mxu0
    %3087 = vmatpush.msra.mxu0 %v2135
    %3088 = vmatpush.msra.mxu0 %v2131
    %3089 = vmatpush.msra.mxu0 %v2127
    %3090 = vmatpush.msra.mxu0 %v2123
    %3091 = vmatpush.msra.mxu0 %v2119
    %3092 = vmatpush.msra.mxu0 %v2115
    %3093 = vmatpush.msra.mxu0 %v2111
    %3094 = vmatpush.msra.mxu0 %v2107
    %3095 = vmatpush.msra.mxu0 %v2103
    %3096 = vmatpush.msra.mxu0 %v2099
    %3097 = vmatpush.msra.mxu0 %v2095
    %3098 = vmatpush.msra.mxu0 %v2091
    %3099 = vmatpush.msra.mxu0 %v2087
    %3100 = vmatpush.msra.mxu0 %v2083
    %3101 = vmatpush.msra.mxu0 %v2079
    %3102 = vmatpush.msra.mxu0 %v2075
    %3103 = vmatmul.f32.gmra.mxu0 %v2910
    %v3104 = vpop.f32.mrf.mxu0
    %v3105 = vadd.f32 %v3085, %v3104
    %3106 = vdwg.mxu0
    %v3107 = vxor.u32 %v2985, 2147483648
    %v3108 = vmul.f32 %v3107, 1.442695
    %v3109 = vpow.pop %v3108
    %v3110 = vadd.f32 %v3109, 1.0
    %v3111 = vrcp.pop %v3110
    %v3112 = vmul.f32 %v3110, %v3111
    %v3113 = vsub.f32 1.0, %v3112
    %v3114 = vmul.f32 %v3111, %v3113
    %v3115 = vadd.f32 %v3111, %v3114
    %vm3116 = vweird.f32 %v3110
    %vm3117 = vweird.f32 %v3111
    %vm3118 = vmor %vm3116, %vm3117
    %v3119 = vsel %vm3118, %v3111, %v3115
    %v3120 = vand.u32 2147483647, %v3110
    %vm3121 = vcmp.eq.f32.partialorder %v3120, 8.507059e+37
    %v3122 = vand.u32 %v3110, 2147483648
    %v3123 = vor.u32 1.1754944e-38, %v3122
    %v3124 = vsel %vm3121, %v3123, %v3119
    %v3125 = vmul.f32 1.0, %v3124
    %v3126 = vxor.u32 %v3025, 2147483648
    %v3127 = vmul.f32 %v3126, 1.442695
    %v3128 = vpow.pop %v3127
    %v3129 = vadd.f32 %v3128, 1.0
    %v3130 = vrcp.pop %v3129
    %v3131 = vmul.f32 %v3129, %v3130
    %v3132 = vsub.f32 1.0, %v3131
    %v3133 = vmul.f32 %v3130, %v3132
    %v3134 = vadd.f32 %v3130, %v3133
    %vm3135 = vweird.f32 %v3129
    %vm3136 = vweird.f32 %v3130
    %vm3137 = vmor %vm3135, %vm3136
    %v3138 = vsel %vm3137, %v3130, %v3134
    %v3139 = vand.u32 2147483647, %v3129
    %vm3140 = vcmp.eq.f32.partialorder %v3139, 8.507059e+37
    %v3141 = vand.u32 %v3129, 2147483648
    %v3142 = vor.u32 1.1754944e-38, %v3141
    %v3143 = vsel %vm3140, %v3142, %v3138
    %v3144 = vmul.f32 1.0, %v3143
    %v3145 = vtanh.pop %v3065
    %v3146 = vxor.u32 %v3105, 2147483648
    %v3147 = vmul.f32 %v3146, 1.442695
    %v3148 = vpow.pop %v3147
    %v3149 = vadd.f32 %v3148, 1.0
    %v3150 = vrcp.pop %v3149
    %v3151 = vmul.f32 %v3149, %v3150
    %v3152 = vsub.f32 1.0, %v3151
    %v3153 = vmul.f32 %v3150, %v3152
    %v3154 = vadd.f32 %v3150, %v3153
    %vm3155 = vweird.f32 %v3149
    %vm3156 = vweird.f32 %v3150
    %vm3157 = vmor %vm3155, %vm3156
    %v3158 = vsel %vm3157, %v3150, %v3154
    %v3159 = vand.u32 2147483647, %v3149
    %vm3160 = vcmp.eq.f32.partialorder %v3159, 8.507059e+37
    %v3161 = vand.u32 %v3149, 2147483648
    %v3162 = vor.u32 1.1754944e-38, %v3161
    %v3163 = vsel %vm3160, %v3162, %v3158
    %v3164 = vmul.f32 1.0, %v3163
    %v3165 = vmul.f32 %v3144, %v2908
    %v3166 = vmul.f32 %v3125, %v3145
    %v3167 = vadd.f32 %v3165, %v3166
    %v3168 = vtanh.pop %v3167
    %v3169 = vmul.f32 %v3164, %v3168
    %3170 = vmatpush.msra.mxu0 %v2152
    %3171 = vmatpush.msra.mxu0 %v2151
    %3172 = vmatpush.msra.mxu0 %v2150
    %3173 = vmatpush.msra.mxu0 %v2149
    %3174 = vmatpush.msra.mxu0 %v2148
    %3175 = vmatpush.msra.mxu0 %v2147
    %3176 = vmatpush.msra.mxu0 %v2146
    %3177 = vmatpush.msra.mxu0 %v2145
    %3178 = vmatpush.msra.mxu0 %v2144
    %3179 = vmatpush.msra.mxu0 %v2143
    %3180 = vmatpush.msra.mxu0 %v2142
    %3181 = vmatpush.msra.mxu0 %v2141
    %3182 = vmatpush.msra.mxu0 %v2140
    %3183 = vmatpush.msra.mxu0 %v2139
    %3184 = vmatpush.msra.mxu0 %v2138
    %3185 = vmatpush.msra.mxu0 %v2137
    %3186 = vmatmul.f32.gmra.mxu0 %v3169
    %v3187 = vpop.f32.mrf.mxu0
    %v3188 = vadd.f32 %v2153, %v3187
    %3189 = vdwg.mxu0
    %v3190 = vadd.f32 %v3188, %v2157
    %v3191 = vsel %vm2413, %v3190, -inf
    %3192 = vmax.xlane.f32.xlu0 %v3191
    %v3193 = vpop.xlane.xlu0 %3192
    %v3194 = vsub.f32 %v3190, %v3193
    %v3195 = vmul.f32 %v3194, 1.442695
    %v3196 = vpow.pop %v3195
    %v3197 = vsel %vm2413, %v3196, 0.0
    %3198 = vadd.xlane.f32.xlu0 %v3197
    %v3199 = vpop.xlane.xlu0 %3198
    %v3200 = vlog2.pop %v3199
    %v3201 = vmul.f32 %v3200, 0.6931472
    %v3202 = vsub.f32 %v3194, %v3201
    %3203 = vst [vmem:[#allocation26 + $0x3] sm:$0x1] %v3202
    %v3204 = vld [vmem:[#allocation5 + $0x4] sm:$0x1]
    %v3205 = vmax.f32 %v3204, 0.0
    %3206 = vmatpush.msra.mxu0 %v2068
    %3207 = vmatpush.msra.mxu0 %v2064
    %3208 = vmatpush.msra.mxu0 %v2060
    %3209 = vmatpush.msra.mxu0 %v2056
    %3210 = vmatpush.msra.mxu0 %v2052
    %3211 = vmatpush.msra.mxu0 %v2048
    %3212 = vmatpush.msra.mxu0 %v2044
    %3213 = vmatpush.msra.mxu0 %v2040
    %3214 = vmatpush.msra.mxu0 %v2036
    %3215 = vmatpush.msra.mxu0 %v2032
    %3216 = vmatpush.msra.mxu0 %v2028
    %3217 = vmatpush.msra.mxu0 %v2024
    %3218 = vmatpush.msra.mxu0 %v2020
    %3219 = vmatpush.msra.mxu0 %v2016
    %3220 = vmatpush.msra.mxu0 %v2012
    %3221 = vmatpush.msra.mxu0 %v2008
    %3222 = vmatmul.f32.gmra.mxu0 %v3205
    %v3223 = vpop.f32.mrf.mxu0
    %v3224 = vadd.f32 %v2161, %v3223
    %3225 = vdwg.mxu0
    %3226 = vmatpush.msra.mxu0 %v2132
    %3227 = vmatpush.msra.mxu0 %v2128
    %3228 = vmatpush.msra.mxu0 %v2124
    %3229 = vmatpush.msra.mxu0 %v2120
    %3230 = vmatpush.msra.mxu0 %v2116
    %3231 = vmatpush.msra.mxu0 %v2112
    %3232 = vmatpush.msra.mxu0 %v2108
    %3233 = vmatpush.msra.mxu0 %v2104
    %3234 = vmatpush.msra.mxu0 %v2100
    %3235 = vmatpush.msra.mxu0 %v2096
    %3236 = vmatpush.msra.mxu0 %v2092
    %3237 = vmatpush.msra.mxu0 %v2088
    %3238 = vmatpush.msra.mxu0 %v2084
    %3239 = vmatpush.msra.mxu0 %v2080
    %3240 = vmatpush.msra.mxu0 %v2076
    %3241 = vmatpush.msra.mxu0 %v2072
    %3242 = vmatmul.f32.gmra.mxu0 %v3169
    %v3243 = vpop.f32.mrf.mxu0
    %v3244 = vadd.f32 %v3224, %v3243
    %3245 = vdwg.mxu0
    %3246 = vmatpush.msra.mxu0 %v2069
    %3247 = vmatpush.msra.mxu0 %v2065
    %3248 = vmatpush.msra.mxu0 %v2061
    %3249 = vmatpush.msra.mxu0 %v2057
    %3250 = vmatpush.msra.mxu0 %v2053
    %3251 = vmatpush.msra.mxu0 %v2049
    %3252 = vmatpush.msra.mxu0 %v2045
    %3253 = vmatpush.msra.mxu0 %v2041
    %3254 = vmatpush.msra.mxu0 %v2037
    %3255 = vmatpush.msra.mxu0 %v2033
    %3256 = vmatpush.msra.mxu0 %v2029
    %3257 = vmatpush.msra.mxu0 %v2025
    %3258 = vmatpush.msra.mxu0 %v2021
    %3259 = vmatpush.msra.mxu0 %v2017
    %3260 = vmatpush.msra.mxu0 %v2013
    %3261 = vmatpush.msra.mxu0 %v2009
    %3262 = vmatmul.f32.gmra.mxu0 %v3205
    %v3263 = vpop.f32.mrf.mxu0
    %v3264 = vadd.f32 %v2162, %v3263
    %3265 = vdwg.mxu0
    %3266 = vmatpush.msra.mxu0 %v2133
    %3267 = vmatpush.msra.mxu0 %v2129
    %3268 = vmatpush.msra.mxu0 %v2125
    %3269 = vmatpush.msra.mxu0 %v2121
    %3270 = vmatpush.msra.mxu0 %v2117
    %3271 = vmatpush.msra.mxu0 %v2113
    %3272 = vmatpush.msra.mxu0 %v2109
    %3273 = vmatpush.msra.mxu0 %v2105
    %3274 = vmatpush.msra.mxu0 %v2101
    %3275 = vmatpush.msra.mxu0 %v2097
    %3276 = vmatpush.msra.mxu0 %v2093
    %3277 = vmatpush.msra.mxu0 %v2089
    %3278 = vmatpush.msra.mxu0 %v2085
    %3279 = vmatpush.msra.mxu0 %v2081
    %3280 = vmatpush.msra.mxu0 %v2077
    %3281 = vmatpush.msra.mxu0 %v2073
    %3282 = vmatmul.f32.gmra.mxu0 %v3169
    %v3283 = vpop.f32.mrf.mxu0
    %v3284 = vadd.f32 %v3264, %v3283
    %3285 = vdwg.mxu0
    %3286 = vmatpush.msra.mxu0 %v2070
    %3287 = vmatpush.msra.mxu0 %v2066
    %3288 = vmatpush.msra.mxu0 %v2062
    %3289 = vmatpush.msra.mxu0 %v2058
    %3290 = vmatpush.msra.mxu0 %v2054
    %3291 = vmatpush.msra.mxu0 %v2050
    %3292 = vmatpush.msra.mxu0 %v2046
    %3293 = vmatpush.msra.mxu0 %v2042
    %3294 = vmatpush.msra.mxu0 %v2038
    %3295 = vmatpush.msra.mxu0 %v2034
    %3296 = vmatpush.msra.mxu0 %v2030
    %3297 = vmatpush.msra.mxu0 %v2026
    %3298 = vmatpush.msra.mxu0 %v2022
    %3299 = vmatpush.msra.mxu0 %v2018
    %3300 = vmatpush.msra.mxu0 %v2014
    %3301 = vmatpush.msra.mxu0 %v2010
    %3302 = vmatmul.f32.gmra.mxu0 %v3205
    %v3303 = vpop.f32.mrf.mxu0
    %v3304 = vadd.f32 %v2163, %v3303
    %3305 = vdwg.mxu0
    %3306 = vmatpush.msra.mxu0 %v2134
    %3307 = vmatpush.msra.mxu0 %v2130
    %3308 = vmatpush.msra.mxu0 %v2126
    %3309 = vmatpush.msra.mxu0 %v2122
    %3310 = vmatpush.msra.mxu0 %v2118
    %3311 = vmatpush.msra.mxu0 %v2114
    %3312 = vmatpush.msra.mxu0 %v2110
    %3313 = vmatpush.msra.mxu0 %v2106
    %3314 = vmatpush.msra.mxu0 %v2102
    %3315 = vmatpush.msra.mxu0 %v2098
    %3316 = vmatpush.msra.mxu0 %v2094
    %3317 = vmatpush.msra.mxu0 %v2090
    %3318 = vmatpush.msra.mxu0 %v2086
    %3319 = vmatpush.msra.mxu0 %v2082
    %3320 = vmatpush.msra.mxu0 %v2078
    %3321 = vmatpush.msra.mxu0 %v2074
    %3322 = vmatmul.f32.gmra.mxu0 %v3169
    %v3323 = vpop.f32.mrf.mxu0
    %v3324 = vadd.f32 %v3304, %v3323
    %3325 = vdwg.mxu0
    %3326 = vmatpush.msra.mxu0 %v2071
    %3327 = vmatpush.msra.mxu0 %v2067
    %3328 = vmatpush.msra.mxu0 %v2063
    %3329 = vmatpush.msra.mxu0 %v2059
    %3330 = vmatpush.msra.mxu0 %v2055
    %3331 = vmatpush.msra.mxu0 %v2051
    %3332 = vmatpush.msra.mxu0 %v2047
    %3333 = vmatpush.msra.mxu0 %v2043
    %3334 = vmatpush.msra.mxu0 %v2039
    %3335 = vmatpush.msra.mxu0 %v2035
    %3336 = vmatpush.msra.mxu0 %v2031
    %3337 = vmatpush.msra.mxu0 %v2027
    %3338 = vmatpush.msra.mxu0 %v2023
    %3339 = vmatpush.msra.mxu0 %v2019
    %3340 = vmatpush.msra.mxu0 %v2015
    %3341 = vmatpush.msra.mxu0 %v2011
    %3342 = vmatmul.f32.gmra.mxu0 %v3205
    %v3343 = vpop.f32.mrf.mxu0
    %v3344 = vadd.f32 %v2164, %v3343
    %3345 = vdwg.mxu0
    %3346 = vmatpush.msra.mxu0 %v2135
    %3347 = vmatpush.msra.mxu0 %v2131
    %3348 = vmatpush.msra.mxu0 %v2127
    %3349 = vmatpush.msra.mxu0 %v2123
    %3350 = vmatpush.msra.mxu0 %v2119
    %3351 = vmatpush.msra.mxu0 %v2115
    %3352 = vmatpush.msra.mxu0 %v2111
    %3353 = vmatpush.msra.mxu0 %v2107
    %3354 = vmatpush.msra.mxu0 %v2103
    %3355 = vmatpush.msra.mxu0 %v2099
    %3356 = vmatpush.msra.mxu0 %v2095
    %3357 = vmatpush.msra.mxu0 %v2091
    %3358 = vmatpush.msra.mxu0 %v2087
    %3359 = vmatpush.msra.mxu0 %v2083
    %3360 = vmatpush.msra.mxu0 %v2079
    %3361 = vmatpush.msra.mxu0 %v2075
    %3362 = vmatmul.f32.gmra.mxu0 %v3169
    %v3363 = vpop.f32.mrf.mxu0
    %v3364 = vadd.f32 %v3344, %v3363
    %3365 = vdwg.mxu0
    %v3366 = vxor.u32 %v3244, 2147483648
    %v3367 = vmul.f32 %v3366, 1.442695
    %v3368 = vpow.pop %v3367
    %v3369 = vadd.f32 %v3368, 1.0
    %v3370 = vrcp.pop %v3369
    %v3371 = vmul.f32 %v3369, %v3370
    %v3372 = vsub.f32 1.0, %v3371
    %v3373 = vmul.f32 %v3370, %v3372
    %v3374 = vadd.f32 %v3370, %v3373
    %vm3375 = vweird.f32 %v3369
    %vm3376 = vweird.f32 %v3370
    %vm3377 = vmor %vm3375, %vm3376
    %v3378 = vsel %vm3377, %v3370, %v3374
    %v3379 = vand.u32 2147483647, %v3369
    %vm3380 = vcmp.eq.f32.partialorder %v3379, 8.507059e+37
    %v3381 = vand.u32 %v3369, 2147483648
    %v3382 = vor.u32 1.1754944e-38, %v3381
    %v3383 = vsel %vm3380, %v3382, %v3378
    %v3384 = vmul.f32 1.0, %v3383
    %v3385 = vxor.u32 %v3284, 2147483648
    %v3386 = vmul.f32 %v3385, 1.442695
    %v3387 = vpow.pop %v3386
    %v3388 = vadd.f32 %v3387, 1.0
    %v3389 = vrcp.pop %v3388
    %v3390 = vmul.f32 %v3388, %v3389
    %v3391 = vsub.f32 1.0, %v3390
    %v3392 = vmul.f32 %v3389, %v3391
    %v3393 = vadd.f32 %v3389, %v3392
    %vm3394 = vweird.f32 %v3388
    %vm3395 = vweird.f32 %v3389
    %vm3396 = vmor %vm3394, %vm3395
    %v3397 = vsel %vm3396, %v3389, %v3393
    %v3398 = vand.u32 2147483647, %v3388
    %vm3399 = vcmp.eq.f32.partialorder %v3398, 8.507059e+37
    %v3400 = vand.u32 %v3388, 2147483648
    %v3401 = vor.u32 1.1754944e-38, %v3400
    %v3402 = vsel %vm3399, %v3401, %v3397
    %v3403 = vmul.f32 1.0, %v3402
    %v3404 = vtanh.pop %v3324
    %v3405 = vxor.u32 %v3364, 2147483648
    %v3406 = vmul.f32 %v3405, 1.442695
    %v3407 = vpow.pop %v3406
    %v3408 = vadd.f32 %v3407, 1.0
    %v3409 = vrcp.pop %v3408
    %v3410 = vmul.f32 %v3408, %v3409
    %v3411 = vsub.f32 1.0, %v3410
    %v3412 = vmul.f32 %v3409, %v3411
    %v3413 = vadd.f32 %v3409, %v3412
    %vm3414 = vweird.f32 %v3408
    %vm3415 = vweird.f32 %v3409
    %vm3416 = vmor %vm3414, %vm3415
    %v3417 = vsel %vm3416, %v3409, %v3413
    %v3418 = vand.u32 2147483647, %v3408
    %vm3419 = vcmp.eq.f32.partialorder %v3418, 8.507059e+37
    %v3420 = vand.u32 %v3408, 2147483648
    %v3421 = vor.u32 1.1754944e-38, %v3420
    %v3422 = vsel %vm3419, %v3421, %v3417
    %v3423 = vmul.f32 1.0, %v3422
    %v3424 = vmul.f32 %v3403, %v3167
    %v3425 = vmul.f32 %v3384, %v3404
    %v3426 = vadd.f32 %v3424, %v3425
    %v3427 = vtanh.pop %v3426
    %v3428 = vmul.f32 %v3423, %v3427
    %3429 = vmatpush.msra.mxu0 %v2152
    %3430 = vmatpush.msra.mxu0 %v2151
    %3431 = vmatpush.msra.mxu0 %v2150
    %3432 = vmatpush.msra.mxu0 %v2149
    %3433 = vmatpush.msra.mxu0 %v2148
    %3434 = vmatpush.msra.mxu0 %v2147
    %3435 = vmatpush.msra.mxu0 %v2146
    %3436 = vmatpush.msra.mxu0 %v2145
    %3437 = vmatpush.msra.mxu0 %v2144
    %3438 = vmatpush.msra.mxu0 %v2143
    %3439 = vmatpush.msra.mxu0 %v2142
    %3440 = vmatpush.msra.mxu0 %v2141
    %3441 = vmatpush.msra.mxu0 %v2140
    %3442 = vmatpush.msra.mxu0 %v2139
    %3443 = vmatpush.msra.mxu0 %v2138
    %3444 = vmatpush.msra.mxu0 %v2137
    %3445 = vmatmul.f32.gmra.mxu0 %v3428
    %v3446 = vpop.f32.mrf.mxu0
    %v3447 = vadd.f32 %v2153, %v3446
    %3448 = vdwg.mxu0
    %v3449 = vadd.f32 %v3447, %v2157
    %v3450 = vsel %vm2413, %v3449, -inf
    %3451 = vmax.xlane.f32.xlu0 %v3450
    %v3452 = vpop.xlane.xlu0 %3451
    %v3453 = vsub.f32 %v3449, %v3452
    %v3454 = vmul.f32 %v3453, 1.442695
    %v3455 = vpow.pop %v3454
    %v3456 = vsel %vm2413, %v3455, 0.0
    %3457 = vadd.xlane.f32.xlu0 %v3456
    %v3458 = vpop.xlane.xlu0 %3457
    %v3459 = vlog2.pop %v3458
    %v3460 = vmul.f32 %v3459, 0.6931472
    %v3461 = vsub.f32 %v3453, %v3460
    %3462 = vst [vmem:[#allocation26 + $0x4] sm:$0x1] %v3461
    // Predicated region
    $region146: #{tpu_custom_call.1} parent=1 // pred_check
      _
    $region147: #{tpu_custom_call.1} parent=1 // pred_check_branch
      %3464 = sbr.rel (0) target = $region149
    $region148: #{tpu_custom_call.1} parent=1 // pred_region
      %3466 = vsyncadd [#allocation4], 0
      %s3468 = sshll.u32 [#allocation26], 4
      %s3469 = int_to_ptr.vmem [resolvable:$true] %s3468
      %s3470 = sshll.u32 %s21, 4
      %s3471 = int_to_ptr.hbm [resolvable:$true] %s3470
      %3473 = dma.vmem_to_hbm [thread:$0]  %s3469, 128, %s3471, [#allocation4]
    $region149: #{tpu_custom_call.1} parent=1 // pred_fallthru
      _
    // Predicated region
    $region150: #{tpu_custom_call.1} parent=1 // pred_check
      _
    $region151: #{tpu_custom_call.1} parent=1 // pred_check_branch
      %3475 = sbr.rel (0) target = $region153
    $region152: #{tpu_custom_call.1} parent=1 // pred_region
      %3477 = vsyncadd [#allocation28], 0
      %s3479 = sshll.u32 [#allocation27], 4
      %s3480 = int_to_ptr.vmem [resolvable:$true] %s3479
      %s3481 = sshll.u32 %s22, 4
      %s3482 = int_to_ptr.hbm [resolvable:$true] %s3481
      %3484 = dma.vmem_to_hbm [thread:$0]  %s3480, 16, %s3482, [#allocation28]
    $region153: #{tpu_custom_call.1} parent=1 // pred_fallthru
      _
    // Predicated region
    $region154: #{tpu_custom_call.1} parent=1 // pred_check
      _
    $region155: #{tpu_custom_call.1} parent=1 // pred_check_branch
      %3486 = sbr.rel (0) target = $region157
    $region156: #{tpu_custom_call.1} parent=1 // pred_region
      %3488 = vsyncadd [#allocation28], 0
      %s3490 = sshll.u32 [#allocation29], 4
      %s3491 = int_to_ptr.vmem [resolvable:$true] %s3490
      %s3492 = sshll.u32 %s23, 4
      %s3493 = int_to_ptr.hbm [resolvable:$true] %s3492
      %3495 = dma.vmem_to_hbm [thread:$0]  %s3491, 16, %s3493, [#allocation28]
    $region157: #{tpu_custom_call.1} parent=1 // pred_fallthru
      _
    // Predicated region
    $region158: #{tpu_custom_call.1} parent=1 // pred_check
      _
    $region159: #{tpu_custom_call.1} parent=1 // pred_check_branch
      %3497 = sbr.rel (0) target = $region161
    $region160: #{tpu_custom_call.1} parent=1 // pred_region
      %3499 = dma.done [#allocation4], 128
    $region161: #{tpu_custom_call.1} parent=1 // pred_fallthru
      _
    // Predicated region
    $region162: #{tpu_custom_call.1} parent=1 // pred_check
      _
    $region163: #{tpu_custom_call.1} parent=1 // pred_check_branch
      %3501 = sbr.rel (0) target = $region165
    $region164: #{tpu_custom_call.1} parent=1 // pred_region
      %3503 = dma.done [#allocation28], 16
    $region165: #{tpu_custom_call.1} parent=1 // pred_fallthru
      _
    // Predicated region
    $region166: #{tpu_custom_call.1} parent=1 // pred_check
      _
    $region167: #{tpu_custom_call.1} parent=1 // pred_check_branch
      %3505 = sbr.rel (0) target = $region169
    $region168: #{tpu_custom_call.1} parent=1 // pred_region
      %3507 = dma.done [#allocation28], 16
    $region169: #{tpu_custom_call.1} parent=1 // pred_fallthru
      _
    %3508 = vsyncpa [#allocation3], 1
    %3509 = vsyncpa [#allocation6], 1
    %3510 = vsyncpa [#allocation9], 1
    %3511 = vsyncpa [#allocation12], 1
    %3512 = vsyncpa [#allocation15], 1
    %3513 = vsyncpa [#allocation18], 1
    %3514 = vsyncpa [#allocation21], 1
    %3515 = vsyncpa [#allocation24], 1
    %3516 = vsyncpa [#allocation4], 1
    %3517 = vsyncpa [#allocation28], 1

</llo_original>
